<compile_context>
chip_gen: v7x
topology: tpu7x:2x2x1
jax: 0.10.0
libtpu: 0.0.40
codegen_flags: <defaults>
</compile_context>

<pallas_src>
import jax
import jax.numpy as jnp
from jax.experimental import pallas as pl
from jax.experimental.pallas import tpu as pltpu

_BN_EPS = 1e-5

# Small decoder configuration (module-level so the jitted wrapper can use it).
BATCH, NZ, NC, NGF, ISIZE = 8, 8, 3, 16, 16
_C0, _C1 = 2 * NGF, NGF            # 32, 16 channels
_H0, _H1 = 4, 8                    # intermediate spatial sizes
_NPC0 = _C0 * _H0 * _H0            # 512  features after layer 0
_NPC1 = _C1 * _H1 * _H1            # 1024 features after layer 1
_NOUT = NC * ISIZE * ISIZE         # 768  output features

_VMEM_SPEC = pl.BlockSpec(memory_space=pltpu.MemorySpace.VMEM)
_HBM_SPEC = pl.BlockSpec(memory_space=pl.ANY)


# ----------------------------------------------------------------------------
# Fused decoder kernel
# ----------------------------------------------------------------------------
def _decoder_kernel(z_ref, m0_ref, gb0_ref, g0_ref, gt0_ref,
                    m1_hbm, gb1_ref, g1_ref, gt1_ref, m2_hbm,
                    o_ref, m1_buf, m2_buf, dma_sem):
    """z(B,nz) -> tanh(decoder(z)) as (B, nc*isize*isize), CHW-ordered cols."""
    # Start streaming the two big weight matrices from HBM immediately so the
    # transfers overlap with layer-0 (m1) and layer-0/1 (m2) compute.
    cp1 = pltpu.make_async_copy(m1_hbm, m1_buf, dma_sem.at[0])
    cp2 = pltpu.make_async_copy(m2_hbm, m2_buf, dma_sem.at[1])
    cp1.start()
    cp2.start()

    def bn_relu(act, gb_ref, g_ref, gt_ref):
        # act: (B, C*HW) f32, CHW-ordered columns.  One-pass batch statistics.
        # One stacked (2,npc)@(npc,c) dot gives [sum; sum_sq] per channel and
        # one stacked (2,c)@(c,npc) dot lane-expands [scale; shift].  The G/GT
        # matrices contain only 0/1, so bf16 operands are exact; MXU
        # accumulation stays f32.
        npc = act.shape[1]
        c = g_ref.shape[1]
        hw = npc // c
        n = float(act.shape[0] * hw)
        s1 = jnp.sum(act, axis=0, keepdims=True)            # (1, npc)
        s2 = jnp.sum(act * act, axis=0, keepdims=True)       # (1, npc)
        s12 = jnp.concatenate([s1, s2], axis=0).astype(jnp.bfloat16)
        stats = jnp.dot(s12, g_ref[...],
                        preferred_element_type=jnp.float32) * (1.0 / n)  # (2, c)
        mean_c = stats[0:1, :]
        var_c = stats[1:2, :] - mean_c * mean_c              # biased variance
        inv_c = jax.lax.rsqrt(var_c + _BN_EPS)
        scale_c = gb_ref[0:1, :] * inv_c                     # gamma / std
        shift_c = gb_ref[1:2, :] - mean_c * scale_c          # beta - mean*scale
        ss = jnp.concatenate([scale_c, shift_c], axis=0).astype(jnp.bfloat16)
        ss = jnp.dot(ss, gt_ref[...], preferred_element_type=jnp.float32)  # (2, npc)
        return jnp.maximum(act * ss[0:1, :] + ss[1:2, :], 0.0)   # BN + ReLU

    # Layer 0: ConvT(nz, 32, 4, 1, 0) on a 1x1 map == dense matmul.
    z = z_ref[...].astype(jnp.bfloat16)                       # (B, nz)
    a0 = jnp.dot(z, m0_ref[...], preferred_element_type=jnp.float32)   # (B, 512)
    a0 = bn_relu(a0, gb0_ref, g0_ref, gt0_ref)

    # Layer 1: ConvT(32, 16, 4, 2, 1) as one dense (512 -> 1024) matmul.
    cp1.wait()
    a1 = jnp.dot(a0.astype(jnp.bfloat16), m1_buf[...],
                 preferred_element_type=jnp.float32)          # (B, 1024)
    a1 = bn_relu(a1, gb1_ref, g1_ref, gt1_ref)

    # Layer 2: ConvT(16, nc, 4, 2, 1) as one dense (1024 -> 768) matmul + Tanh.
    cp2.wait()
    a2 = jnp.dot(a1.astype(jnp.bfloat16), m2_buf[...],
                 preferred_element_type=jnp.float32)          # (B, 768)
    o_ref[...] = jnp.tanh(a2)


# ----------------------------------------------------------------------------
# Weight preprocessing (pure parameter/layout transform, done once outside
# the kernel): build the dense linear map of each ConvTranspose2d and the
# static BN grouping matrices.
# ----------------------------------------------------------------------------
def _scatter_onehot(hin, k, stride, pad, hout):
    """A[ih, kh, oh] = 1 iff oh == ih*stride - pad + kh (transposed-conv map)."""
    i = jnp.arange(hin)[:, None, None]
    kk = jnp.arange(k)[None, :, None]
    o = jnp.arange(hout)[None, None, :]
    return (o == i * stride - pad + kk).astype(jnp.float32)


def _convt_dense_matrix(wt, hin, win, stride, pad):
    """torch ConvTranspose2d weight (Cin, Cout, K, K) -> dense map
    (Cin*Hin*Win, Cout*Hout*Wout), rows/cols in CHW order."""
    ci, co, kh, kw = wt.shape
    hout = (hin - 1) * stride - 2 * pad + kh
    wout = (win - 1) * stride - 2 * pad + kw
    ah = _scatter_onehot(hin, kh, stride, pad, hout)
    aw = _scatter_onehot(win, kw, stride, pad, wout)
    # Pure 0/1 selection -> each entry is a single copied weight (exact).
    m = jnp.einsum("icab,hao,wbp->ihwcop", wt, ah, aw)
    return m.reshape(ci * hin * win, co * hout * wout)


def _group_matrices(npc, c):
    """0/1 grouping matrix G (npc, c): G[i, ch] = 1 iff i // hw == ch."""
    hw = npc // c
    idx = jnp.arange(npc) // hw
    g = (idx[:, None] == jnp.arange(c)[None, :]).astype(jnp.float32)
    return g.astype(jnp.bfloat16), g.T.astype(jnp.bfloat16)


def prepare_decoder(params):
    """torch-layout params -> kernel-ready operands."""
    nz, c0 = params["wt0"].shape[0], params["wt0"].shape[1]
    c1 = params["wt1"].shape[1]
    m0 = params["wt0"].reshape(nz, -1)                        # (nz, 32*4*4)
    m1 = _convt_dense_matrix(params["wt1"], _H0, _H0, 2, 1)   # (512, 1024)
    m2 = _convt_dense_matrix(params["wt2"], _H1, _H1, 2, 1)   # (1024, 768)
    g0, gt0 = _group_matrices(m1.shape[0], c0)
    g1, gt1 = _group_matrices(m2.shape[0], c1)
    return {
        "m0": m0.astype(jnp.bfloat16),
        "m1": m1.astype(jnp.bfloat16),
        "m2": m2.astype(jnp.bfloat16),
        "gb0": jnp.stack([params["g0"], params["b0"]]).astype(jnp.float32),
        "gb1": jnp.stack([params["g1"], params["b1"]]).astype(jnp.float32),
        "g0": g0, "gt0": gt0, "g1": g1, "gt1": gt1,
    }


# ----------------------------------------------------------------------------
# NetG forward
# ----------------------------------------------------------------------------
def netg_forward(z_nchw, prep):
    """z: (B, nz, 1, 1) NCHW -> (B, nc, isize, isize) NCHW."""
    B = z_nchw.shape[0]
    z2d = z_nchw.reshape(B, -1)
    out_flat = pl.pallas_call(
        _decoder_kernel,
        out_shape=jax.ShapeDtypeStruct((B, _NOUT), jnp.float32),
        in_specs=[_VMEM_SPEC,   # z
                  _VMEM_SPEC,   # m0 (tiny, auto-DMA)
                  _VMEM_SPEC,   # gb0
                  _VMEM_SPEC,   # G0
                  _VMEM_SPEC,   # GT0
                  _HBM_SPEC,    # m1 (manual DMA, overlapped)
                  _VMEM_SPEC,   # gb1
                  _VMEM_SPEC,   # G1
                  _VMEM_SPEC,   # GT1
                  _HBM_SPEC],   # m2 (manual DMA, overlapped)
        out_specs=_VMEM_SPEC,
        scratch_shapes=[
            pltpu.VMEM((_NPC0, _NPC1), jnp.bfloat16),   # m1 staging (512, 1024)
            pltpu.VMEM((_NPC1, _NOUT), jnp.bfloat16),   # m2 staging (1024, 768)
            pltpu.SemaphoreType.DMA((2,)),
        ],
    )(z2d, prep["m0"], prep["gb0"], prep["g0"], prep["gt0"],
      prep["m1"], prep["gb1"], prep["g1"], prep["gt1"], prep["m2"])
    # Columns are CHW-ordered -> plain reshape gives NCHW (no transpose).
    return out_flat.reshape(B, NC, ISIZE, ISIZE)


# ----------------------------------------------------------------------------
# Parameters (DCGAN-style init) and a pure-JAX reference for validation
# ----------------------------------------------------------------------------
def make_params(key, nz=NZ, nc=NC, ngf=NGF):
    c0, c1 = 2 * ngf, ngf
    ks = jax.random.split(key, 5)
    return {
        "wt0": 0.02 * jax.random.normal(ks[0], (nz, c0, 4, 4), jnp.float32),
        "wt1": 0.02 * jax.random.normal(ks[1], (c0, c1, 4, 4), jnp.float32),
        "wt2": 0.02 * jax.random.normal(ks[2], (c1, nc, 4, 4), jnp.float32),
        "g0": 1.0 + 0.02 * jax.random.normal(ks[3], (c0,), jnp.float32),
        "b0": jnp.zeros((c0,), jnp.float32),
        "g1": 1.0 + 0.02 * jax.random.normal(ks[4], (c1,), jnp.float32),
        "b1": jnp.zeros((c1,), jnp.float32),
    }


def _torch_convt_ref(x, wt, stride, pad):
    k = wt.shape[2]
    w_conv = jnp.transpose(wt, (1, 0, 2, 3))[:, :, ::-1, ::-1]   # OIHW, flipped
    return jax.lax.conv_general_dilated(
        x, w_conv, window_strides=(1, 1),
        padding=[(k - 1 - pad, k - 1 - pad)] * 2,
        lhs_dilation=(stride, stride),
        dimension_numbers=("NCHW", "OIHW", "NCHW"))


def _bn_relu_ref(x, gamma, beta):
    mean = jnp.mean(x, axis=(0, 2, 3), keepdims=True)
    var = jnp.mean((x - mean) ** 2, axis=(0, 2, 3), keepdims=True)
    y = (x - mean) * jax.lax.rsqrt(var + _BN_EPS)
    y = y * gamma.reshape(1, -1, 1, 1) + beta.reshape(1, -1, 1, 1)
    return jnp.maximum(y, 0.0)


def netg_reference(z, params):
    x = _torch_convt_ref(z, params["wt0"], 1, 0)
    x = _bn_relu_ref(x, params["g0"], params["b0"])
    x = _torch_convt_ref(x, params["wt1"], 2, 1)
    x = _bn_relu_ref(x, params["g1"], params["b1"])
    x = _torch_convt_ref(x, params["wt2"], 2, 1)
    return jnp.tanh(x)


if __name__ == "__main__":
    key = jax.random.PRNGKey(0)
    k_param, k_z = jax.random.split(key)
    params = make_params(k_param)
    prep = prepare_decoder(params)
    z = jax.random.normal(k_z, (BATCH, NZ, 1, 1), jnp.float32)   # NCHW latent

    out = jax.jit(netg_forward)(z, prep)
    out = jax.block_until_ready(out)

    assert out.shape == (BATCH, NC, ISIZE, ISIZE), out.shape
    assert out.dtype == jnp.float32
    assert bool(jnp.all(jnp.isfinite(out)))
    assert bool(jnp.all(jnp.abs(out) <= 1.0))                    # tanh range

    # Numeric check against a pure-JAX/XLA reference (bf16 matmul tolerance).
    ref = netg_reference(z, params)
    max_err = float(jnp.max(jnp.abs(out - ref)))
    assert max_err < 5e-2, max_err

    print("KERNEL_OK")
</pallas_src>

<mosaic_0001>
module attributes {stable_mosaic.version = 11 : i64} {
  func.func @_decoder_kernel(%arg0: memref<8x8xf32, #tpu.memory_space<vmem>>, %arg1: memref<8x512xbf16, #tpu.memory_space<vmem>>, %arg2: memref<2x32xf32, #tpu.memory_space<vmem>>, %arg3: memref<512x32xbf16, #tpu.memory_space<vmem>>, %arg4: memref<32x512xbf16, #tpu.memory_space<vmem>>, %arg5: memref<512x1024xbf16, #tpu.memory_space<any>>, %arg6: memref<2x16xf32, #tpu.memory_space<vmem>>, %arg7: memref<1024x16xbf16, #tpu.memory_space<vmem>>, %arg8: memref<16x1024xbf16, #tpu.memory_space<vmem>>, %arg9: memref<1024x768xbf16, #tpu.memory_space<any>>, %arg10: memref<8x768xf32, #tpu.memory_space<vmem>>, %arg11: memref<512x1024xbf16, #tpu.memory_space<vmem>>, %arg12: memref<1024x768xbf16, #tpu.memory_space<vmem>>, %arg13: memref<2x!tpu.dma_semaphore, #tpu.memory_space<semaphore_mem>>) attributes {dimension_semantics = [], scalar_prefetch = 0 : i64, scratch_operands = 3 : i64, tpu.core_type = #tpu.core_type<tc>} {
    %c0_i32 = arith.constant 0 : i32
    %0 = tpu.memref_slice %arg13[%c0_i32] : memref<2x!tpu.dma_semaphore, #tpu.memory_space<semaphore_mem>> -> memref<1x!tpu.dma_semaphore, #tpu.memory_space<semaphore_mem>>
    %1 = tpu.memref_squeeze %0 : memref<1x!tpu.dma_semaphore, #tpu.memory_space<semaphore_mem>> -> memref<!tpu.dma_semaphore, #tpu.memory_space<semaphore_mem>>
    tpu.enqueue_dma source(%arg5 : memref<512x1024xbf16, #tpu.memory_space<any>>) target(%arg11 : memref<512x1024xbf16, #tpu.memory_space<vmem>>) target_semaphore(%1 : memref<!tpu.dma_semaphore, #tpu.memory_space<semaphore_mem>>)
    %c1_i32 = arith.constant 1 : i32
    %2 = tpu.memref_slice %arg13[%c1_i32] : memref<2x!tpu.dma_semaphore, #tpu.memory_space<semaphore_mem>> -> memref<1x!tpu.dma_semaphore, #tpu.memory_space<semaphore_mem>>
    %3 = tpu.memref_squeeze %2 : memref<1x!tpu.dma_semaphore, #tpu.memory_space<semaphore_mem>> -> memref<!tpu.dma_semaphore, #tpu.memory_space<semaphore_mem>>
    tpu.enqueue_dma source(%arg9 : memref<1024x768xbf16, #tpu.memory_space<any>>) target(%arg12 : memref<1024x768xbf16, #tpu.memory_space<vmem>>) target_semaphore(%3 : memref<!tpu.dma_semaphore, #tpu.memory_space<semaphore_mem>>)
    %c0 = arith.constant 0 : index
    %c0_0 = arith.constant 0 : index
    %4 = vector.load %arg0[%c0, %c0_0] : memref<8x8xf32, #tpu.memory_space<vmem>>, vector<8x8xf32>
    %5 = arith.truncf %4 : vector<8x8xf32> to vector<8x8xbf16>
    %c0_1 = arith.constant 0 : index
    %c0_2 = arith.constant 0 : index
    %6 = vector.load %arg1[%c0_1, %c0_2] : memref<8x512xbf16, #tpu.memory_space<vmem>>, vector<8x512xbf16>
    %cst = arith.constant dense<0.000000e+00> : vector<8x512xf32>
    %7 = tpu.matmul %5, %6, %cst {dimension_numbers = #tpu.dot_dimension_numbers<[1], [0], [0], [1], [0, 0, 1, 1], [], []>} : vector<8x8xbf16>, vector<8x512xbf16>, vector<8x512xf32> -> vector<8x512xf32>
    %cst_3 = arith.constant dense<0.000000e+00> : vector<512xf32>
    %8 = vector.multi_reduction <add>, %7, %cst_3 [0] : vector<8x512xf32> to vector<512xf32>
    %9 = vector.shape_cast %8 : vector<512xf32> to vector<1x512xf32>
    %10 = arith.mulf %7, %7 : vector<8x512xf32>
    %cst_4 = arith.constant dense<0.000000e+00> : vector<512xf32>
    %11 = vector.multi_reduction <add>, %10, %cst_4 [0] : vector<8x512xf32> to vector<512xf32>
    %12 = vector.shape_cast %11 : vector<512xf32> to vector<1x512xf32>
    %13 = tpu.concatenate %9, %12 in 0 : vector<1x512xf32>, vector<1x512xf32> -> vector<2x512xf32>
    %14 = arith.truncf %13 : vector<2x512xf32> to vector<2x512xbf16>
    %c0_5 = arith.constant 0 : index
    %c0_6 = arith.constant 0 : index
    %15 = vector.load %arg3[%c0_5, %c0_6] : memref<512x32xbf16, #tpu.memory_space<vmem>>, vector<512x32xbf16>
    %cst_7 = arith.constant dense<0.000000e+00> : vector<2x32xf32>
    %16 = tpu.matmul %14, %15, %cst_7 {dimension_numbers = #tpu.dot_dimension_numbers<[1], [0], [0], [1], [0, 0, 1, 1], [], []>} : vector<2x512xbf16>, vector<512x32xbf16>, vector<2x32xf32> -> vector<2x32xf32>
    %cst_8 = arith.constant 7.812500e-03 : f32
    %17 = vector.broadcast %cst_8 : f32 to vector<2x32xf32>
    %18 = arith.mulf %16, %17 : vector<2x32xf32>
    %19 = vector.extract_strided_slice %18 {offsets = [0, 0], sizes = [1, 32], strides = [1, 1]} : vector<2x32xf32> to vector<1x32xf32>
    %20 = vector.extract_strided_slice %18 {offsets = [1, 0], sizes = [1, 32], strides = [1, 1]} : vector<2x32xf32> to vector<1x32xf32>
    %21 = arith.mulf %19, %19 : vector<1x32xf32>
    %22 = arith.subf %20, %21 : vector<1x32xf32>
    %cst_9 = arith.constant 9.99999974E-6 : f32
    %23 = vector.broadcast %cst_9 : f32 to vector<1x32xf32>
    %24 = arith.addf %22, %23 : vector<1x32xf32>
    %25 = math.rsqrt %24 : vector<1x32xf32>
    %c0_10 = arith.constant 0 : index
    %c0_11 = arith.constant 0 : index
    %26 = vector.load %arg2[%c0_10, %c0_11] : memref<2x32xf32, #tpu.memory_space<vmem>>, vector<1x32xf32>
    %27 = arith.mulf %26, %25 : vector<1x32xf32>
    %c1 = arith.constant 1 : index
    %c0_12 = arith.constant 0 : index
    %28 = vector.load %arg2[%c1, %c0_12] : memref<2x32xf32, #tpu.memory_space<vmem>>, vector<1x32xf32>
    %29 = arith.mulf %19, %27 : vector<1x32xf32>
    %30 = arith.subf %28, %29 : vector<1x32xf32>
    %31 = tpu.concatenate %27, %30 in 0 : vector<1x32xf32>, vector<1x32xf32> -> vector<2x32xf32>
    %32 = arith.truncf %31 : vector<2x32xf32> to vector<2x32xbf16>
    %c0_13 = arith.constant 0 : index
    %c0_14 = arith.constant 0 : index
    %33 = vector.load %arg4[%c0_13, %c0_14] : memref<32x512xbf16, #tpu.memory_space<vmem>>, vector<32x512xbf16>
    %cst_15 = arith.constant dense<0.000000e+00> : vector<2x512xf32>
    %34 = tpu.matmul %32, %33, %cst_15 {dimension_numbers = #tpu.dot_dimension_numbers<[1], [0], [0], [1], [0, 0, 1, 1], [], []>} : vector<2x32xbf16>, vector<32x512xbf16>, vector<2x512xf32> -> vector<2x512xf32>
    %35 = vector.extract_strided_slice %34 {offsets = [0, 0], sizes = [1, 512], strides = [1, 1]} : vector<2x512xf32> to vector<1x512xf32>
    %36 = vector.broadcast %35 : vector<1x512xf32> to vector<8x512xf32>
    %37 = arith.mulf %7, %36 : vector<8x512xf32>
    %38 = vector.extract_strided_slice %34 {offsets = [1, 0], sizes = [1, 512], strides = [1, 1]} : vector<2x512xf32> to vector<1x512xf32>
    %39 = vector.broadcast %38 : vector<1x512xf32> to vector<8x512xf32>
    %40 = arith.addf %37, %39 : vector<8x512xf32>
    %cst_16 = arith.constant 0.000000e+00 : f32
    %41 = vector.broadcast %cst_16 : f32 to vector<8x512xf32>
    %42 = arith.maximumf %40, %41 : vector<8x512xf32>
    %c0_i32_17 = arith.constant 0 : i32
    %43 = tpu.memref_slice %arg13[%c0_i32_17] : memref<2x!tpu.dma_semaphore, #tpu.memory_space<semaphore_mem>> -> memref<1x!tpu.dma_semaphore, #tpu.memory_space<semaphore_mem>>
    %44 = tpu.memref_squeeze %43 : memref<1x!tpu.dma_semaphore, #tpu.memory_space<semaphore_mem>> -> memref<!tpu.dma_semaphore, #tpu.memory_space<semaphore_mem>>
    tpu.wait_dma2 semaphore(%44 : memref<!tpu.dma_semaphore, #tpu.memory_space<semaphore_mem>>) src(%arg5 : memref<512x1024xbf16, #tpu.memory_space<any>>) dst(%arg11 : memref<512x1024xbf16, #tpu.memory_space<vmem>>)
    %45 = arith.truncf %42 : vector<8x512xf32> to vector<8x512xbf16>
    %c0_18 = arith.constant 0 : index
    %c0_19 = arith.constant 0 : index
    %46 = vector.load %arg11[%c0_18, %c0_19] : memref<512x1024xbf16, #tpu.memory_space<vmem>>, vector<512x1024xbf16>
    %cst_20 = arith.constant dense<0.000000e+00> : vector<8x1024xf32>
    %47 = tpu.matmul %45, %46, %cst_20 {dimension_numbers = #tpu.dot_dimension_numbers<[1], [0], [0], [1], [0, 0, 1, 1], [], []>} : vector<8x512xbf16>, vector<512x1024xbf16>, vector<8x1024xf32> -> vector<8x1024xf32>
    %cst_21 = arith.constant dense<0.000000e+00> : vector<1024xf32>
    %48 = vector.multi_reduction <add>, %47, %cst_21 [0] : vector<8x1024xf32> to vector<1024xf32>
    %49 = vector.shape_cast %48 : vector<1024xf32> to vector<1x1024xf32>
    %50 = arith.mulf %47, %47 : vector<8x1024xf32>
    %cst_22 = arith.constant dense<0.000000e+00> : vector<1024xf32>
    %51 = vector.multi_reduction <add>, %50, %cst_22 [0] : vector<8x1024xf32> to vector<1024xf32>
    %52 = vector.shape_cast %51 : vector<1024xf32> to vector<1x1024xf32>
    %53 = tpu.concatenate %49, %52 in 0 : vector<1x1024xf32>, vector<1x1024xf32> -> vector<2x1024xf32>
    %54 = arith.truncf %53 : vector<2x1024xf32> to vector<2x1024xbf16>
    %c0_23 = arith.constant 0 : index
    %c0_24 = arith.constant 0 : index
    %55 = vector.load %arg7[%c0_23, %c0_24] : memref<1024x16xbf16, #tpu.memory_space<vmem>>, vector<1024x16xbf16>
    %cst_25 = arith.constant dense<0.000000e+00> : vector<2x16xf32>
    %56 = tpu.matmul %54, %55, %cst_25 {dimension_numbers = #tpu.dot_dimension_numbers<[1], [0], [0], [1], [0, 0, 1, 1], [], []>} : vector<2x1024xbf16>, vector<1024x16xbf16>, vector<2x16xf32> -> vector<2x16xf32>
    %cst_26 = arith.constant 0.001953125 : f32
    %57 = vector.broadcast %cst_26 : f32 to vector<2x16xf32>
    %58 = arith.mulf %56, %57 : vector<2x16xf32>
    %59 = vector.extract_strided_slice %58 {offsets = [0, 0], sizes = [1, 16], strides = [1, 1]} : vector<2x16xf32> to vector<1x16xf32>
    %60 = vector.extract_strided_slice %58 {offsets = [1, 0], sizes = [1, 16], strides = [1, 1]} : vector<2x16xf32> to vector<1x16xf32>
    %61 = arith.mulf %59, %59 : vector<1x16xf32>
    %62 = arith.subf %60, %61 : vector<1x16xf32>
    %cst_27 = arith.constant 9.99999974E-6 : f32
    %63 = vector.broadcast %cst_27 : f32 to vector<1x16xf32>
    %64 = arith.addf %62, %63 : vector<1x16xf32>
    %65 = math.rsqrt %64 : vector<1x16xf32>
    %c0_28 = arith.constant 0 : index
    %c0_29 = arith.constant 0 : index
    %66 = vector.load %arg6[%c0_28, %c0_29] : memref<2x16xf32, #tpu.memory_space<vmem>>, vector<1x16xf32>
    %67 = arith.mulf %66, %65 : vector<1x16xf32>
    %c1_30 = arith.constant 1 : index
    %c0_31 = arith.constant 0 : index
    %68 = vector.load %arg6[%c1_30, %c0_31] : memref<2x16xf32, #tpu.memory_space<vmem>>, vector<1x16xf32>
    %69 = arith.mulf %59, %67 : vector<1x16xf32>
    %70 = arith.subf %68, %69 : vector<1x16xf32>
    %71 = tpu.concatenate %67, %70 in 0 : vector<1x16xf32>, vector<1x16xf32> -> vector<2x16xf32>
    %72 = arith.truncf %71 : vector<2x16xf32> to vector<2x16xbf16>
    %c0_32 = arith.constant 0 : index
    %c0_33 = arith.constant 0 : index
    %73 = vector.load %arg8[%c0_32, %c0_33] : memref<16x1024xbf16, #tpu.memory_space<vmem>>, vector<16x1024xbf16>
    %cst_34 = arith.constant dense<0.000000e+00> : vector<2x1024xf32>
    %74 = tpu.matmul %72, %73, %cst_34 {dimension_numbers = #tpu.dot_dimension_numbers<[1], [0], [0], [1], [0, 0, 1, 1], [], []>} : vector<2x16xbf16>, vector<16x1024xbf16>, vector<2x1024xf32> -> vector<2x1024xf32>
    %75 = vector.extract_strided_slice %74 {offsets = [0, 0], sizes = [1, 1024], strides = [1, 1]} : vector<2x1024xf32> to vector<1x1024xf32>
    %76 = vector.broadcast %75 : vector<1x1024xf32> to vector<8x1024xf32>
    %77 = arith.mulf %47, %76 : vector<8x1024xf32>
    %78 = vector.extract_strided_slice %74 {offsets = [1, 0], sizes = [1, 1024], strides = [1, 1]} : vector<2x1024xf32> to vector<1x1024xf32>
    %79 = vector.broadcast %78 : vector<1x1024xf32> to vector<8x1024xf32>
    %80 = arith.addf %77, %79 : vector<8x1024xf32>
    %cst_35 = arith.constant 0.000000e+00 : f32
    %81 = vector.broadcast %cst_35 : f32 to vector<8x1024xf32>
    %82 = arith.maximumf %80, %81 : vector<8x1024xf32>
    %c1_i32_36 = arith.constant 1 : i32
    %83 = tpu.memref_slice %arg13[%c1_i32_36] : memref<2x!tpu.dma_semaphore, #tpu.memory_space<semaphore_mem>> -> memref<1x!tpu.dma_semaphore, #tpu.memory_space<semaphore_mem>>
    %84 = tpu.memref_squeeze %83 : memref<1x!tpu.dma_semaphore, #tpu.memory_space<semaphore_mem>> -> memref<!tpu.dma_semaphore, #tpu.memory_space<semaphore_mem>>
    tpu.wait_dma2 semaphore(%84 : memref<!tpu.dma_semaphore, #tpu.memory_space<semaphore_mem>>) src(%arg9 : memref<1024x768xbf16, #tpu.memory_space<any>>) dst(%arg12 : memref<1024x768xbf16, #tpu.memory_space<vmem>>)
    %85 = arith.truncf %82 : vector<8x1024xf32> to vector<8x1024xbf16>
    %c0_37 = arith.constant 0 : index
    %c0_38 = arith.constant 0 : index
    %86 = vector.load %arg12[%c0_37, %c0_38] : memref<1024x768xbf16, #tpu.memory_space<vmem>>, vector<1024x768xbf16>
    %cst_39 = arith.constant dense<0.000000e+00> : vector<8x768xf32>
    %87 = tpu.matmul %85, %86, %cst_39 {dimension_numbers = #tpu.dot_dimension_numbers<[1], [0], [0], [1], [0, 0, 1, 1], [], []>} : vector<8x1024xbf16>, vector<1024x768xbf16>, vector<8x768xf32> -> vector<8x768xf32>
    %88 = math.tanh %87 : vector<8x768xf32>
    %c0_40 = arith.constant 0 : index
    %c0_41 = arith.constant 0 : index
    %89 = vector.load %arg10[%c0_40, %c0_41] : memref<8x768xf32, #tpu.memory_space<vmem>>, vector<8x768xf32>
    tpu.vector_store %arg10[%c0_40, %c0_41], %88 {strides = array<i32>} : memref<8x768xf32, #tpu.memory_space<vmem>>, vector<8x768xf32>,
    return
  }
}

</mosaic_0001>

<llo_original>
// kernel: netg_forward.1
$region0: #{netg_forward.1}
  #allocation0 [shape = 'u32[]', space=smem, size = 0x4, offset = 0x4, fixed_abs, tag = 'smem constant byte address 0x4 - core index']
  #allocation1 [shape = 'u32[144,128]{1,0:T(1,128)}', space=vmem, size = 0x12000, scoped, tag = 'internal scratch']
  #allocation2 [shape = 'bf16[512,1024]{1,0:T(16,128)(2,1)}', space=vmem, size = 0x100000, scoped, tag = 'scratch operand']
  #allocation3 [shape = 'bf16[1024,768]{1,0:T(16,128)(2,1)}', space=vmem, size = 0x180000, scoped, tag = 'scratch operand']
  #allocation4 [shape = 's32[2]{0}', space=sflag, size = 0x8, scoped, tag = 'scratch operand']
  #allocation15 [shape = 's32[]', space=sflag, size = 0x4, offset = 0, fixed_abs, tag = 'sflag constant byte address 0x0 - dummy sync flag']
  #allocation17 [shape = 's32[]', space=sflag, size = 0x4, offset = 0, fixed_abs, tag = 'sflag constant byte address 0x0 - dummy sync flag']
  %s0 = inlined_call_operand.hbm [shape: f32[8,8], index: 0, kind: input, shape index: {}]
  %s1 = inlined_call_operand.hbm [shape: bf16[8,512], index: 1, kind: input, shape index: {}]
  %s2 = inlined_call_operand.hbm [shape: f32[2,32], index: 2, kind: input, shape index: {}]
  %s3 = inlined_call_operand.vmem [shape: bf16[512,32], index: 3, kind: input, shape index: {}]
  %s4 = inlined_call_operand.hbm [shape: bf16[32,512], index: 4, kind: input, shape index: {}]
  %s5 = inlined_call_operand.hbm [shape: bf16[512,1024], index: 5, kind: input, shape index: {}]
  %s6 = inlined_call_operand.hbm [shape: f32[2,16], index: 6, kind: input, shape index: {}]
  %s7 = inlined_call_operand.vmem [shape: bf16[1024,16], index: 7, kind: input, shape index: {}]
  %s8 = inlined_call_operand.hbm [shape: bf16[16,1024], index: 8, kind: input, shape index: {}]
  %s9 = inlined_call_operand.hbm [shape: bf16[1024,768], index: 9, kind: input, shape index: {}]
  %s10 = inlined_call_operand.vmem [shape: f32[8,768], index: 10, kind: output, shape index: {}]
  %s11 = sld [smem:[#allocation0]]
  $region66: #{netg_forward.1} parent=0
    _
  %s13 = ssub.s32 1, %s11
  %s14 = scalar_select 0, %s13, %s11
  $region1: #{netg_forward.1} parent=0
    #allocation5 [shape = 'u8[4096]{0}', space=vmem, size = 0x1000, scoped, tag = 'input window, operand 0, single buffered']
    #allocation6 [shape = 's32[1]{0}', space=sflag, size = 0x4, scoped, tag = 'scoped memory for netg_forward.1']
    #allocation7 [shape = 'u8[8192]{0}', space=vmem, size = 0x2000, scoped, tag = 'input window, operand 1, single buffered']
    #allocation8 [shape = 's32[1]{0}', space=sflag, size = 0x4, scoped, tag = 'scoped memory for netg_forward.1']
    #allocation9 [shape = 'u8[1024]{0}', space=vmem, size = 0x400, scoped, tag = 'input window, operand 2, single buffered']
    #allocation10 [shape = 'u8[32768]{0}', space=vmem, size = 0x8000, scoped, tag = 'input window, operand 4, single buffered']
    #allocation11 [shape = 's32[1]{0}', space=sflag, size = 0x4, scoped, tag = 'scoped memory for netg_forward.1']
    #allocation12 [shape = 'u8[1024]{0}', space=vmem, size = 0x400, scoped, tag = 'input window, operand 6, single buffered']
    #allocation13 [shape = 'u8[32768]{0}', space=vmem, size = 0x8000, scoped, tag = 'input window, operand 8, single buffered']
    #allocation14 [shape = 's32[1]{0}', space=sflag, size = 0x4, scoped, tag = 'scoped memory for netg_forward.1']
    #allocation16 [shape = 'u32[9]{0}', space=smem, size = 0x24, scoped, tag = 'DMA stride descriptor']
    #allocation18 [shape = 'u32[9]{0}', space=smem, size = 0x24, scoped, tag = 'DMA stride descriptor']
    %15 = vsyncpa [#allocation6], 0
    %16 = vsyncpa [#allocation8], 0
    %17 = vsyncpa [#allocation11], 0
    %18 = vsyncpa [#allocation14], 0
    // Predicated region
    $region2: #{netg_forward.1} parent=1 // pred_check
      _
    $region3: #{netg_forward.1} parent=1 // pred_check_branch
      %20 = sbr.rel (0) target = $region5
    $region4: #{netg_forward.1} parent=1 // pred_region
      %s22 = ssub.s32 128, 128
      %23 = vsyncadd [#allocation6], %s22
      %s25 = sshll.u32 [#allocation5], 4
      %s26 = int_to_ptr.vmem [resolvable:$true] %s25
      %28 = dma.hbm_to_vmem [thread:$0]  %s0, 128, %s26, [#allocation6]
    $region5: #{netg_forward.1} parent=1 // pred_fallthru
      _
    // Predicated region
    $region6: #{netg_forward.1} parent=1 // pred_check
      _
    $region7: #{netg_forward.1} parent=1 // pred_check_branch
      %30 = sbr.rel (0) target = $region9
    $region8: #{netg_forward.1} parent=1 // pred_region
      %s32 = ssub.s32 256, 256
      %33 = vsyncadd [#allocation8], %s32
      %s35 = sshll.u32 [#allocation7], 4
      %s36 = int_to_ptr.vmem [resolvable:$true] %s35
      %38 = dma.hbm_to_vmem [thread:$0]  %s1, 256, %s36, [#allocation8]
    $region9: #{netg_forward.1} parent=1 // pred_fallthru
      _
    // Predicated region
    $region10: #{netg_forward.1} parent=1 // pred_check
      _
    $region11: #{netg_forward.1} parent=1 // pred_check_branch
      %40 = sbr.rel (0) target = $region13
    $region12: #{netg_forward.1} parent=1 // pred_region
      %s42 = ssub.s32 32, 32
      %43 = vsyncadd [#allocation8], %s42
      %s45 = sshll.u32 [#allocation9], 4
      %s46 = int_to_ptr.vmem [resolvable:$true] %s45
      %48 = dma.hbm_to_vmem [thread:$0]  %s2, 32, %s46, [#allocation8]
    $region13: #{netg_forward.1} parent=1 // pred_fallthru
      _
    // Predicated region
    $region14: #{netg_forward.1} parent=1 // pred_check
      _
    $region15: #{netg_forward.1} parent=1 // pred_check_branch
      %50 = sbr.rel (0) target = $region17
    $region16: #{netg_forward.1} parent=1 // pred_region
      _
    $region17: #{netg_forward.1} parent=1 // pred_fallthru
      _
    // Predicated region
    $region18: #{netg_forward.1} parent=1 // pred_check
      _
    $region19: #{netg_forward.1} parent=1 // pred_check_branch
      %52 = sbr.rel (0) target = $region21
    $region20: #{netg_forward.1} parent=1 // pred_region
      %s54 = ssub.s32 1024, 1024
      %55 = vsyncadd [#allocation11], %s54
      %s56 = sshll.u32 [#allocation10], 4
      %s57 = int_to_ptr.vmem [resolvable:$true] %s56
      %62 = dma.hbm_to_vmem [thread:$0]  %s4, 1024, %s57, [#allocation11], 256, 256, 16
    $region21: #{netg_forward.1} parent=1 // pred_fallthru
      _
    // Predicated region
    $region22: #{netg_forward.1} parent=1 // pred_check
      _
    $region23: #{netg_forward.1} parent=1 // pred_check_branch
      %64 = sbr.rel (0) target = $region25
    $region24: #{netg_forward.1} parent=1 // pred_region
      %s66 = ssub.s32 32, 32
      %67 = vsyncadd [#allocation11], %s66
      %s69 = sshll.u32 [#allocation12], 4
      %s70 = int_to_ptr.vmem [resolvable:$true] %s69
      %72 = dma.hbm_to_vmem [thread:$0]  %s6, 32, %s70, [#allocation11]
    $region25: #{netg_forward.1} parent=1 // pred_fallthru
      _
    // Predicated region
    $region26: #{netg_forward.1} parent=1 // pred_check
      _
    $region27: #{netg_forward.1} parent=1 // pred_check_branch
      %74 = sbr.rel (0) target = $region29
    $region28: #{netg_forward.1} parent=1 // pred_region
      _
    $region29: #{netg_forward.1} parent=1 // pred_fallthru
      _
    // Predicated region
    $region30: #{netg_forward.1} parent=1 // pred_check
      _
    $region31: #{netg_forward.1} parent=1 // pred_check_branch
      %76 = sbr.rel (0) target = $region33
    $region32: #{netg_forward.1} parent=1 // pred_region
      %s78 = ssub.s32 1024, 1024
      %79 = vsyncadd [#allocation14], %s78
      %s80 = sshll.u32 [#allocation13], 4
      %s81 = int_to_ptr.vmem [resolvable:$true] %s80
      %86 = dma.hbm_to_vmem [thread:$0]  %s8, 1024, %s81, [#allocation14], 512, 512, 32
    $region33: #{netg_forward.1} parent=1 // pred_fallthru
      _
    // Predicated region
    $region34: #{netg_forward.1} parent=1 // pred_check
      _
    $region35: #{netg_forward.1} parent=1 // pred_check_branch
      %88 = sbr.rel (0) target = $region37
    $region36: #{netg_forward.1} parent=1 // pred_region
      %89 = dma.done [#allocation6], 128
    $region37: #{netg_forward.1} parent=1 // pred_fallthru
      _
    // Predicated region
    $region38: #{netg_forward.1} parent=1 // pred_check
      _
    $region39: #{netg_forward.1} parent=1 // pred_check_branch
      %91 = sbr.rel (0) target = $region41
    $region40: #{netg_forward.1} parent=1 // pred_region
      %92 = dma.done [#allocation8], 256
    $region41: #{netg_forward.1} parent=1 // pred_fallthru
      _
    // Predicated region
    $region42: #{netg_forward.1} parent=1 // pred_check
      _
    $region43: #{netg_forward.1} parent=1 // pred_check_branch
      %94 = sbr.rel (0) target = $region45
    $region44: #{netg_forward.1} parent=1 // pred_region
      %95 = dma.done [#allocation8], 32
    $region45: #{netg_forward.1} parent=1 // pred_fallthru
      _
    // Predicated region
    $region46: #{netg_forward.1} parent=1 // pred_check
      _
    $region47: #{netg_forward.1} parent=1 // pred_check_branch
      %97 = sbr.rel (0) target = $region49
    $region48: #{netg_forward.1} parent=1 // pred_region
      %98 = dma.done [#allocation11], 1024
    $region49: #{netg_forward.1} parent=1 // pred_fallthru
      _
    // Predicated region
    $region50: #{netg_forward.1} parent=1 // pred_check
      _
    $region51: #{netg_forward.1} parent=1 // pred_check_branch
      %100 = sbr.rel (0) target = $region53
    $region52: #{netg_forward.1} parent=1 // pred_region
      %101 = dma.done [#allocation11], 32
    $region53: #{netg_forward.1} parent=1 // pred_fallthru
      _
    // Predicated region
    $region54: #{netg_forward.1} parent=1 // pred_check
      _
    $region55: #{netg_forward.1} parent=1 // pred_check_branch
      %103 = sbr.rel (0) target = $region57
    $region56: #{netg_forward.1} parent=1 // pred_region
      %104 = dma.done [#allocation14], 1024
    $region57: #{netg_forward.1} parent=1 // pred_fallthru
      _
    %s107 = sshll.u32 1, 14
    %s108 = sxor.u32 4294967295, %s107
    %s110 = sld [smem:[#allocation0]]
    %s111 = sadd.s32 2, %s110
    %s113 = sshll.u32 7, 26
    %s114 = sxor.u32 4294967295, %s113
    %s115 = sand.u32 0, %s114
    %s116 = sshll.u32 %s111, 26
    %s117 = sor.u32 %s115, %s116
    %s118 = sshll.u32 [#allocation2], 4
    %s119 = int_to_ptr.vmem [resolvable:$true] %s118
    %122 = sst [smem:[#allocation16]] 1024
    %s123 = scalar_lea.smem [#allocation16], 1
    %124 = sst [smem:[%s123]] 1024
    %s125 = scalar_lea.smem [#allocation16], 2
    %126 = sst [smem:[%s125]] 8
    %s127 = scalar_lea.smem [#allocation16], 3
    %128 = sst [smem:[%s127]] 64
    %s129 = scalar_lea.smem [#allocation16], 4
    %130 = sst [smem:[%s129]] 128
    %s131 = scalar_lea.smem [#allocation16], 5
    %132 = sst [smem:[%s131]] 2
    %s133 = scalar_lea.smem [#allocation16], 6
    %134 = sst [smem:[%s133]] 512
    %s135 = scalar_lea.smem [#allocation16], 7
    %136 = sst [smem:[%s135]] 64
    %s137 = scalar_lea.smem [#allocation16], 8
    %138 = sst [smem:[%s137]] 4
    %140 = dma.general %s5, 32768, %s119, [#allocation4], [#allocation15], [#allocation16], %s117, 0
    %s141 = scalar_lea.sflag [#allocation4], 1
    %s143 = sshll.u32 1, 14
    %s144 = sxor.u32 4294967295, %s143
    %s146 = sadd.s32 2, %s110
    %s148 = sshll.u32 7, 26
    %s149 = sxor.u32 4294967295, %s148
    %s150 = sand.u32 0, %s149
    %s151 = sshll.u32 %s146, 26
    %s152 = sor.u32 %s150, %s151
    %s153 = sshll.u32 [#allocation3], 4
    %s154 = int_to_ptr.vmem [resolvable:$true] %s153
    %157 = sst [smem:[#allocation18]] 768
    %s158 = scalar_lea.smem [#allocation18], 1
    %159 = sst [smem:[%s158]] 768
    %s160 = scalar_lea.smem [#allocation18], 2
    %161 = sst [smem:[%s160]] 6
    %s162 = scalar_lea.smem [#allocation18], 3
    %163 = sst [smem:[%s162]] 64
    %s164 = scalar_lea.smem [#allocation18], 4
    %165 = sst [smem:[%s164]] 128
    %s166 = scalar_lea.smem [#allocation18], 5
    %167 = sst [smem:[%s166]] 2
    %s168 = scalar_lea.smem [#allocation18], 6
    %169 = sst [smem:[%s168]] 384
    %s170 = scalar_lea.smem [#allocation18], 7
    %171 = sst [smem:[%s170]] 64
    %s172 = scalar_lea.smem [#allocation18], 8
    %173 = sst [smem:[%s172]] 4
    %175 = dma.general %s9, 49152, %s154, %s141, [#allocation17], [#allocation18], %s152, 0
    %v176 = vld [vmem:[#allocation5] sm:$0xff]
    %v177 = vpack.c.bf16 %v176, %v176
    %v178 = vld [vmem:[#allocation7] sm:$0xff]
    %v179 = vld [vmem:[#allocation7 + $0x8] sm:$0xff]
    %v182 = vunpack.c.l.b16 %v178
    %v183 = vunpack.c.h.b16 %v178
    %v184 = vunpack.c.l.b16 %v179
    %v185 = vunpack.c.h.b16 %v179
    %v186 = vpack.c.b16 %v182, %v182
    %v187 = vpack.c.b16 %v183, %v183
    %v188 = vpack.c.b16 %v184, %v184
    %v189 = vpack.c.b16 %v185, %v185
    %vm190 = vcmask 64512
    %v192 = vsel %vm190, %v177, 0
    %vm194 = vcmask 1043456
    %v196 = vsel %vm194, %v186, 0
    %v199 = vsel %vm194, %v187, 0
    %v202 = vsel %vm194, %v188, 0
    %v205 = vsel %vm194, %v189, 0
    %207 = vmatprep.subr.bf16.mxu0 %v199
    %208 = vmatpush1.bf16.msra.mxu0 %v196
    %209 = vmatprep.subr.bf16.mxu0 0
    %210 = vmatpush1.bf16.msra.mxu0 0
    %211 = vmatprep.subr.bf16.mxu0 0
    %212 = vmatpush1.bf16.msra.mxu0 0
    %213 = vmatprep.subr.bf16.mxu0 0
    %214 = vmatpush1.bf16.msra.mxu0 0
    %215 = vmatprep.subr.bf16.mxu0 0
    %216 = vmatpush1.bf16.msra.mxu0 0
    %217 = vmatprep.subr.bf16.mxu0 0
    %218 = vmatpush1.bf16.msra.mxu0 0
    %219 = vmatprep.subr.bf16.mxu0 0
    %220 = vmatpush1.bf16.msra.mxu0 0
    %221 = vmatprep.subr.bf16.mxu0 0
    %222 = vmatpush1.bf16.msra.mxu0 0
    %223 = vmatprep.subr.bf16.mxu0 0
    %224 = vmatpush1.bf16.msra.mxu0 0
    %225 = vmatprep.subr.bf16.mxu0 0
    %226 = vmatpush1.bf16.msra.mxu0 0
    %227 = vmatprep.subr.bf16.mxu0 0
    %228 = vmatpush1.bf16.msra.mxu0 0
    %229 = vmatprep.subr.bf16.mxu0 0
    %230 = vmatpush1.bf16.msra.mxu0 0
    %231 = vmatprep.subr.bf16.mxu0 0
    %232 = vmatpush1.bf16.msra.mxu0 0
    %233 = vmatprep.subr.bf16.mxu0 0
    %234 = vmatpush1.bf16.msra.mxu0 0
    %235 = vmatprep.subr.bf16.mxu0 0
    %236 = vmatpush1.bf16.msra.mxu0 0
    %237 = vmatprep.subr.bf16.mxu0 0
    %238 = vmatpush1.bf16.msra.mxu0 0
    %239 = vmatprep.mubr.bf16.mxu0 0
    %240 = vmatmul.mubr.bf16.gmra.mrb[0].mxu0 %v192
    %v241 = vpop.f32.mrb[0].mxu0
    %v242 = vadd.f32 0.0, %v241
    %v243 = vpop.f32.mrb[0].mxu0
    %v244 = vadd.f32 0.0, %v243
    %v245 = vpop.f32.mrb[0].mxu0
    %v246 = vpop.f32.mrb[0].mxu0
    %247 = vdwg.mxu0
    %248 = vmatprep.subr.bf16.mxu0 %v205
    %249 = vmatpush1.bf16.msra.mxu0 %v202
    %250 = vmatprep.subr.bf16.mxu0 0
    %251 = vmatpush1.bf16.msra.mxu0 0
    %252 = vmatprep.subr.bf16.mxu0 0
    %253 = vmatpush1.bf16.msra.mxu0 0
    %254 = vmatprep.subr.bf16.mxu0 0
    %255 = vmatpush1.bf16.msra.mxu0 0
    %256 = vmatprep.subr.bf16.mxu0 0
    %257 = vmatpush1.bf16.msra.mxu0 0
    %258 = vmatprep.subr.bf16.mxu0 0
    %259 = vmatpush1.bf16.msra.mxu0 0
    %260 = vmatprep.subr.bf16.mxu0 0
    %261 = vmatpush1.bf16.msra.mxu0 0
    %262 = vmatprep.subr.bf16.mxu0 0
    %263 = vmatpush1.bf16.msra.mxu0 0
    %264 = vmatprep.subr.bf16.mxu0 0
    %265 = vmatpush1.bf16.msra.mxu0 0
    %266 = vmatprep.subr.bf16.mxu0 0
    %267 = vmatpush1.bf16.msra.mxu0 0
    %268 = vmatprep.subr.bf16.mxu0 0
    %269 = vmatpush1.bf16.msra.mxu0 0
    %270 = vmatprep.subr.bf16.mxu0 0
    %271 = vmatpush1.bf16.msra.mxu0 0
    %272 = vmatprep.subr.bf16.mxu0 0
    %273 = vmatpush1.bf16.msra.mxu0 0
    %274 = vmatprep.subr.bf16.mxu0 0
    %275 = vmatpush1.bf16.msra.mxu0 0
    %276 = vmatprep.subr.bf16.mxu0 0
    %277 = vmatpush1.bf16.msra.mxu0 0
    %278 = vmatprep.subr.bf16.mxu0 0
    %279 = vmatpush1.bf16.msra.mxu0 0
    %280 = vmatprep.mubr.bf16.mxu0 0
    %281 = vmatmul.mubr.bf16.gmra.mrb[0].mxu0 %v192
    %v282 = vpop.f32.mrb[0].mxu0
    %v283 = vadd.f32 0.0, %v282
    %v284 = vpop.f32.mrb[0].mxu0
    %v285 = vadd.f32 0.0, %v284
    %v286 = vpop.f32.mrb[0].mxu0
    %v287 = vpop.f32.mrb[0].mxu0
    %288 = vdwg.mxu0
    %v289 = vrot.slane %v242, 4
    %v290 = vadd.f32 %v242, %v289
    %v291 = vrot.slane %v290, 2
    %v292 = vadd.f32 %v290, %v291
    %v293 = vrot.slane %v292, 1
    %v294 = vadd.f32 %v292, %v293
    %v295 = vrot.slane %v244, 4
    %v296 = vadd.f32 %v244, %v295
    %v297 = vrot.slane %v296, 2
    %v298 = vadd.f32 %v296, %v297
    %v299 = vrot.slane %v298, 1
    %v300 = vadd.f32 %v298, %v299
    %v301 = vrot.slane %v283, 4
    %v302 = vadd.f32 %v283, %v301
    %v303 = vrot.slane %v302, 2
    %v304 = vadd.f32 %v302, %v303
    %v305 = vrot.slane %v304, 1
    %v306 = vadd.f32 %v304, %v305
    %v307 = vrot.slane %v285, 4
    %v308 = vadd.f32 %v285, %v307
    %v309 = vrot.slane %v308, 2
    %v310 = vadd.f32 %v308, %v309
    %v311 = vrot.slane %v310, 1
    %v312 = vadd.f32 %v310, %v311
    %v313 = vmul.f32 %v242, %v242
    %v314 = vmul.f32 %v244, %v244
    %v315 = vmul.f32 %v283, %v283
    %v316 = vmul.f32 %v285, %v285
    %v317 = vrot.slane %v313, 4
    %v318 = vadd.f32 %v313, %v317
    %v319 = vrot.slane %v318, 2
    %v320 = vadd.f32 %v318, %v319
    %v321 = vrot.slane %v320, 1
    %v322 = vadd.f32 %v320, %v321
    %v323 = vrot.slane %v314, 4
    %v324 = vadd.f32 %v314, %v323
    %v325 = vrot.slane %v324, 2
    %v326 = vadd.f32 %v324, %v325
    %v327 = vrot.slane %v326, 1
    %v328 = vadd.f32 %v326, %v327
    %v329 = vrot.slane %v315, 4
    %v330 = vadd.f32 %v315, %v329
    %v331 = vrot.slane %v330, 2
    %v332 = vadd.f32 %v330, %v331
    %v333 = vrot.slane %v332, 1
    %v334 = vadd.f32 %v332, %v333
    %v335 = vrot.slane %v316, 4
    %v336 = vadd.f32 %v316, %v335
    %v337 = vrot.slane %v336, 2
    %v338 = vadd.f32 %v336, %v337
    %v339 = vrot.slane %v338, 1
    %v340 = vadd.f32 %v338, %v339
    %vm341 = vcmask 1040384
    %v342 = vsel %vm341, %v294, %v322
    %v343 = vsel %vm341, %v300, %v328
    %v344 = vsel %vm341, %v306, %v334
    %v345 = vsel %vm341, %v312, %v340
    %v346 = vpack.c.bf16 %v342, %v342
    %v347 = vpack.c.bf16 %v343, %v343
    %v348 = vpack.c.bf16 %v344, %v344
    %v349 = vpack.c.bf16 %v345, %v345
    %v350 = vld [vmem:[%s3] sm:$0xf]
    %v351 = vld [vmem:[%s3 + $0x4] sm:$0xf]
    %v352 = vld [vmem:[%s3 + $0x8] sm:$0xf]
    %v353 = vld [vmem:[%s3 + $0xc] sm:$0xf]
    %v354 = vld [vmem:[%s3 + $0x10] sm:$0xf]
    %v355 = vld [vmem:[%s3 + $0x14] sm:$0xf]
    %v356 = vld [vmem:[%s3 + $0x18] sm:$0xf]
    %v357 = vld [vmem:[%s3 + $0x1c] sm:$0xf]
    %v358 = vld [vmem:[%s3 + $0x20] sm:$0xf]
    %v359 = vld [vmem:[%s3 + $0x24] sm:$0xf]
    %v360 = vld [vmem:[%s3 + $0x28] sm:$0xf]
    %v361 = vld [vmem:[%s3 + $0x2c] sm:$0xf]
    %v362 = vld [vmem:[%s3 + $0x30] sm:$0xf]
    %v363 = vld [vmem:[%s3 + $0x34] sm:$0xf]
    %v364 = vld [vmem:[%s3 + $0x38] sm:$0xf]
    %v365 = vld [vmem:[%s3 + $0x3c] sm:$0xf]
    %v366 = vld [vmem:[%s3 + $0x40] sm:$0xf]
    %v367 = vld [vmem:[%s3 + $0x44] sm:$0xf]
    %v368 = vld [vmem:[%s3 + $0x48] sm:$0xf]
    %v369 = vld [vmem:[%s3 + $0x4c] sm:$0xf]
    %v370 = vld [vmem:[%s3 + $0x50] sm:$0xf]
    %v371 = vld [vmem:[%s3 + $0x54] sm:$0xf]
    %v372 = vld [vmem:[%s3 + $0x58] sm:$0xf]
    %v373 = vld [vmem:[%s3 + $0x5c] sm:$0xf]
    %v374 = vld [vmem:[%s3 + $0x60] sm:$0xf]
    %v375 = vld [vmem:[%s3 + $0x64] sm:$0xf]
    %v376 = vld [vmem:[%s3 + $0x68] sm:$0xf]
    %v377 = vld [vmem:[%s3 + $0x6c] sm:$0xf]
    %v378 = vld [vmem:[%s3 + $0x70] sm:$0xf]
    %v379 = vld [vmem:[%s3 + $0x74] sm:$0xf]
    %v380 = vld [vmem:[%s3 + $0x78] sm:$0xf]
    %v381 = vld [vmem:[%s3 + $0x7c] sm:$0xf]
    %v382 = vld [vmem:[%s3 + $0x80] sm:$0xf]
    %v383 = vld [vmem:[%s3 + $0x84] sm:$0xf]
    %v384 = vld [vmem:[%s3 + $0x88] sm:$0xf]
    %v385 = vld [vmem:[%s3 + $0x8c] sm:$0xf]
    %v386 = vld [vmem:[%s3 + $0x90] sm:$0xf]
    %v387 = vld [vmem:[%s3 + $0x94] sm:$0xf]
    %v388 = vld [vmem:[%s3 + $0x98] sm:$0xf]
    %v389 = vld [vmem:[%s3 + $0x9c] sm:$0xf]
    %v390 = vld [vmem:[%s3 + $0xa0] sm:$0xf]
    %v391 = vld [vmem:[%s3 + $0xa4] sm:$0xf]
    %v392 = vld [vmem:[%s3 + $0xa8] sm:$0xf]
    %v393 = vld [vmem:[%s3 + $0xac] sm:$0xf]
    %v394 = vld [vmem:[%s3 + $0xb0] sm:$0xf]
    %v395 = vld [vmem:[%s3 + $0xb4] sm:$0xf]
    %v396 = vld [vmem:[%s3 + $0xb8] sm:$0xf]
    %v397 = vld [vmem:[%s3 + $0xbc] sm:$0xf]
    %v398 = vld [vmem:[%s3 + $0xc0] sm:$0xf]
    %v399 = vld [vmem:[%s3 + $0xc4] sm:$0xf]
    %v400 = vld [vmem:[%s3 + $0xc8] sm:$0xf]
    %v401 = vld [vmem:[%s3 + $0xcc] sm:$0xf]
    %v402 = vld [vmem:[%s3 + $0xd0] sm:$0xf]
    %v403 = vld [vmem:[%s3 + $0xd4] sm:$0xf]
    %v404 = vld [vmem:[%s3 + $0xd8] sm:$0xf]
    %v405 = vld [vmem:[%s3 + $0xdc] sm:$0xf]
    %v406 = vld [vmem:[%s3 + $0xe0] sm:$0xf]
    %v407 = vld [vmem:[%s3 + $0xe4] sm:$0xf]
    %v408 = vld [vmem:[%s3 + $0xe8] sm:$0xf]
    %v409 = vld [vmem:[%s3 + $0xec] sm:$0xf]
    %v410 = vld [vmem:[%s3 + $0xf0] sm:$0xf]
    %v411 = vld [vmem:[%s3 + $0xf4] sm:$0xf]
    %v412 = vld [vmem:[%s3 + $0xf8] sm:$0xf]
    %v413 = vld [vmem:[%s3 + $0xfc] sm:$0xf]
    %v478 = vunpack.c.l.b16 %v350
    %v479 = vunpack.c.l.b16 %v351
    %v480 = vunpack.c.l.b16 %v352
    %v481 = vunpack.c.l.b16 %v353
    %v482 = vunpack.c.l.b16 %v354
    %v483 = vunpack.c.l.b16 %v355
    %v484 = vunpack.c.l.b16 %v356
    %v485 = vunpack.c.l.b16 %v357
    %v486 = vunpack.c.l.b16 %v358
    %v487 = vunpack.c.l.b16 %v359
    %v488 = vunpack.c.l.b16 %v360
    %v489 = vunpack.c.l.b16 %v361
    %v490 = vunpack.c.l.b16 %v362
    %v491 = vunpack.c.l.b16 %v363
    %v492 = vunpack.c.l.b16 %v364
    %v493 = vunpack.c.l.b16 %v365
    %v494 = vunpack.c.l.b16 %v366
    %v495 = vunpack.c.l.b16 %v367
    %v496 = vunpack.c.l.b16 %v368
    %v497 = vunpack.c.l.b16 %v369
    %v498 = vunpack.c.l.b16 %v370
    %v499 = vunpack.c.l.b16 %v371
    %v500 = vunpack.c.l.b16 %v372
    %v501 = vunpack.c.l.b16 %v373
    %v502 = vunpack.c.l.b16 %v374
    %v503 = vunpack.c.l.b16 %v375
    %v504 = vunpack.c.l.b16 %v376
    %v505 = vunpack.c.l.b16 %v377
    %v506 = vunpack.c.l.b16 %v378
    %v507 = vunpack.c.l.b16 %v379
    %v508 = vunpack.c.l.b16 %v380
    %v509 = vunpack.c.l.b16 %v381
    %v510 = vunpack.c.l.b16 %v382
    %v511 = vunpack.c.l.b16 %v383
    %v512 = vunpack.c.l.b16 %v384
    %v513 = vunpack.c.l.b16 %v385
    %v514 = vunpack.c.l.b16 %v386
    %v515 = vunpack.c.l.b16 %v387
    %v516 = vunpack.c.l.b16 %v388
    %v517 = vunpack.c.l.b16 %v389
    %v518 = vunpack.c.l.b16 %v390
    %v519 = vunpack.c.l.b16 %v391
    %v520 = vunpack.c.l.b16 %v392
    %v521 = vunpack.c.l.b16 %v393
    %v522 = vunpack.c.l.b16 %v394
    %v523 = vunpack.c.l.b16 %v395
    %v524 = vunpack.c.l.b16 %v396
    %v525 = vunpack.c.l.b16 %v397
    %v526 = vunpack.c.l.b16 %v398
    %v527 = vunpack.c.l.b16 %v399
    %v528 = vunpack.c.l.b16 %v400
    %v529 = vunpack.c.l.b16 %v401
    %v530 = vunpack.c.l.b16 %v402
    %v531 = vunpack.c.l.b16 %v403
    %v532 = vunpack.c.l.b16 %v404
    %v533 = vunpack.c.l.b16 %v405
    %v534 = vunpack.c.l.b16 %v406
    %v535 = vunpack.c.l.b16 %v407
    %v536 = vunpack.c.l.b16 %v408
    %v537 = vunpack.c.l.b16 %v409
    %v538 = vunpack.c.l.b16 %v410
    %v539 = vunpack.c.l.b16 %v411
    %v540 = vunpack.c.l.b16 %v412
    %v541 = vunpack.c.l.b16 %v413
    %v542 = vpack.c.b16 %v479, %v478
    %v543 = vpack.c.b16 %v481, %v480
    %v544 = vpack.c.b16 %v483, %v482
    %v545 = vpack.c.b16 %v485, %v484
    %v546 = vpack.c.b16 %v487, %v486
    %v547 = vpack.c.b16 %v489, %v488
    %v548 = vpack.c.b16 %v491, %v490
    %v549 = vpack.c.b16 %v493, %v492
    %v550 = vpack.c.b16 %v495, %v494
    %v551 = vpack.c.b16 %v497, %v496
    %v552 = vpack.c.b16 %v499, %v498
    %v553 = vpack.c.b16 %v501, %v500
    %v554 = vpack.c.b16 %v503, %v502
    %v555 = vpack.c.b16 %v505, %v504
    %v556 = vpack.c.b16 %v507, %v506
    %v557 = vpack.c.b16 %v509, %v508
    %v558 = vpack.c.b16 %v511, %v510
    %v559 = vpack.c.b16 %v513, %v512
    %v560 = vpack.c.b16 %v515, %v514
    %v561 = vpack.c.b16 %v517, %v516
    %v562 = vpack.c.b16 %v519, %v518
    %v563 = vpack.c.b16 %v521, %v520
    %v564 = vpack.c.b16 %v523, %v522
    %v565 = vpack.c.b16 %v525, %v524
    %v566 = vpack.c.b16 %v527, %v526
    %v567 = vpack.c.b16 %v529, %v528
    %v568 = vpack.c.b16 %v531, %v530
    %v569 = vpack.c.b16 %v533, %v532
    %v570 = vpack.c.b16 %v535, %v534
    %v571 = vpack.c.b16 %v537, %v536
    %v572 = vpack.c.b16 %v539, %v538
    %v573 = vpack.c.b16 %v541, %v540
    %606 = vmatprep.subr.bf16.mxu0 0
    %607 = vmatpush1.bf16.msra.mxu0 %v542
    %608 = vmatprep.subr.bf16.mxu0 0
    %609 = vmatpush1.bf16.msra.mxu0 %v543
    %610 = vmatprep.subr.bf16.mxu0 0
    %611 = vmatpush1.bf16.msra.mxu0 %v544
    %612 = vmatprep.subr.bf16.mxu0 0
    %613 = vmatpush1.bf16.msra.mxu0 %v545
    %614 = vmatprep.subr.bf16.mxu0 0
    %615 = vmatpush1.bf16.msra.mxu0 %v546
    %616 = vmatprep.subr.bf16.mxu0 0
    %617 = vmatpush1.bf16.msra.mxu0 %v547
    %618 = vmatprep.subr.bf16.mxu0 0
    %619 = vmatpush1.bf16.msra.mxu0 %v548
    %620 = vmatprep.subr.bf16.mxu0 0
    %621 = vmatpush1.bf16.msra.mxu0 %v549
    %622 = vmatprep.subr.bf16.mxu0 0
    %623 = vmatpush1.bf16.msra.mxu0 %v550
    %624 = vmatprep.subr.bf16.mxu0 0
    %625 = vmatpush1.bf16.msra.mxu0 %v551
    %626 = vmatprep.subr.bf16.mxu0 0
    %627 = vmatpush1.bf16.msra.mxu0 %v552
    %628 = vmatprep.subr.bf16.mxu0 0
    %629 = vmatpush1.bf16.msra.mxu0 %v553
    %630 = vmatprep.subr.bf16.mxu0 0
    %631 = vmatpush1.bf16.msra.mxu0 %v554
    %632 = vmatprep.subr.bf16.mxu0 0
    %633 = vmatpush1.bf16.msra.mxu0 %v555
    %634 = vmatprep.subr.bf16.mxu0 0
    %635 = vmatpush1.bf16.msra.mxu0 %v556
    %636 = vmatprep.subr.bf16.mxu0 0
    %637 = vmatpush1.bf16.msra.mxu0 %v557
    %638 = vmatprep.mubr.bf16.mxu0 %v347
    %639 = vmatmul.mubr.bf16.gmra.mrb[0].mxu0 %v346
    %v640 = vpop.f32.mrb[0].mxu0
    %v641 = vadd.f32 0.0, %v640
    %v642 = vpop.f32.mrb[0].mxu0
    %v643 = vpop.f32.mrb[0].mxu0
    %v644 = vpop.f32.mrb[0].mxu0
    %645 = vdwg.mxu0
    %646 = vmatprep.subr.bf16.mxu0 0
    %647 = vmatpush1.bf16.msra.mxu0 %v558
    %648 = vmatprep.subr.bf16.mxu0 0
    %649 = vmatpush1.bf16.msra.mxu0 %v559
    %650 = vmatprep.subr.bf16.mxu0 0
    %651 = vmatpush1.bf16.msra.mxu0 %v560
    %652 = vmatprep.subr.bf16.mxu0 0
    %653 = vmatpush1.bf16.msra.mxu0 %v561
    %654 = vmatprep.subr.bf16.mxu0 0
    %655 = vmatpush1.bf16.msra.mxu0 %v562
    %656 = vmatprep.subr.bf16.mxu0 0
    %657 = vmatpush1.bf16.msra.mxu0 %v563
    %658 = vmatprep.subr.bf16.mxu0 0
    %659 = vmatpush1.bf16.msra.mxu0 %v564
    %660 = vmatprep.subr.bf16.mxu0 0
    %661 = vmatpush1.bf16.msra.mxu0 %v565
    %662 = vmatprep.subr.bf16.mxu0 0
    %663 = vmatpush1.bf16.msra.mxu0 %v566
    %664 = vmatprep.subr.bf16.mxu0 0
    %665 = vmatpush1.bf16.msra.mxu0 %v567
    %666 = vmatprep.subr.bf16.mxu0 0
    %667 = vmatpush1.bf16.msra.mxu0 %v568
    %668 = vmatprep.subr.bf16.mxu0 0
    %669 = vmatpush1.bf16.msra.mxu0 %v569
    %670 = vmatprep.subr.bf16.mxu0 0
    %671 = vmatpush1.bf16.msra.mxu0 %v570
    %672 = vmatprep.subr.bf16.mxu0 0
    %673 = vmatpush1.bf16.msra.mxu0 %v571
    %674 = vmatprep.subr.bf16.mxu0 0
    %675 = vmatpush1.bf16.msra.mxu0 %v572
    %676 = vmatprep.subr.bf16.mxu0 0
    %677 = vmatpush1.bf16.msra.mxu0 %v573
    %678 = vmatprep.mubr.bf16.mxu0 %v349
    %679 = vmatmul.mubr.bf16.gmra.mrb[0].mxu0 %v348
    %v680 = vpop.f32.mrb[0].mxu0
    %v681 = vadd.f32 %v641, %v680
    %v682 = vpop.f32.mrb[0].mxu0
    %v683 = vpop.f32.mrb[0].mxu0
    %v684 = vpop.f32.mrb[0].mxu0
    %685 = vdwg.mxu0
    %v686 = vmul.f32 %v681, 0.0078125
    %v687 = vmul.f32 %v686, %v686
    %v689 = vrot.slane %v687, 7
    %v691 = vsub.f32 %v686, %v689
    %v692 = vadd.f32 %v691, 1e-05
    %v693 = vrsqrt.pop %v692
    %v694 = vld [vmem:[#allocation9] sm:$0x1]
    %v696 = vrot.slane %v693, 1
    %v698 = vmul.f32 %v694, %v696
    %v699 = vld [vmem:[#allocation9 + $0x1] sm:$0x1]
    %v700 = vmul.f32 %v686, %v698
    %v701 = vsub.f32 %v699, %v700
    %v703 = vrot.slane %v701, 7
    %v705 = vsel %vm341, %v698, %v703
    %v706 = vpack.c.bf16 %v705, %v705
    %v707 = vld [vmem:[#allocation10] sm:$0xff]
    %v708 = vld [vmem:[#allocation10 + $0x8] sm:$0xff]
    %v709 = vld [vmem:[#allocation10 + $0x10] sm:$0xff]
    %v710 = vld [vmem:[#allocation10 + $0x18] sm:$0xff]
    %v711 = vld [vmem:[#allocation10 + $0x20] sm:$0xff]
    %v712 = vld [vmem:[#allocation10 + $0x28] sm:$0xff]
    %v713 = vld [vmem:[#allocation10 + $0x30] sm:$0xff]
    %v714 = vld [vmem:[#allocation10 + $0x38] sm:$0xff]
    %v723 = vunpack.c.l.b16 %v707
    %v724 = vunpack.c.h.b16 %v707
    %v725 = vunpack.c.l.b16 %v708
    %v726 = vunpack.c.h.b16 %v708
    %v727 = vunpack.c.l.b16 %v709
    %v728 = vunpack.c.h.b16 %v709
    %v729 = vunpack.c.l.b16 %v710
    %v730 = vunpack.c.h.b16 %v710
    %v731 = vunpack.c.l.b16 %v711
    %v732 = vunpack.c.h.b16 %v711
    %v733 = vunpack.c.l.b16 %v712
    %v734 = vunpack.c.h.b16 %v712
    %v735 = vunpack.c.l.b16 %v713
    %v736 = vunpack.c.h.b16 %v713
    %v737 = vunpack.c.l.b16 %v714
    %v738 = vunpack.c.h.b16 %v714
    %v739 = vpack.c.b16 %v727, %v723
    %v740 = vpack.c.b16 %v728, %v724
    %v741 = vpack.c.b16 %v729, %v725
    %v742 = vpack.c.b16 %v730, %v726
    %v743 = vpack.c.b16 %v735, %v731
    %v744 = vpack.c.b16 %v736, %v732
    %v745 = vpack.c.b16 %v737, %v733
    %v746 = vpack.c.b16 %v738, %v734
    %vm755 = vcmask 261120
    %v757 = vsel %vm755, %v706, 0
    %759 = vmatprep.subr.bf16.mxu0 %v740
    %760 = vmatpush1.bf16.msra.mxu0 %v739
    %761 = vmatprep.subr.bf16.mxu0 %v744
    %762 = vmatpush1.bf16.msra.mxu0 %v743
    %763 = vmatprep.subr.bf16.mxu0 0
    %764 = vmatpush1.bf16.msra.mxu0 0
    %765 = vmatprep.subr.bf16.mxu0 0
    %766 = vmatpush1.bf16.msra.mxu0 0
    %767 = vmatprep.subr.bf16.mxu0 0
    %768 = vmatpush1.bf16.msra.mxu0 0
    %769 = vmatprep.subr.bf16.mxu0 0
    %770 = vmatpush1.bf16.msra.mxu0 0
    %771 = vmatprep.subr.bf16.mxu0 0
    %772 = vmatpush1.bf16.msra.mxu0 0
    %773 = vmatprep.subr.bf16.mxu0 0
    %774 = vmatpush1.bf16.msra.mxu0 0
    %775 = vmatprep.subr.bf16.mxu0 0
    %776 = vmatpush1.bf16.msra.mxu0 0
    %777 = vmatprep.subr.bf16.mxu0 0
    %778 = vmatpush1.bf16.msra.mxu0 0
    %779 = vmatprep.subr.bf16.mxu0 0
    %780 = vmatpush1.bf16.msra.mxu0 0
    %781 = vmatprep.subr.bf16.mxu0 0
    %782 = vmatpush1.bf16.msra.mxu0 0
    %783 = vmatprep.subr.bf16.mxu0 0
    %784 = vmatpush1.bf16.msra.mxu0 0
    %785 = vmatprep.subr.bf16.mxu0 0
    %786 = vmatpush1.bf16.msra.mxu0 0
    %787 = vmatprep.subr.bf16.mxu0 0
    %788 = vmatpush1.bf16.msra.mxu0 0
    %789 = vmatprep.subr.bf16.mxu0 0
    %790 = vmatpush1.bf16.msra.mxu0 0
    %791 = vmatprep.mubr.bf16.mxu0 0
    %792 = vmatmul.mubr.bf16.gmra.mrb[0].mxu0 %v757
    %v793 = vpop.f32.mrb[0].mxu0
    %v794 = vadd.f32 0.0, %v793
    %v795 = vpop.f32.mrb[0].mxu0
    %v796 = vadd.f32 0.0, %v795
    %v797 = vpop.f32.mrb[0].mxu0
    %v798 = vpop.f32.mrb[0].mxu0
    %799 = vdwg.mxu0
    %800 = vmatprep.subr.bf16.mxu0 %v742
    %801 = vmatpush1.bf16.msra.mxu0 %v741
    %802 = vmatprep.subr.bf16.mxu0 %v746
    %803 = vmatpush1.bf16.msra.mxu0 %v745
    %804 = vmatprep.subr.bf16.mxu0 0
    %805 = vmatpush1.bf16.msra.mxu0 0
    %806 = vmatprep.subr.bf16.mxu0 0
    %807 = vmatpush1.bf16.msra.mxu0 0
    %808 = vmatprep.subr.bf16.mxu0 0
    %809 = vmatpush1.bf16.msra.mxu0 0
    %810 = vmatprep.subr.bf16.mxu0 0
    %811 = vmatpush1.bf16.msra.mxu0 0
    %812 = vmatprep.subr.bf16.mxu0 0
    %813 = vmatpush1.bf16.msra.mxu0 0
    %814 = vmatprep.subr.bf16.mxu0 0
    %815 = vmatpush1.bf16.msra.mxu0 0
    %816 = vmatprep.subr.bf16.mxu0 0
    %817 = vmatpush1.bf16.msra.mxu0 0
    %818 = vmatprep.subr.bf16.mxu0 0
    %819 = vmatpush1.bf16.msra.mxu0 0
    %820 = vmatprep.subr.bf16.mxu0 0
    %821 = vmatpush1.bf16.msra.mxu0 0
    %822 = vmatprep.subr.bf16.mxu0 0
    %823 = vmatpush1.bf16.msra.mxu0 0
    %824 = vmatprep.subr.bf16.mxu0 0
    %825 = vmatpush1.bf16.msra.mxu0 0
    %826 = vmatprep.subr.bf16.mxu0 0
    %827 = vmatpush1.bf16.msra.mxu0 0
    %828 = vmatprep.subr.bf16.mxu0 0
    %829 = vmatpush1.bf16.msra.mxu0 0
    %830 = vmatprep.subr.bf16.mxu0 0
    %831 = vmatpush1.bf16.msra.mxu0 0
    %832 = vmatprep.mubr.bf16.mxu0 0
    %833 = vmatmul.mubr.bf16.gmra.mrb[0].mxu0 %v757
    %v834 = vpop.f32.mrb[0].mxu0
    %v835 = vadd.f32 0.0, %v834
    %v836 = vpop.f32.mrb[0].mxu0
    %v837 = vadd.f32 0.0, %v836
    %v838 = vpop.f32.mrb[0].mxu0
    %v839 = vpop.f32.mrb[0].mxu0
    %840 = vdwg.mxu0
    %v841 = vlaneseq
    %v842 = vshrl.u32 %v841, 7
    %v843 = vsub.s32 0, %v842
    %v844 = vrot.slane %v794, %v843
    %v845 = vlaneseq
    %v846 = vshrl.u32 %v845, 7
    %v847 = vsub.s32 0, %v846
    %v848 = vrot.slane %v796, %v847
    %v849 = vlaneseq
    %v850 = vshrl.u32 %v849, 7
    %v851 = vsub.s32 0, %v850
    %v852 = vrot.slane %v835, %v851
    %v853 = vlaneseq
    %v854 = vshrl.u32 %v853, 7
    %v855 = vsub.s32 0, %v854
    %v856 = vrot.slane %v837, %v855
    %v857 = vmul.f32 %v242, %v844
    %v858 = vmul.f32 %v244, %v848
    %v859 = vmul.f32 %v283, %v852
    %v860 = vmul.f32 %v285, %v856
    %v861 = vlaneseq
    %v862 = vshrl.u32 %v861, 7
    %v863 = vsub.s32 1, %v862
    %v864 = vrot.slane %v794, %v863
    %v865 = vlaneseq
    %v866 = vshrl.u32 %v865, 7
    %v867 = vsub.s32 1, %v866
    %v868 = vrot.slane %v796, %v867
    %v869 = vlaneseq
    %v870 = vshrl.u32 %v869, 7
    %v871 = vsub.s32 1, %v870
    %v872 = vrot.slane %v835, %v871
    %v873 = vlaneseq
    %v874 = vshrl.u32 %v873, 7
    %v875 = vsub.s32 1, %v874
    %v876 = vrot.slane %v837, %v875
    %v877 = vadd.f32 %v857, %v864
    %v878 = vadd.f32 %v858, %v868
    %v879 = vadd.f32 %v859, %v872
    %v880 = vadd.f32 %v860, %v876
    %v881 = vmax.f32 %v877, 0.0
    %v882 = vmax.f32 %v878, 0.0
    %v883 = vmax.f32 %v879, 0.0
    %v884 = vmax.f32 %v880, 0.0
    %s885 = smul.u32 4, 64
    %s886 = smul.u32 %s885, 8
    %s887 = sshll.u32 %s886, 4
    %888 = dma.done [#allocation4], %s887
    %v889 = vpack.c.bf16 %v881, %v881
    %v890 = vpack.c.bf16 %v882, %v882
    %v891 = vpack.c.bf16 %v883, %v883
    %v892 = vpack.c.bf16 %v884, %v884
    %v893 = vld [vmem:[#allocation2] sm:$0xff]
    %v894 = vld [vmem:[#allocation2 + $0x8] sm:$0xff]
    %v895 = vld [vmem:[#allocation2 + $0x10] sm:$0xff]
    %v896 = vld [vmem:[#allocation2 + $0x18] sm:$0xff]
    %v897 = vld [vmem:[#allocation2 + $0x20] sm:$0xff]
    %v898 = vld [vmem:[#allocation2 + $0x28] sm:$0xff]
    %v899 = vld [vmem:[#allocation2 + $0x30] sm:$0xff]
    %v900 = vld [vmem:[#allocation2 + $0x38] sm:$0xff]
    %v901 = vld [vmem:[#allocation2 + $0x40] sm:$0xff]
    %v902 = vld [vmem:[#allocation2 + $0x48] sm:$0xff]
    %v903 = vld [vmem:[#allocation2 + $0x50] sm:$0xff]
    %v904 = vld [vmem:[#allocation2 + $0x58] sm:$0xff]
    %v905 = vld [vmem:[#allocation2 + $0x60] sm:$0xff]
    %v906 = vld [vmem:[#allocation2 + $0x68] sm:$0xff]
    %v907 = vld [vmem:[#allocation2 + $0x70] sm:$0xff]
    %v908 = vld [vmem:[#allocation2 + $0x78] sm:$0xff]
    %v909 = vld [vmem:[#allocation2 + $0x80] sm:$0xff]
    %v910 = vld [vmem:[#allocation2 + $0x88] sm:$0xff]
    %v911 = vld [vmem:[#allocation2 + $0x90] sm:$0xff]
    %v912 = vld [vmem:[#allocation2 + $0x98] sm:$0xff]
    %v913 = vld [vmem:[#allocation2 + $0xa0] sm:$0xff]
    %v914 = vld [vmem:[#allocation2 + $0xa8] sm:$0xff]
    %v915 = vld [vmem:[#allocation2 + $0xb0] sm:$0xff]
    %v916 = vld [vmem:[#allocation2 + $0xb8] sm:$0xff]
    %v917 = vld [vmem:[#allocation2 + $0xc0] sm:$0xff]
    %v918 = vld [vmem:[#allocation2 + $0xc8] sm:$0xff]
    %v919 = vld [vmem:[#allocation2 + $0xd0] sm:$0xff]
    %v920 = vld [vmem:[#allocation2 + $0xd8] sm:$0xff]
    %v921 = vld [vmem:[#allocation2 + $0xe0] sm:$0xff]
    %v922 = vld [vmem:[#allocation2 + $0xe8] sm:$0xff]
    %v923 = vld [vmem:[#allocation2 + $0xf0] sm:$0xff]
    %v924 = vld [vmem:[#allocation2 + $0xf8] sm:$0xff]
    %v925 = vld [vmem:[#allocation2 + $0x100] sm:$0xff]
    %v926 = vld [vmem:[#allocation2 + $0x108] sm:$0xff]
    %v927 = vld [vmem:[#allocation2 + $0x110] sm:$0xff]
    %v928 = vld [vmem:[#allocation2 + $0x118] sm:$0xff]
    %v929 = vld [vmem:[#allocation2 + $0x120] sm:$0xff]
    %v930 = vld [vmem:[#allocation2 + $0x128] sm:$0xff]
    %v931 = vld [vmem:[#allocation2 + $0x130] sm:$0xff]
    %v932 = vld [vmem:[#allocation2 + $0x138] sm:$0xff]
    %v933 = vld [vmem:[#allocation2 + $0x140] sm:$0xff]
    %v934 = vld [vmem:[#allocation2 + $0x148] sm:$0xff]
    %v935 = vld [vmem:[#allocation2 + $0x150] sm:$0xff]
    %v936 = vld [vmem:[#allocation2 + $0x158] sm:$0xff]
    %v937 = vld [vmem:[#allocation2 + $0x160] sm:$0xff]
    %v938 = vld [vmem:[#allocation2 + $0x168] sm:$0xff]
    %v939 = vld [vmem:[#allocation2 + $0x170] sm:$0xff]
    %v940 = vld [vmem:[#allocation2 + $0x178] sm:$0xff]
    %v941 = vld [vmem:[#allocation2 + $0x180] sm:$0xff]
    %v942 = vld [vmem:[#allocation2 + $0x188] sm:$0xff]
    %v943 = vld [vmem:[#allocation2 + $0x190] sm:$0xff]
    %v944 = vld [vmem:[#allocation2 + $0x198] sm:$0xff]
    %v945 = vld [vmem:[#allocation2 + $0x1a0] sm:$0xff]
    %v946 = vld [vmem:[#allocation2 + $0x1a8] sm:$0xff]
    %v947 = vld [vmem:[#allocation2 + $0x1b0] sm:$0xff]
    %v948 = vld [vmem:[#allocation2 + $0x1b8] sm:$0xff]
    %v949 = vld [vmem:[#allocation2 + $0x1c0] sm:$0xff]
    %v950 = vld [vmem:[#allocation2 + $0x1c8] sm:$0xff]
    %v951 = vld [vmem:[#allocation2 + $0x1d0] sm:$0xff]
    %v952 = vld [vmem:[#allocation2 + $0x1d8] sm:$0xff]
    %v953 = vld [vmem:[#allocation2 + $0x1e0] sm:$0xff]
    %v954 = vld [vmem:[#allocation2 + $0x1e8] sm:$0xff]
    %v955 = vld [vmem:[#allocation2 + $0x1f0] sm:$0xff]
    %v956 = vld [vmem:[#allocation2 + $0x1f8] sm:$0xff]
    %v957 = vld [vmem:[#allocation2 + $0x200] sm:$0xff]
    %v958 = vld [vmem:[#allocation2 + $0x208] sm:$0xff]
    %v959 = vld [vmem:[#allocation2 + $0x210] sm:$0xff]
    %v960 = vld [vmem:[#allocation2 + $0x218] sm:$0xff]
    %v961 = vld [vmem:[#allocation2 + $0x220] sm:$0xff]
    %v962 = vld [vmem:[#allocation2 + $0x228] sm:$0xff]
    %v963 = vld [vmem:[#allocation2 + $0x230] sm:$0xff]
    %v964 = vld [vmem:[#allocation2 + $0x238] sm:$0xff]
    %v965 = vld [vmem:[#allocation2 + $0x240] sm:$0xff]
    %v966 = vld [vmem:[#allocation2 + $0x248] sm:$0xff]
    %v967 = vld [vmem:[#allocation2 + $0x250] sm:$0xff]
    %v968 = vld [vmem:[#allocation2 + $0x258] sm:$0xff]
    %v969 = vld [vmem:[#allocation2 + $0x260] sm:$0xff]
    %v970 = vld [vmem:[#allocation2 + $0x268] sm:$0xff]
    %v971 = vld [vmem:[#allocation2 + $0x270] sm:$0xff]
    %v972 = vld [vmem:[#allocation2 + $0x278] sm:$0xff]
    %v973 = vld [vmem:[#allocation2 + $0x280] sm:$0xff]
    %v974 = vld [vmem:[#allocation2 + $0x288] sm:$0xff]
    %v975 = vld [vmem:[#allocation2 + $0x290] sm:$0xff]
    %v976 = vld [vmem:[#allocation2 + $0x298] sm:$0xff]
    %v977 = vld [vmem:[#allocation2 + $0x2a0] sm:$0xff]
    %v978 = vld [vmem:[#allocation2 + $0x2a8] sm:$0xff]
    %v979 = vld [vmem:[#allocation2 + $0x2b0] sm:$0xff]
    %v980 = vld [vmem:[#allocation2 + $0x2b8] sm:$0xff]
    %v981 = vld [vmem:[#allocation2 + $0x2c0] sm:$0xff]
    %v982 = vld [vmem:[#allocation2 + $0x2c8] sm:$0xff]
    %v983 = vld [vmem:[#allocation2 + $0x2d0] sm:$0xff]
    %v984 = vld [vmem:[#allocation2 + $0x2d8] sm:$0xff]
    %v985 = vld [vmem:[#allocation2 + $0x2e0] sm:$0xff]
    %v986 = vld [vmem:[#allocation2 + $0x2e8] sm:$0xff]
    %v987 = vld [vmem:[#allocation2 + $0x2f0] sm:$0xff]
    %v988 = vld [vmem:[#allocation2 + $0x2f8] sm:$0xff]
    %v989 = vld [vmem:[#allocation2 + $0x300] sm:$0xff]
    %v990 = vld [vmem:[#allocation2 + $0x308] sm:$0xff]
    %v991 = vld [vmem:[#allocation2 + $0x310] sm:$0xff]
    %v992 = vld [vmem:[#allocation2 + $0x318] sm:$0xff]
    %v993 = vld [vmem:[#allocation2 + $0x320] sm:$0xff]
    %v994 = vld [vmem:[#allocation2 + $0x328] sm:$0xff]
    %v995 = vld [vmem:[#allocation2 + $0x330] sm:$0xff]
    %v996 = vld [vmem:[#allocation2 + $0x338] sm:$0xff]
    %v997 = vld [vmem:[#allocation2 + $0x340] sm:$0xff]
    %v998 = vld [vmem:[#allocation2 + $0x348] sm:$0xff]
    %v999 = vld [vmem:[#allocation2 + $0x350] sm:$0xff]
    %v1000 = vld [vmem:[#allocation2 + $0x358] sm:$0xff]
    %v1001 = vld [vmem:[#allocation2 + $0x360] sm:$0xff]
    %v1002 = vld [vmem:[#allocation2 + $0x368] sm:$0xff]
    %v1003 = vld [vmem:[#allocation2 + $0x370] sm:$0xff]
    %v1004 = vld [vmem:[#allocation2 + $0x378] sm:$0xff]
    %v1005 = vld [vmem:[#allocation2 + $0x380] sm:$0xff]
    %v1006 = vld [vmem:[#allocation2 + $0x388] sm:$0xff]
    %v1007 = vld [vmem:[#allocation2 + $0x390] sm:$0xff]
    %v1008 = vld [vmem:[#allocation2 + $0x398] sm:$0xff]
    %v1009 = vld [vmem:[#allocation2 + $0x3a0] sm:$0xff]
    %v1010 = vld [vmem:[#allocation2 + $0x3a8] sm:$0xff]
    %v1011 = vld [vmem:[#allocation2 + $0x3b0] sm:$0xff]
    %v1012 = vld [vmem:[#allocation2 + $0x3b8] sm:$0xff]
    %v1013 = vld [vmem:[#allocation2 + $0x3c0] sm:$0xff]
    %v1014 = vld [vmem:[#allocation2 + $0x3c8] sm:$0xff]
    %v1015 = vld [vmem:[#allocation2 + $0x3d0] sm:$0xff]
    %v1016 = vld [vmem:[#allocation2 + $0x3d8] sm:$0xff]
    %v1017 = vld [vmem:[#allocation2 + $0x3e0] sm:$0xff]
    %v1018 = vld [vmem:[#allocation2 + $0x3e8] sm:$0xff]
    %v1019 = vld [vmem:[#allocation2 + $0x3f0] sm:$0xff]
    %v1020 = vld [vmem:[#allocation2 + $0x3f8] sm:$0xff]
    %v1021 = vld [vmem:[#allocation2 + $0x400] sm:$0xff]
    %v1022 = vld [vmem:[#allocation2 + $0x408] sm:$0xff]
    %v1023 = vld [vmem:[#allocation2 + $0x410] sm:$0xff]
    %v1024 = vld [vmem:[#allocation2 + $0x418] sm:$0xff]
    %v1025 = vld [vmem:[#allocation2 + $0x420] sm:$0xff]
    %v1026 = vld [vmem:[#allocation2 + $0x428] sm:$0xff]
    %v1027 = vld [vmem:[#allocation2 + $0x430] sm:$0xff]
    %v1028 = vld [vmem:[#allocation2 + $0x438] sm:$0xff]
    %v1029 = vld [vmem:[#allocation2 + $0x440] sm:$0xff]
    %v1030 = vld [vmem:[#allocation2 + $0x448] sm:$0xff]
    %v1031 = vld [vmem:[#allocation2 + $0x450] sm:$0xff]
    %v1032 = vld [vmem:[#allocation2 + $0x458] sm:$0xff]
    %v1033 = vld [vmem:[#allocation2 + $0x460] sm:$0xff]
    %v1034 = vld [vmem:[#allocation2 + $0x468] sm:$0xff]
    %v1035 = vld [vmem:[#allocation2 + $0x470] sm:$0xff]
    %v1036 = vld [vmem:[#allocation2 + $0x478] sm:$0xff]
    %v1037 = vld [vmem:[#allocation2 + $0x480] sm:$0xff]
    %v1038 = vld [vmem:[#allocation2 + $0x488] sm:$0xff]
    %v1039 = vld [vmem:[#allocation2 + $0x490] sm:$0xff]
    %v1040 = vld [vmem:[#allocation2 + $0x498] sm:$0xff]
    %v1041 = vld [vmem:[#allocation2 + $0x4a0] sm:$0xff]
    %v1042 = vld [vmem:[#allocation2 + $0x4a8] sm:$0xff]
    %v1043 = vld [vmem:[#allocation2 + $0x4b0] sm:$0xff]
    %v1044 = vld [vmem:[#allocation2 + $0x4b8] sm:$0xff]
    %v1045 = vld [vmem:[#allocation2 + $0x4c0] sm:$0xff]
    %v1046 = vld [vmem:[#allocation2 + $0x4c8] sm:$0xff]
    %v1047 = vld [vmem:[#allocation2 + $0x4d0] sm:$0xff]
    %v1048 = vld [vmem:[#allocation2 + $0x4d8] sm:$0xff]
    %v1049 = vld [vmem:[#allocation2 + $0x4e0] sm:$0xff]
    %v1050 = vld [vmem:[#allocation2 + $0x4e8] sm:$0xff]
    %v1051 = vld [vmem:[#allocation2 + $0x4f0] sm:$0xff]
    %v1052 = vld [vmem:[#allocation2 + $0x4f8] sm:$0xff]
    %v1053 = vld [vmem:[#allocation2 + $0x500] sm:$0xff]
    %v1054 = vld [vmem:[#allocation2 + $0x508] sm:$0xff]
    %v1055 = vld [vmem:[#allocation2 + $0x510] sm:$0xff]
    %v1056 = vld [vmem:[#allocation2 + $0x518] sm:$0xff]
    %v1057 = vld [vmem:[#allocation2 + $0x520] sm:$0xff]
    %v1058 = vld [vmem:[#allocation2 + $0x528] sm:$0xff]
    %v1059 = vld [vmem:[#allocation2 + $0x530] sm:$0xff]
    %v1060 = vld [vmem:[#allocation2 + $0x538] sm:$0xff]
    %v1061 = vld [vmem:[#allocation2 + $0x540] sm:$0xff]
    %v1062 = vld [vmem:[#allocation2 + $0x548] sm:$0xff]
    %v1063 = vld [vmem:[#allocation2 + $0x550] sm:$0xff]
    %v1064 = vld [vmem:[#allocation2 + $0x558] sm:$0xff]
    %v1065 = vld [vmem:[#allocation2 + $0x560] sm:$0xff]
    %v1066 = vld [vmem:[#allocation2 + $0x568] sm:$0xff]
    %v1067 = vld [vmem:[#allocation2 + $0x570] sm:$0xff]
    %v1068 = vld [vmem:[#allocation2 + $0x578] sm:$0xff]
    %v1069 = vld [vmem:[#allocation2 + $0x580] sm:$0xff]
    %v1070 = vld [vmem:[#allocation2 + $0x588] sm:$0xff]
    %v1071 = vld [vmem:[#allocation2 + $0x590] sm:$0xff]
    %v1072 = vld [vmem:[#allocation2 + $0x598] sm:$0xff]
    %v1073 = vld [vmem:[#allocation2 + $0x5a0] sm:$0xff]
    %v1074 = vld [vmem:[#allocation2 + $0x5a8] sm:$0xff]
    %v1075 = vld [vmem:[#allocation2 + $0x5b0] sm:$0xff]
    %v1076 = vld [vmem:[#allocation2 + $0x5b8] sm:$0xff]
    %v1077 = vld [vmem:[#allocation2 + $0x5c0] sm:$0xff]
    %v1078 = vld [vmem:[#allocation2 + $0x5c8] sm:$0xff]
    %v1079 = vld [vmem:[#allocation2 + $0x5d0] sm:$0xff]
    %v1080 = vld [vmem:[#allocation2 + $0x5d8] sm:$0xff]
    %v1081 = vld [vmem:[#allocation2 + $0x5e0] sm:$0xff]
    %v1082 = vld [vmem:[#allocation2 + $0x5e8] sm:$0xff]
    %v1083 = vld [vmem:[#allocation2 + $0x5f0] sm:$0xff]
    %v1084 = vld [vmem:[#allocation2 + $0x5f8] sm:$0xff]
    %v1085 = vld [vmem:[#allocation2 + $0x600] sm:$0xff]
    %v1086 = vld [vmem:[#allocation2 + $0x608] sm:$0xff]
    %v1087 = vld [vmem:[#allocation2 + $0x610] sm:$0xff]
    %v1088 = vld [vmem:[#allocation2 + $0x618] sm:$0xff]
    %v1089 = vld [vmem:[#allocation2 + $0x620] sm:$0xff]
    %v1090 = vld [vmem:[#allocation2 + $0x628] sm:$0xff]
    %v1091 = vld [vmem:[#allocation2 + $0x630] sm:$0xff]
    %v1092 = vld [vmem:[#allocation2 + $0x638] sm:$0xff]
    %v1093 = vld [vmem:[#allocation2 + $0x640] sm:$0xff]
    %v1094 = vld [vmem:[#allocation2 + $0x648] sm:$0xff]
    %v1095 = vld [vmem:[#allocation2 + $0x650] sm:$0xff]
    %v1096 = vld [vmem:[#allocation2 + $0x658] sm:$0xff]
    %v1097 = vld [vmem:[#allocation2 + $0x660] sm:$0xff]
    %v1098 = vld [vmem:[#allocation2 + $0x668] sm:$0xff]
    %v1099 = vld [vmem:[#allocation2 + $0x670] sm:$0xff]
    %v1100 = vld [vmem:[#allocation2 + $0x678] sm:$0xff]
    %v1101 = vld [vmem:[#allocation2 + $0x680] sm:$0xff]
    %v1102 = vld [vmem:[#allocation2 + $0x688] sm:$0xff]
    %v1103 = vld [vmem:[#allocation2 + $0x690] sm:$0xff]
    %v1104 = vld [vmem:[#allocation2 + $0x698] sm:$0xff]
    %v1105 = vld [vmem:[#allocation2 + $0x6a0] sm:$0xff]
    %v1106 = vld [vmem:[#allocation2 + $0x6a8] sm:$0xff]
    %v1107 = vld [vmem:[#allocation2 + $0x6b0] sm:$0xff]
    %v1108 = vld [vmem:[#allocation2 + $0x6b8] sm:$0xff]
    %v1109 = vld [vmem:[#allocation2 + $0x6c0] sm:$0xff]
    %v1110 = vld [vmem:[#allocation2 + $0x6c8] sm:$0xff]
    %v1111 = vld [vmem:[#allocation2 + $0x6d0] sm:$0xff]
    %v1112 = vld [vmem:[#allocation2 + $0x6d8] sm:$0xff]
    %v1113 = vld [vmem:[#allocation2 + $0x6e0] sm:$0xff]
    %v1114 = vld [vmem:[#allocation2 + $0x6e8] sm:$0xff]
    %v1115 = vld [vmem:[#allocation2 + $0x6f0] sm:$0xff]
    %v1116 = vld [vmem:[#allocation2 + $0x6f8] sm:$0xff]
    %v1117 = vld [vmem:[#allocation2 + $0x700] sm:$0xff]
    %v1118 = vld [vmem:[#allocation2 + $0x708] sm:$0xff]
    %v1119 = vld [vmem:[#allocation2 + $0x710] sm:$0xff]
    %v1120 = vld [vmem:[#allocation2 + $0x718] sm:$0xff]
    %v1121 = vld [vmem:[#allocation2 + $0x720] sm:$0xff]
    %v1122 = vld [vmem:[#allocation2 + $0x728] sm:$0xff]
    %v1123 = vld [vmem:[#allocation2 + $0x730] sm:$0xff]
    %v1124 = vld [vmem:[#allocation2 + $0x738] sm:$0xff]
    %v1125 = vld [vmem:[#allocation2 + $0x740] sm:$0xff]
    %v1126 = vld [vmem:[#allocation2 + $0x748] sm:$0xff]
    %v1127 = vld [vmem:[#allocation2 + $0x750] sm:$0xff]
    %v1128 = vld [vmem:[#allocation2 + $0x758] sm:$0xff]
    %v1129 = vld [vmem:[#allocation2 + $0x760] sm:$0xff]
    %v1130 = vld [vmem:[#allocation2 + $0x768] sm:$0xff]
    %v1131 = vld [vmem:[#allocation2 + $0x770] sm:$0xff]
    %v1132 = vld [vmem:[#allocation2 + $0x778] sm:$0xff]
    %v1133 = vld [vmem:[#allocation2 + $0x780] sm:$0xff]
    %v1134 = vld [vmem:[#allocation2 + $0x788] sm:$0xff]
    %v1135 = vld [vmem:[#allocation2 + $0x790] sm:$0xff]
    %v1136 = vld [vmem:[#allocation2 + $0x798] sm:$0xff]
    %v1137 = vld [vmem:[#allocation2 + $0x7a0] sm:$0xff]
    %v1138 = vld [vmem:[#allocation2 + $0x7a8] sm:$0xff]
    %v1139 = vld [vmem:[#allocation2 + $0x7b0] sm:$0xff]
    %v1140 = vld [vmem:[#allocation2 + $0x7b8] sm:$0xff]
    %v1141 = vld [vmem:[#allocation2 + $0x7c0] sm:$0xff]
    %v1142 = vld [vmem:[#allocation2 + $0x7c8] sm:$0xff]
    %v1143 = vld [vmem:[#allocation2 + $0x7d0] sm:$0xff]
    %v1144 = vld [vmem:[#allocation2 + $0x7d8] sm:$0xff]
    %v1145 = vld [vmem:[#allocation2 + $0x7e0] sm:$0xff]
    %v1146 = vld [vmem:[#allocation2 + $0x7e8] sm:$0xff]
    %v1147 = vld [vmem:[#allocation2 + $0x7f0] sm:$0xff]
    %v1148 = vld [vmem:[#allocation2 + $0x7f8] sm:$0xff]
    %1149 = vmatprep.subr.bf16.mxu0 %v894
    %1150 = vmatpush1.bf16.msra.mxu0 %v893
    %1151 = vmatprep.subr.bf16.mxu0 %v902
    %1152 = vmatpush1.bf16.msra.mxu0 %v901
    %1153 = vmatprep.subr.bf16.mxu0 %v910
    %1154 = vmatpush1.bf16.msra.mxu0 %v909
    %1155 = vmatprep.subr.bf16.mxu0 %v918
    %1156 = vmatpush1.bf16.msra.mxu0 %v917
    %1157 = vmatprep.subr.bf16.mxu0 %v926
    %1158 = vmatpush1.bf16.msra.mxu0 %v925
    %1159 = vmatprep.subr.bf16.mxu0 %v934
    %1160 = vmatpush1.bf16.msra.mxu0 %v933
    %1161 = vmatprep.subr.bf16.mxu0 %v942
    %1162 = vmatpush1.bf16.msra.mxu0 %v941
    %1163 = vmatprep.subr.bf16.mxu0 %v950
    %1164 = vmatpush1.bf16.msra.mxu0 %v949
    %1165 = vmatprep.subr.bf16.mxu0 %v958
    %1166 = vmatpush1.bf16.msra.mxu0 %v957
    %1167 = vmatprep.subr.bf16.mxu0 %v966
    %1168 = vmatpush1.bf16.msra.mxu0 %v965
    %1169 = vmatprep.subr.bf16.mxu0 %v974
    %1170 = vmatpush1.bf16.msra.mxu0 %v973
    %1171 = vmatprep.subr.bf16.mxu0 %v982
    %1172 = vmatpush1.bf16.msra.mxu0 %v981
    %1173 = vmatprep.subr.bf16.mxu0 %v990
    %1174 = vmatpush1.bf16.msra.mxu0 %v989
    %1175 = vmatprep.subr.bf16.mxu0 %v998
    %1176 = vmatpush1.bf16.msra.mxu0 %v997
    %1177 = vmatprep.subr.bf16.mxu0 %v1006
    %1178 = vmatpush1.bf16.msra.mxu0 %v1005
    %1179 = vmatprep.subr.bf16.mxu0 %v1014
    %1180 = vmatpush1.bf16.msra.mxu0 %v1013
    %1181 = vmatprep.mubr.bf16.mxu0 %v890
    %1182 = vmatmul.mubr.bf16.gmra.mrb[0].mxu0 %v889
    %v1183 = vpop.f32.mrb[0].mxu0
    %v1184 = vadd.f32 0.0, %v1183
    %v1185 = vpop.f32.mrb[0].mxu0
    %v1186 = vadd.f32 0.0, %v1185
    %v1187 = vpop.f32.mrb[0].mxu0
    %v1188 = vpop.f32.mrb[0].mxu0
    %1189 = vdwg.mxu0
    %1190 = vmatprep.subr.bf16.mxu0 %v1022
    %1191 = vmatpush1.bf16.msra.mxu0 %v1021
    %1192 = vmatprep.subr.bf16.mxu0 %v1030
    %1193 = vmatpush1.bf16.msra.mxu0 %v1029
    %1194 = vmatprep.subr.bf16.mxu0 %v1038
    %1195 = vmatpush1.bf16.msra.mxu0 %v1037
    %1196 = vmatprep.subr.bf16.mxu0 %v1046
    %1197 = vmatpush1.bf16.msra.mxu0 %v1045
    %1198 = vmatprep.subr.bf16.mxu0 %v1054
    %1199 = vmatpush1.bf16.msra.mxu0 %v1053
    %1200 = vmatprep.subr.bf16.mxu0 %v1062
    %1201 = vmatpush1.bf16.msra.mxu0 %v1061
    %1202 = vmatprep.subr.bf16.mxu0 %v1070
    %1203 = vmatpush1.bf16.msra.mxu0 %v1069
    %1204 = vmatprep.subr.bf16.mxu0 %v1078
    %1205 = vmatpush1.bf16.msra.mxu0 %v1077
    %1206 = vmatprep.subr.bf16.mxu0 %v1086
    %1207 = vmatpush1.bf16.msra.mxu0 %v1085
    %1208 = vmatprep.subr.bf16.mxu0 %v1094
    %1209 = vmatpush1.bf16.msra.mxu0 %v1093
    %1210 = vmatprep.subr.bf16.mxu0 %v1102
    %1211 = vmatpush1.bf16.msra.mxu0 %v1101
    %1212 = vmatprep.subr.bf16.mxu0 %v1110
    %1213 = vmatpush1.bf16.msra.mxu0 %v1109
    %1214 = vmatprep.subr.bf16.mxu0 %v1118
    %1215 = vmatpush1.bf16.msra.mxu0 %v1117
    %1216 = vmatprep.subr.bf16.mxu0 %v1126
    %1217 = vmatpush1.bf16.msra.mxu0 %v1125
    %1218 = vmatprep.subr.bf16.mxu0 %v1134
    %1219 = vmatpush1.bf16.msra.mxu0 %v1133
    %1220 = vmatprep.subr.bf16.mxu0 %v1142
    %1221 = vmatpush1.bf16.msra.mxu0 %v1141
    %1222 = vmatprep.mubr.bf16.mxu0 %v892
    %1223 = vmatmul.mubr.bf16.gmra.mrb[0].mxu0 %v891
    %v1224 = vpop.f32.mrb[0].mxu0
    %v1225 = vadd.f32 %v1184, %v1224
    %v1226 = vpop.f32.mrb[0].mxu0
    %v1227 = vadd.f32 %v1186, %v1226
    %v1228 = vpop.f32.mrb[0].mxu0
    %v1229 = vpop.f32.mrb[0].mxu0
    %1230 = vdwg.mxu0
    %1231 = vmatprep.subr.bf16.mxu0 %v896
    %1232 = vmatpush1.bf16.msra.mxu0 %v895
    %1233 = vmatprep.subr.bf16.mxu0 %v904
    %1234 = vmatpush1.bf16.msra.mxu0 %v903
    %1235 = vmatprep.subr.bf16.mxu0 %v912
    %1236 = vmatpush1.bf16.msra.mxu0 %v911
    %1237 = vmatprep.subr.bf16.mxu0 %v920
    %1238 = vmatpush1.bf16.msra.mxu0 %v919
    %1239 = vmatprep.subr.bf16.mxu0 %v928
    %1240 = vmatpush1.bf16.msra.mxu0 %v927
    %1241 = vmatprep.subr.bf16.mxu0 %v936
    %1242 = vmatpush1.bf16.msra.mxu0 %v935
    %1243 = vmatprep.subr.bf16.mxu0 %v944
    %1244 = vmatpush1.bf16.msra.mxu0 %v943
    %1245 = vmatprep.subr.bf16.mxu0 %v952
    %1246 = vmatpush1.bf16.msra.mxu0 %v951
    %1247 = vmatprep.subr.bf16.mxu0 %v960
    %1248 = vmatpush1.bf16.msra.mxu0 %v959
    %1249 = vmatprep.subr.bf16.mxu0 %v968
    %1250 = vmatpush1.bf16.msra.mxu0 %v967
    %1251 = vmatprep.subr.bf16.mxu0 %v976
    %1252 = vmatpush1.bf16.msra.mxu0 %v975
    %1253 = vmatprep.subr.bf16.mxu0 %v984
    %1254 = vmatpush1.bf16.msra.mxu0 %v983
    %1255 = vmatprep.subr.bf16.mxu0 %v992
    %1256 = vmatpush1.bf16.msra.mxu0 %v991
    %1257 = vmatprep.subr.bf16.mxu0 %v1000
    %1258 = vmatpush1.bf16.msra.mxu0 %v999
    %1259 = vmatprep.subr.bf16.mxu0 %v1008
    %1260 = vmatpush1.bf16.msra.mxu0 %v1007
    %1261 = vmatprep.subr.bf16.mxu0 %v1016
    %1262 = vmatpush1.bf16.msra.mxu0 %v1015
    %1263 = vmatprep.mubr.bf16.mxu0 %v890
    %1264 = vmatmul.mubr.bf16.gmra.mrb[0].mxu0 %v889
    %v1265 = vpop.f32.mrb[0].mxu0
    %v1266 = vadd.f32 0.0, %v1265
    %v1267 = vpop.f32.mrb[0].mxu0
    %v1268 = vadd.f32 0.0, %v1267
    %v1269 = vpop.f32.mrb[0].mxu0
    %v1270 = vpop.f32.mrb[0].mxu0
    %1271 = vdwg.mxu0
    %1272 = vmatprep.subr.bf16.mxu0 %v1024
    %1273 = vmatpush1.bf16.msra.mxu0 %v1023
    %1274 = vmatprep.subr.bf16.mxu0 %v1032
    %1275 = vmatpush1.bf16.msra.mxu0 %v1031
    %1276 = vmatprep.subr.bf16.mxu0 %v1040
    %1277 = vmatpush1.bf16.msra.mxu0 %v1039
    %1278 = vmatprep.subr.bf16.mxu0 %v1048
    %1279 = vmatpush1.bf16.msra.mxu0 %v1047
    %1280 = vmatprep.subr.bf16.mxu0 %v1056
    %1281 = vmatpush1.bf16.msra.mxu0 %v1055
    %1282 = vmatprep.subr.bf16.mxu0 %v1064
    %1283 = vmatpush1.bf16.msra.mxu0 %v1063
    %1284 = vmatprep.subr.bf16.mxu0 %v1072
    %1285 = vmatpush1.bf16.msra.mxu0 %v1071
    %1286 = vmatprep.subr.bf16.mxu0 %v1080
    %1287 = vmatpush1.bf16.msra.mxu0 %v1079
    %1288 = vmatprep.subr.bf16.mxu0 %v1088
    %1289 = vmatpush1.bf16.msra.mxu0 %v1087
    %1290 = vmatprep.subr.bf16.mxu0 %v1096
    %1291 = vmatpush1.bf16.msra.mxu0 %v1095
    %1292 = vmatprep.subr.bf16.mxu0 %v1104
    %1293 = vmatpush1.bf16.msra.mxu0 %v1103
    %1294 = vmatprep.subr.bf16.mxu0 %v1112
    %1295 = vmatpush1.bf16.msra.mxu0 %v1111
    %1296 = vmatprep.subr.bf16.mxu0 %v1120
    %1297 = vmatpush1.bf16.msra.mxu0 %v1119
    %1298 = vmatprep.subr.bf16.mxu0 %v1128
    %1299 = vmatpush1.bf16.msra.mxu0 %v1127
    %1300 = vmatprep.subr.bf16.mxu0 %v1136
    %1301 = vmatpush1.bf16.msra.mxu0 %v1135
    %1302 = vmatprep.subr.bf16.mxu0 %v1144
    %1303 = vmatpush1.bf16.msra.mxu0 %v1143
    %1304 = vmatprep.mubr.bf16.mxu0 %v892
    %1305 = vmatmul.mubr.bf16.gmra.mrb[0].mxu0 %v891
    %v1306 = vpop.f32.mrb[0].mxu0
    %v1307 = vadd.f32 %v1266, %v1306
    %v1308 = vpop.f32.mrb[0].mxu0
    %v1309 = vadd.f32 %v1268, %v1308
    %v1310 = vpop.f32.mrb[0].mxu0
    %v1311 = vpop.f32.mrb[0].mxu0
    %1312 = vdwg.mxu0
    %1313 = vmatprep.subr.bf16.mxu0 %v898
    %1314 = vmatpush1.bf16.msra.mxu0 %v897
    %1315 = vmatprep.subr.bf16.mxu0 %v906
    %1316 = vmatpush1.bf16.msra.mxu0 %v905
    %1317 = vmatprep.subr.bf16.mxu0 %v914
    %1318 = vmatpush1.bf16.msra.mxu0 %v913
    %1319 = vmatprep.subr.bf16.mxu0 %v922
    %1320 = vmatpush1.bf16.msra.mxu0 %v921
    %1321 = vmatprep.subr.bf16.mxu0 %v930
    %1322 = vmatpush1.bf16.msra.mxu0 %v929
    %1323 = vmatprep.subr.bf16.mxu0 %v938
    %1324 = vmatpush1.bf16.msra.mxu0 %v937
    %1325 = vmatprep.subr.bf16.mxu0 %v946
    %1326 = vmatpush1.bf16.msra.mxu0 %v945
    %1327 = vmatprep.subr.bf16.mxu0 %v954
    %1328 = vmatpush1.bf16.msra.mxu0 %v953
    %1329 = vmatprep.subr.bf16.mxu0 %v962
    %1330 = vmatpush1.bf16.msra.mxu0 %v961
    %1331 = vmatprep.subr.bf16.mxu0 %v970
    %1332 = vmatpush1.bf16.msra.mxu0 %v969
    %1333 = vmatprep.subr.bf16.mxu0 %v978
    %1334 = vmatpush1.bf16.msra.mxu0 %v977
    %1335 = vmatprep.subr.bf16.mxu0 %v986
    %1336 = vmatpush1.bf16.msra.mxu0 %v985
    %1337 = vmatprep.subr.bf16.mxu0 %v994
    %1338 = vmatpush1.bf16.msra.mxu0 %v993
    %1339 = vmatprep.subr.bf16.mxu0 %v1002
    %1340 = vmatpush1.bf16.msra.mxu0 %v1001
    %1341 = vmatprep.subr.bf16.mxu0 %v1010
    %1342 = vmatpush1.bf16.msra.mxu0 %v1009
    %1343 = vmatprep.subr.bf16.mxu0 %v1018
    %1344 = vmatpush1.bf16.msra.mxu0 %v1017
    %1345 = vmatprep.mubr.bf16.mxu0 %v890
    %1346 = vmatmul.mubr.bf16.gmra.mrb[0].mxu0 %v889
    %v1347 = vpop.f32.mrb[0].mxu0
    %v1348 = vadd.f32 0.0, %v1347
    %v1349 = vpop.f32.mrb[0].mxu0
    %v1350 = vadd.f32 0.0, %v1349
    %v1351 = vpop.f32.mrb[0].mxu0
    %v1352 = vpop.f32.mrb[0].mxu0
    %1353 = vdwg.mxu0
    %1354 = vmatprep.subr.bf16.mxu0 %v1026
    %1355 = vmatpush1.bf16.msra.mxu0 %v1025
    %1356 = vmatprep.subr.bf16.mxu0 %v1034
    %1357 = vmatpush1.bf16.msra.mxu0 %v1033
    %1358 = vmatprep.subr.bf16.mxu0 %v1042
    %1359 = vmatpush1.bf16.msra.mxu0 %v1041
    %1360 = vmatprep.subr.bf16.mxu0 %v1050
    %1361 = vmatpush1.bf16.msra.mxu0 %v1049
    %1362 = vmatprep.subr.bf16.mxu0 %v1058
    %1363 = vmatpush1.bf16.msra.mxu0 %v1057
    %1364 = vmatprep.subr.bf16.mxu0 %v1066
    %1365 = vmatpush1.bf16.msra.mxu0 %v1065
    %1366 = vmatprep.subr.bf16.mxu0 %v1074
    %1367 = vmatpush1.bf16.msra.mxu0 %v1073
    %1368 = vmatprep.subr.bf16.mxu0 %v1082
    %1369 = vmatpush1.bf16.msra.mxu0 %v1081
    %1370 = vmatprep.subr.bf16.mxu0 %v1090
    %1371 = vmatpush1.bf16.msra.mxu0 %v1089
    %1372 = vmatprep.subr.bf16.mxu0 %v1098
    %1373 = vmatpush1.bf16.msra.mxu0 %v1097
    %1374 = vmatprep.subr.bf16.mxu0 %v1106
    %1375 = vmatpush1.bf16.msra.mxu0 %v1105
    %1376 = vmatprep.subr.bf16.mxu0 %v1114
    %1377 = vmatpush1.bf16.msra.mxu0 %v1113
    %1378 = vmatprep.subr.bf16.mxu0 %v1122
    %1379 = vmatpush1.bf16.msra.mxu0 %v1121
    %1380 = vmatprep.subr.bf16.mxu0 %v1130
    %1381 = vmatpush1.bf16.msra.mxu0 %v1129
    %1382 = vmatprep.subr.bf16.mxu0 %v1138
    %1383 = vmatpush1.bf16.msra.mxu0 %v1137
    %1384 = vmatprep.subr.bf16.mxu0 %v1146
    %1385 = vmatpush1.bf16.msra.mxu0 %v1145
    %1386 = vmatprep.mubr.bf16.mxu0 %v892
    %1387 = vmatmul.mubr.bf16.gmra.mrb[0].mxu0 %v891
    %v1388 = vpop.f32.mrb[0].mxu0
    %v1389 = vadd.f32 %v1348, %v1388
    %v1390 = vpop.f32.mrb[0].mxu0
    %v1391 = vadd.f32 %v1350, %v1390
    %v1392 = vpop.f32.mrb[0].mxu0
    %v1393 = vpop.f32.mrb[0].mxu0
    %1394 = vdwg.mxu0
    %1395 = vmatprep.subr.bf16.mxu0 %v900
    %1396 = vmatpush1.bf16.msra.mxu0 %v899
    %1397 = vmatprep.subr.bf16.mxu0 %v908
    %1398 = vmatpush1.bf16.msra.mxu0 %v907
    %1399 = vmatprep.subr.bf16.mxu0 %v916
    %1400 = vmatpush1.bf16.msra.mxu0 %v915
    %1401 = vmatprep.subr.bf16.mxu0 %v924
    %1402 = vmatpush1.bf16.msra.mxu0 %v923
    %1403 = vmatprep.subr.bf16.mxu0 %v932
    %1404 = vmatpush1.bf16.msra.mxu0 %v931
    %1405 = vmatprep.subr.bf16.mxu0 %v940
    %1406 = vmatpush1.bf16.msra.mxu0 %v939
    %1407 = vmatprep.subr.bf16.mxu0 %v948
    %1408 = vmatpush1.bf16.msra.mxu0 %v947
    %1409 = vmatprep.subr.bf16.mxu0 %v956
    %1410 = vmatpush1.bf16.msra.mxu0 %v955
    %1411 = vmatprep.subr.bf16.mxu0 %v964
    %1412 = vmatpush1.bf16.msra.mxu0 %v963
    %1413 = vmatprep.subr.bf16.mxu0 %v972
    %1414 = vmatpush1.bf16.msra.mxu0 %v971
    %1415 = vmatprep.subr.bf16.mxu0 %v980
    %1416 = vmatpush1.bf16.msra.mxu0 %v979
    %1417 = vmatprep.subr.bf16.mxu0 %v988
    %1418 = vmatpush1.bf16.msra.mxu0 %v987
    %1419 = vmatprep.subr.bf16.mxu0 %v996
    %1420 = vmatpush1.bf16.msra.mxu0 %v995
    %1421 = vmatprep.subr.bf16.mxu0 %v1004
    %1422 = vmatpush1.bf16.msra.mxu0 %v1003
    %1423 = vmatprep.subr.bf16.mxu0 %v1012
    %1424 = vmatpush1.bf16.msra.mxu0 %v1011
    %1425 = vmatprep.subr.bf16.mxu0 %v1020
    %1426 = vmatpush1.bf16.msra.mxu0 %v1019
    %1427 = vmatprep.mubr.bf16.mxu0 %v890
    %1428 = vmatmul.mubr.bf16.gmra.mrb[0].mxu0 %v889
    %v1429 = vpop.f32.mrb[0].mxu0
    %v1430 = vadd.f32 0.0, %v1429
    %v1431 = vpop.f32.mrb[0].mxu0
    %v1432 = vadd.f32 0.0, %v1431
    %v1433 = vpop.f32.mrb[0].mxu0
    %v1434 = vpop.f32.mrb[0].mxu0
    %1435 = vdwg.mxu0
    %1436 = vmatprep.subr.bf16.mxu0 %v1028
    %1437 = vmatpush1.bf16.msra.mxu0 %v1027
    %1438 = vmatprep.subr.bf16.mxu0 %v1036
    %1439 = vmatpush1.bf16.msra.mxu0 %v1035
    %1440 = vmatprep.subr.bf16.mxu0 %v1044
    %1441 = vmatpush1.bf16.msra.mxu0 %v1043
    %1442 = vmatprep.subr.bf16.mxu0 %v1052
    %1443 = vmatpush1.bf16.msra.mxu0 %v1051
    %1444 = vmatprep.subr.bf16.mxu0 %v1060
    %1445 = vmatpush1.bf16.msra.mxu0 %v1059
    %1446 = vmatprep.subr.bf16.mxu0 %v1068
    %1447 = vmatpush1.bf16.msra.mxu0 %v1067
    %1448 = vmatprep.subr.bf16.mxu0 %v1076
    %1449 = vmatpush1.bf16.msra.mxu0 %v1075
    %1450 = vmatprep.subr.bf16.mxu0 %v1084
    %1451 = vmatpush1.bf16.msra.mxu0 %v1083
    %1452 = vmatprep.subr.bf16.mxu0 %v1092
    %1453 = vmatpush1.bf16.msra.mxu0 %v1091
    %1454 = vmatprep.subr.bf16.mxu0 %v1100
    %1455 = vmatpush1.bf16.msra.mxu0 %v1099
    %1456 = vmatprep.subr.bf16.mxu0 %v1108
    %1457 = vmatpush1.bf16.msra.mxu0 %v1107
    %1458 = vmatprep.subr.bf16.mxu0 %v1116
    %1459 = vmatpush1.bf16.msra.mxu0 %v1115
    %1460 = vmatprep.subr.bf16.mxu0 %v1124
    %1461 = vmatpush1.bf16.msra.mxu0 %v1123
    %1462 = vmatprep.subr.bf16.mxu0 %v1132
    %1463 = vmatpush1.bf16.msra.mxu0 %v1131
    %1464 = vmatprep.subr.bf16.mxu0 %v1140
    %1465 = vmatpush1.bf16.msra.mxu0 %v1139
    %1466 = vmatprep.subr.bf16.mxu0 %v1148
    %1467 = vmatpush1.bf16.msra.mxu0 %v1147
    %1468 = vmatprep.mubr.bf16.mxu0 %v892
    %1469 = vmatmul.mubr.bf16.gmra.mrb[0].mxu0 %v891
    %v1470 = vpop.f32.mrb[0].mxu0
    %v1471 = vadd.f32 %v1430, %v1470
    %v1472 = vpop.f32.mrb[0].mxu0
    %v1473 = vadd.f32 %v1432, %v1472
    %v1474 = vpop.f32.mrb[0].mxu0
    %v1475 = vpop.f32.mrb[0].mxu0
    %1476 = vdwg.mxu0
    %v1477 = vrot.slane %v1225, 4
    %v1478 = vadd.f32 %v1225, %v1477
    %v1479 = vrot.slane %v1478, 2
    %v1480 = vadd.f32 %v1478, %v1479
    %v1481 = vrot.slane %v1480, 1
    %v1482 = vadd.f32 %v1480, %v1481
    %v1483 = vrot.slane %v1227, 4
    %v1484 = vadd.f32 %v1227, %v1483
    %v1485 = vrot.slane %v1484, 2
    %v1486 = vadd.f32 %v1484, %v1485
    %v1487 = vrot.slane %v1486, 1
    %v1488 = vadd.f32 %v1486, %v1487
    %v1489 = vrot.slane %v1307, 4
    %v1490 = vadd.f32 %v1307, %v1489
    %v1491 = vrot.slane %v1490, 2
    %v1492 = vadd.f32 %v1490, %v1491
    %v1493 = vrot.slane %v1492, 1
    %v1494 = vadd.f32 %v1492, %v1493
    %v1495 = vrot.slane %v1309, 4
    %v1496 = vadd.f32 %v1309, %v1495
    %v1497 = vrot.slane %v1496, 2
    %v1498 = vadd.f32 %v1496, %v1497
    %v1499 = vrot.slane %v1498, 1
    %v1500 = vadd.f32 %v1498, %v1499
    %v1501 = vrot.slane %v1389, 4
    %v1502 = vadd.f32 %v1389, %v1501
    %v1503 = vrot.slane %v1502, 2
    %v1504 = vadd.f32 %v1502, %v1503
    %v1505 = vrot.slane %v1504, 1
    %v1506 = vadd.f32 %v1504, %v1505
    %v1507 = vrot.slane %v1391, 4
    %v1508 = vadd.f32 %v1391, %v1507
    %v1509 = vrot.slane %v1508, 2
    %v1510 = vadd.f32 %v1508, %v1509
    %v1511 = vrot.slane %v1510, 1
    %v1512 = vadd.f32 %v1510, %v1511
    %v1513 = vrot.slane %v1471, 4
    %v1514 = vadd.f32 %v1471, %v1513
    %v1515 = vrot.slane %v1514, 2
    %v1516 = vadd.f32 %v1514, %v1515
    %v1517 = vrot.slane %v1516, 1
    %v1518 = vadd.f32 %v1516, %v1517
    %v1519 = vrot.slane %v1473, 4
    %v1520 = vadd.f32 %v1473, %v1519
    %v1521 = vrot.slane %v1520, 2
    %v1522 = vadd.f32 %v1520, %v1521
    %v1523 = vrot.slane %v1522, 1
    %v1524 = vadd.f32 %v1522, %v1523
    %v1525 = vmul.f32 %v1225, %v1225
    %v1526 = vmul.f32 %v1227, %v1227
    %v1527 = vmul.f32 %v1307, %v1307
    %v1528 = vmul.f32 %v1309, %v1309
    %v1529 = vmul.f32 %v1389, %v1389
    %v1530 = vmul.f32 %v1391, %v1391
    %v1531 = vmul.f32 %v1471, %v1471
    %v1532 = vmul.f32 %v1473, %v1473
    %v1533 = vrot.slane %v1525, 4
    %v1534 = vadd.f32 %v1525, %v1533
    %v1535 = vrot.slane %v1534, 2
    %v1536 = vadd.f32 %v1534, %v1535
    %v1537 = vrot.slane %v1536, 1
    %v1538 = vadd.f32 %v1536, %v1537
    %v1539 = vrot.slane %v1526, 4
    %v1540 = vadd.f32 %v1526, %v1539
    %v1541 = vrot.slane %v1540, 2
    %v1542 = vadd.f32 %v1540, %v1541
    %v1543 = vrot.slane %v1542, 1
    %v1544 = vadd.f32 %v1542, %v1543
    %v1545 = vrot.slane %v1527, 4
    %v1546 = vadd.f32 %v1527, %v1545
    %v1547 = vrot.slane %v1546, 2
    %v1548 = vadd.f32 %v1546, %v1547
    %v1549 = vrot.slane %v1548, 1
    %v1550 = vadd.f32 %v1548, %v1549
    %v1551 = vrot.slane %v1528, 4
    %v1552 = vadd.f32 %v1528, %v1551
    %v1553 = vrot.slane %v1552, 2
    %v1554 = vadd.f32 %v1552, %v1553
    %v1555 = vrot.slane %v1554, 1
    %v1556 = vadd.f32 %v1554, %v1555
    %v1557 = vrot.slane %v1529, 4
    %v1558 = vadd.f32 %v1529, %v1557
    %v1559 = vrot.slane %v1558, 2
    %v1560 = vadd.f32 %v1558, %v1559
    %v1561 = vrot.slane %v1560, 1
    %v1562 = vadd.f32 %v1560, %v1561
    %v1563 = vrot.slane %v1530, 4
    %v1564 = vadd.f32 %v1530, %v1563
    %v1565 = vrot.slane %v1564, 2
    %v1566 = vadd.f32 %v1564, %v1565
    %v1567 = vrot.slane %v1566, 1
    %v1568 = vadd.f32 %v1566, %v1567
    %v1569 = vrot.slane %v1531, 4
    %v1570 = vadd.f32 %v1531, %v1569
    %v1571 = vrot.slane %v1570, 2
    %v1572 = vadd.f32 %v1570, %v1571
    %v1573 = vrot.slane %v1572, 1
    %v1574 = vadd.f32 %v1572, %v1573
    %v1575 = vrot.slane %v1532, 4
    %v1576 = vadd.f32 %v1532, %v1575
    %v1577 = vrot.slane %v1576, 2
    %v1578 = vadd.f32 %v1576, %v1577
    %v1579 = vrot.slane %v1578, 1
    %v1580 = vadd.f32 %v1578, %v1579
    %v1581 = vsel %vm341, %v1482, %v1538
    %v1582 = vsel %vm341, %v1488, %v1544
    %v1583 = vsel %vm341, %v1494, %v1550
    %v1584 = vsel %vm341, %v1500, %v1556
    %v1585 = vsel %vm341, %v1506, %v1562
    %v1586 = vsel %vm341, %v1512, %v1568
    %v1587 = vsel %vm341, %v1518, %v1574
    %v1588 = vsel %vm341, %v1524, %v1580
    %v1589 = vpack.c.bf16 %v1581, %v1581
    %v1590 = vpack.c.bf16 %v1582, %v1582
    %v1591 = vpack.c.bf16 %v1583, %v1583
    %v1592 = vpack.c.bf16 %v1584, %v1584
    %v1593 = vpack.c.bf16 %v1585, %v1585
    %v1594 = vpack.c.bf16 %v1586, %v1586
    %v1595 = vpack.c.bf16 %v1587, %v1587
    %v1596 = vpack.c.bf16 %v1588, %v1588
    %v1597 = vld [vmem:[%s7] sm:$0xf]
    %v1598 = vld [vmem:[%s7 + $0x4] sm:$0xf]
    %v1599 = vld [vmem:[%s7 + $0x8] sm:$0xf]
    %v1600 = vld [vmem:[%s7 + $0xc] sm:$0xf]
    %v1601 = vld [vmem:[%s7 + $0x10] sm:$0xf]
    %v1602 = vld [vmem:[%s7 + $0x14] sm:$0xf]
    %v1603 = vld [vmem:[%s7 + $0x18] sm:$0xf]
    %v1604 = vld [vmem:[%s7 + $0x1c] sm:$0xf]
    %v1605 = vld [vmem:[%s7 + $0x20] sm:$0xf]
    %v1606 = vld [vmem:[%s7 + $0x24] sm:$0xf]
    %v1607 = vld [vmem:[%s7 + $0x28] sm:$0xf]
    %v1608 = vld [vmem:[%s7 + $0x2c] sm:$0xf]
    %v1609 = vld [vmem:[%s7 + $0x30] sm:$0xf]
    %v1610 = vld [vmem:[%s7 + $0x34] sm:$0xf]
    %v1611 = vld [vmem:[%s7 + $0x38] sm:$0xf]
    %v1612 = vld [vmem:[%s7 + $0x3c] sm:$0xf]
    %v1613 = vld [vmem:[%s7 + $0x40] sm:$0xf]
    %v1614 = vld [vmem:[%s7 + $0x44] sm:$0xf]
    %v1615 = vld [vmem:[%s7 + $0x48] sm:$0xf]
    %v1616 = vld [vmem:[%s7 + $0x4c] sm:$0xf]
    %v1617 = vld [vmem:[%s7 + $0x50] sm:$0xf]
    %v1618 = vld [vmem:[%s7 + $0x54] sm:$0xf]
    %v1619 = vld [vmem:[%s7 + $0x58] sm:$0xf]
    %v1620 = vld [vmem:[%s7 + $0x5c] sm:$0xf]
    %v1621 = vld [vmem:[%s7 + $0x60] sm:$0xf]
    %v1622 = vld [vmem:[%s7 + $0x64] sm:$0xf]
    %v1623 = vld [vmem:[%s7 + $0x68] sm:$0xf]
    %v1624 = vld [vmem:[%s7 + $0x6c] sm:$0xf]
    %v1625 = vld [vmem:[%s7 + $0x70] sm:$0xf]
    %v1626 = vld [vmem:[%s7 + $0x74] sm:$0xf]
    %v1627 = vld [vmem:[%s7 + $0x78] sm:$0xf]
    %v1628 = vld [vmem:[%s7 + $0x7c] sm:$0xf]
    %v1629 = vld [vmem:[%s7 + $0x80] sm:$0xf]
    %v1630 = vld [vmem:[%s7 + $0x84] sm:$0xf]
    %v1631 = vld [vmem:[%s7 + $0x88] sm:$0xf]
    %v1632 = vld [vmem:[%s7 + $0x8c] sm:$0xf]
    %v1633 = vld [vmem:[%s7 + $0x90] sm:$0xf]
    %v1634 = vld [vmem:[%s7 + $0x94] sm:$0xf]
    %v1635 = vld [vmem:[%s7 + $0x98] sm:$0xf]
    %v1636 = vld [vmem:[%s7 + $0x9c] sm:$0xf]
    %v1637 = vld [vmem:[%s7 + $0xa0] sm:$0xf]
    %v1638 = vld [vmem:[%s7 + $0xa4] sm:$0xf]
    %v1639 = vld [vmem:[%s7 + $0xa8] sm:$0xf]
    %v1640 = vld [vmem:[%s7 + $0xac] sm:$0xf]
    %v1641 = vld [vmem:[%s7 + $0xb0] sm:$0xf]
    %v1642 = vld [vmem:[%s7 + $0xb4] sm:$0xf]
    %v1643 = vld [vmem:[%s7 + $0xb8] sm:$0xf]
    %v1644 = vld [vmem:[%s7 + $0xbc] sm:$0xf]
    %v1645 = vld [vmem:[%s7 + $0xc0] sm:$0xf]
    %v1646 = vld [vmem:[%s7 + $0xc4] sm:$0xf]
    %v1647 = vld [vmem:[%s7 + $0xc8] sm:$0xf]
    %v1648 = vld [vmem:[%s7 + $0xcc] sm:$0xf]
    %v1649 = vld [vmem:[%s7 + $0xd0] sm:$0xf]
    %v1650 = vld [vmem:[%s7 + $0xd4] sm:$0xf]
    %v1651 = vld [vmem:[%s7 + $0xd8] sm:$0xf]
    %v1652 = vld [vmem:[%s7 + $0xdc] sm:$0xf]
    %v1653 = vld [vmem:[%s7 + $0xe0] sm:$0xf]
    %v1654 = vld [vmem:[%s7 + $0xe4] sm:$0xf]
    %v1655 = vld [vmem:[%s7 + $0xe8] sm:$0xf]
    %v1656 = vld [vmem:[%s7 + $0xec] sm:$0xf]
    %v1657 = vld [vmem:[%s7 + $0xf0] sm:$0xf]
    %v1658 = vld [vmem:[%s7 + $0xf4] sm:$0xf]
    %v1659 = vld [vmem:[%s7 + $0xf8] sm:$0xf]
    %v1660 = vld [vmem:[%s7 + $0xfc] sm:$0xf]
    %v1661 = vld [vmem:[%s7 + $0x100] sm:$0xf]
    %v1662 = vld [vmem:[%s7 + $0x104] sm:$0xf]
    %v1663 = vld [vmem:[%s7 + $0x108] sm:$0xf]
    %v1664 = vld [vmem:[%s7 + $0x10c] sm:$0xf]
    %v1665 = vld [vmem:[%s7 + $0x110] sm:$0xf]
    %v1666 = vld [vmem:[%s7 + $0x114] sm:$0xf]
    %v1667 = vld [vmem:[%s7 + $0x118] sm:$0xf]
    %v1668 = vld [vmem:[%s7 + $0x11c] sm:$0xf]
    %v1669 = vld [vmem:[%s7 + $0x120] sm:$0xf]
    %v1670 = vld [vmem:[%s7 + $0x124] sm:$0xf]
    %v1671 = vld [vmem:[%s7 + $0x128] sm:$0xf]
    %v1672 = vld [vmem:[%s7 + $0x12c] sm:$0xf]
    %v1673 = vld [vmem:[%s7 + $0x130] sm:$0xf]
    %v1674 = vld [vmem:[%s7 + $0x134] sm:$0xf]
    %v1675 = vld [vmem:[%s7 + $0x138] sm:$0xf]
    %v1676 = vld [vmem:[%s7 + $0x13c] sm:$0xf]
    %v1677 = vld [vmem:[%s7 + $0x140] sm:$0xf]
    %v1678 = vld [vmem:[%s7 + $0x144] sm:$0xf]
    %v1679 = vld [vmem:[%s7 + $0x148] sm:$0xf]
    %v1680 = vld [vmem:[%s7 + $0x14c] sm:$0xf]
    %v1681 = vld [vmem:[%s7 + $0x150] sm:$0xf]
    %v1682 = vld [vmem:[%s7 + $0x154] sm:$0xf]
    %v1683 = vld [vmem:[%s7 + $0x158] sm:$0xf]
    %v1684 = vld [vmem:[%s7 + $0x15c] sm:$0xf]
    %v1685 = vld [vmem:[%s7 + $0x160] sm:$0xf]
    %v1686 = vld [vmem:[%s7 + $0x164] sm:$0xf]
    %v1687 = vld [vmem:[%s7 + $0x168] sm:$0xf]
    %v1688 = vld [vmem:[%s7 + $0x16c] sm:$0xf]
    %v1689 = vld [vmem:[%s7 + $0x170] sm:$0xf]
    %v1690 = vld [vmem:[%s7 + $0x174] sm:$0xf]
    %v1691 = vld [vmem:[%s7 + $0x178] sm:$0xf]
    %v1692 = vld [vmem:[%s7 + $0x17c] sm:$0xf]
    %v1693 = vld [vmem:[%s7 + $0x180] sm:$0xf]
    %v1694 = vld [vmem:[%s7 + $0x184] sm:$0xf]
    %v1695 = vld [vmem:[%s7 + $0x188] sm:$0xf]
    %v1696 = vld [vmem:[%s7 + $0x18c] sm:$0xf]
    %v1697 = vld [vmem:[%s7 + $0x190] sm:$0xf]
    %v1698 = vld [vmem:[%s7 + $0x194] sm:$0xf]
    %v1699 = vld [vmem:[%s7 + $0x198] sm:$0xf]
    %v1700 = vld [vmem:[%s7 + $0x19c] sm:$0xf]
    %v1701 = vld [vmem:[%s7 + $0x1a0] sm:$0xf]
    %v1702 = vld [vmem:[%s7 + $0x1a4] sm:$0xf]
    %v1703 = vld [vmem:[%s7 + $0x1a8] sm:$0xf]
    %v1704 = vld [vmem:[%s7 + $0x1ac] sm:$0xf]
    %v1705 = vld [vmem:[%s7 + $0x1b0] sm:$0xf]
    %v1706 = vld [vmem:[%s7 + $0x1b4] sm:$0xf]
    %v1707 = vld [vmem:[%s7 + $0x1b8] sm:$0xf]
    %v1708 = vld [vmem:[%s7 + $0x1bc] sm:$0xf]
    %v1709 = vld [vmem:[%s7 + $0x1c0] sm:$0xf]
    %v1710 = vld [vmem:[%s7 + $0x1c4] sm:$0xf]
    %v1711 = vld [vmem:[%s7 + $0x1c8] sm:$0xf]
    %v1712 = vld [vmem:[%s7 + $0x1cc] sm:$0xf]
    %v1713 = vld [vmem:[%s7 + $0x1d0] sm:$0xf]
    %v1714 = vld [vmem:[%s7 + $0x1d4] sm:$0xf]
    %v1715 = vld [vmem:[%s7 + $0x1d8] sm:$0xf]
    %v1716 = vld [vmem:[%s7 + $0x1dc] sm:$0xf]
    %v1717 = vld [vmem:[%s7 + $0x1e0] sm:$0xf]
    %v1718 = vld [vmem:[%s7 + $0x1e4] sm:$0xf]
    %v1719 = vld [vmem:[%s7 + $0x1e8] sm:$0xf]
    %v1720 = vld [vmem:[%s7 + $0x1ec] sm:$0xf]
    %v1721 = vld [vmem:[%s7 + $0x1f0] sm:$0xf]
    %v1722 = vld [vmem:[%s7 + $0x1f4] sm:$0xf]
    %v1723 = vld [vmem:[%s7 + $0x1f8] sm:$0xf]
    %v1724 = vld [vmem:[%s7 + $0x1fc] sm:$0xf]
    %v1853 = vunpack.c.l.b16 %v1597
    %v1854 = vunpack.c.l.b16 %v1598
    %v1855 = vunpack.c.l.b16 %v1599
    %v1856 = vunpack.c.l.b16 %v1600
    %v1857 = vunpack.c.l.b16 %v1601
    %v1858 = vunpack.c.l.b16 %v1602
    %v1859 = vunpack.c.l.b16 %v1603
    %v1860 = vunpack.c.l.b16 %v1604
    %v1861 = vunpack.c.l.b16 %v1605
    %v1862 = vunpack.c.l.b16 %v1606
    %v1863 = vunpack.c.l.b16 %v1607
    %v1864 = vunpack.c.l.b16 %v1608
    %v1865 = vunpack.c.l.b16 %v1609
    %v1866 = vunpack.c.l.b16 %v1610
    %v1867 = vunpack.c.l.b16 %v1611
    %v1868 = vunpack.c.l.b16 %v1612
    %v1869 = vunpack.c.l.b16 %v1613
    %v1870 = vunpack.c.l.b16 %v1614
    %v1871 = vunpack.c.l.b16 %v1615
    %v1872 = vunpack.c.l.b16 %v1616
    %v1873 = vunpack.c.l.b16 %v1617
    %v1874 = vunpack.c.l.b16 %v1618
    %v1875 = vunpack.c.l.b16 %v1619
    %v1876 = vunpack.c.l.b16 %v1620
    %v1877 = vunpack.c.l.b16 %v1621
    %v1878 = vunpack.c.l.b16 %v1622
    %v1879 = vunpack.c.l.b16 %v1623
    %v1880 = vunpack.c.l.b16 %v1624
    %v1881 = vunpack.c.l.b16 %v1625
    %v1882 = vunpack.c.l.b16 %v1626
    %v1883 = vunpack.c.l.b16 %v1627
    %v1884 = vunpack.c.l.b16 %v1628
    %v1885 = vunpack.c.l.b16 %v1629
    %v1886 = vunpack.c.l.b16 %v1630
    %v1887 = vunpack.c.l.b16 %v1631
    %v1888 = vunpack.c.l.b16 %v1632
    %v1889 = vunpack.c.l.b16 %v1633
    %v1890 = vunpack.c.l.b16 %v1634
    %v1891 = vunpack.c.l.b16 %v1635
    %v1892 = vunpack.c.l.b16 %v1636
    %v1893 = vunpack.c.l.b16 %v1637
    %v1894 = vunpack.c.l.b16 %v1638
    %v1895 = vunpack.c.l.b16 %v1639
    %v1896 = vunpack.c.l.b16 %v1640
    %v1897 = vunpack.c.l.b16 %v1641
    %v1898 = vunpack.c.l.b16 %v1642
    %v1899 = vunpack.c.l.b16 %v1643
    %v1900 = vunpack.c.l.b16 %v1644
    %v1901 = vunpack.c.l.b16 %v1645
    %v1902 = vunpack.c.l.b16 %v1646
    %v1903 = vunpack.c.l.b16 %v1647
    %v1904 = vunpack.c.l.b16 %v1648
    %v1905 = vunpack.c.l.b16 %v1649
    %v1906 = vunpack.c.l.b16 %v1650
    %v1907 = vunpack.c.l.b16 %v1651
    %v1908 = vunpack.c.l.b16 %v1652
    %v1909 = vunpack.c.l.b16 %v1653
    %v1910 = vunpack.c.l.b16 %v1654
    %v1911 = vunpack.c.l.b16 %v1655
    %v1912 = vunpack.c.l.b16 %v1656
    %v1913 = vunpack.c.l.b16 %v1657
    %v1914 = vunpack.c.l.b16 %v1658
    %v1915 = vunpack.c.l.b16 %v1659
    %v1916 = vunpack.c.l.b16 %v1660
    %v1917 = vunpack.c.l.b16 %v1661
    %v1918 = vunpack.c.l.b16 %v1662
    %v1919 = vunpack.c.l.b16 %v1663
    %v1920 = vunpack.c.l.b16 %v1664
    %v1921 = vunpack.c.l.b16 %v1665
    %v1922 = vunpack.c.l.b16 %v1666
    %v1923 = vunpack.c.l.b16 %v1667
    %v1924 = vunpack.c.l.b16 %v1668
    %v1925 = vunpack.c.l.b16 %v1669
    %v1926 = vunpack.c.l.b16 %v1670
    %v1927 = vunpack.c.l.b16 %v1671
    %v1928 = vunpack.c.l.b16 %v1672
    %v1929 = vunpack.c.l.b16 %v1673
    %v1930 = vunpack.c.l.b16 %v1674
    %v1931 = vunpack.c.l.b16 %v1675
    %v1932 = vunpack.c.l.b16 %v1676
    %v1933 = vunpack.c.l.b16 %v1677
    %v1934 = vunpack.c.l.b16 %v1678
    %v1935 = vunpack.c.l.b16 %v1679
    %v1936 = vunpack.c.l.b16 %v1680
    %v1937 = vunpack.c.l.b16 %v1681
    %v1938 = vunpack.c.l.b16 %v1682
    %v1939 = vunpack.c.l.b16 %v1683
    %v1940 = vunpack.c.l.b16 %v1684
    %v1941 = vunpack.c.l.b16 %v1685
    %v1942 = vunpack.c.l.b16 %v1686
    %v1943 = vunpack.c.l.b16 %v1687
    %v1944 = vunpack.c.l.b16 %v1688
    %v1945 = vunpack.c.l.b16 %v1689
    %v1946 = vunpack.c.l.b16 %v1690
    %v1947 = vunpack.c.l.b16 %v1691
    %v1948 = vunpack.c.l.b16 %v1692
    %v1949 = vunpack.c.l.b16 %v1693
    %v1950 = vunpack.c.l.b16 %v1694
    %v1951 = vunpack.c.l.b16 %v1695
    %v1952 = vunpack.c.l.b16 %v1696
    %v1953 = vunpack.c.l.b16 %v1697
    %v1954 = vunpack.c.l.b16 %v1698
    %v1955 = vunpack.c.l.b16 %v1699
    %v1956 = vunpack.c.l.b16 %v1700
    %v1957 = vunpack.c.l.b16 %v1701
    %v1958 = vunpack.c.l.b16 %v1702
    %v1959 = vunpack.c.l.b16 %v1703
    %v1960 = vunpack.c.l.b16 %v1704
    %v1961 = vunpack.c.l.b16 %v1705
    %v1962 = vunpack.c.l.b16 %v1706
    %v1963 = vunpack.c.l.b16 %v1707
    %v1964 = vunpack.c.l.b16 %v1708
    %v1965 = vunpack.c.l.b16 %v1709
    %v1966 = vunpack.c.l.b16 %v1710
    %v1967 = vunpack.c.l.b16 %v1711
    %v1968 = vunpack.c.l.b16 %v1712
    %v1969 = vunpack.c.l.b16 %v1713
    %v1970 = vunpack.c.l.b16 %v1714
    %v1971 = vunpack.c.l.b16 %v1715
    %v1972 = vunpack.c.l.b16 %v1716
    %v1973 = vunpack.c.l.b16 %v1717
    %v1974 = vunpack.c.l.b16 %v1718
    %v1975 = vunpack.c.l.b16 %v1719
    %v1976 = vunpack.c.l.b16 %v1720
    %v1977 = vunpack.c.l.b16 %v1721
    %v1978 = vunpack.c.l.b16 %v1722
    %v1979 = vunpack.c.l.b16 %v1723
    %v1980 = vunpack.c.l.b16 %v1724
    %v1981 = vpack.c.b16 %v1854, %v1853
    %v1982 = vpack.c.b16 %v1856, %v1855
    %v1983 = vpack.c.b16 %v1858, %v1857
    %v1984 = vpack.c.b16 %v1860, %v1859
    %v1985 = vpack.c.b16 %v1862, %v1861
    %v1986 = vpack.c.b16 %v1864, %v1863
    %v1987 = vpack.c.b16 %v1866, %v1865
    %v1988 = vpack.c.b16 %v1868, %v1867
    %v1989 = vpack.c.b16 %v1870, %v1869
    %v1990 = vpack.c.b16 %v1872, %v1871
    %v1991 = vpack.c.b16 %v1874, %v1873
    %v1992 = vpack.c.b16 %v1876, %v1875
    %v1993 = vpack.c.b16 %v1878, %v1877
    %v1994 = vpack.c.b16 %v1880, %v1879
    %v1995 = vpack.c.b16 %v1882, %v1881
    %v1996 = vpack.c.b16 %v1884, %v1883
    %v1997 = vpack.c.b16 %v1886, %v1885
    %v1998 = vpack.c.b16 %v1888, %v1887
    %v1999 = vpack.c.b16 %v1890, %v1889
    %v2000 = vpack.c.b16 %v1892, %v1891
    %v2001 = vpack.c.b16 %v1894, %v1893
    %v2002 = vpack.c.b16 %v1896, %v1895
    %v2003 = vpack.c.b16 %v1898, %v1897
    %v2004 = vpack.c.b16 %v1900, %v1899
    %v2005 = vpack.c.b16 %v1902, %v1901
    %v2006 = vpack.c.b16 %v1904, %v1903
    %v2007 = vpack.c.b16 %v1906, %v1905
    %v2008 = vpack.c.b16 %v1908, %v1907
    %v2009 = vpack.c.b16 %v1910, %v1909
    %v2010 = vpack.c.b16 %v1912, %v1911
    %v2011 = vpack.c.b16 %v1914, %v1913
    %v2012 = vpack.c.b16 %v1916, %v1915
    %v2013 = vpack.c.b16 %v1918, %v1917
    %v2014 = vpack.c.b16 %v1920, %v1919
    %v2015 = vpack.c.b16 %v1922, %v1921
    %v2016 = vpack.c.b16 %v1924, %v1923
    %v2017 = vpack.c.b16 %v1926, %v1925
    %v2018 = vpack.c.b16 %v1928, %v1927
    %v2019 = vpack.c.b16 %v1930, %v1929
    %v2020 = vpack.c.b16 %v1932, %v1931
    %v2021 = vpack.c.b16 %v1934, %v1933
    %v2022 = vpack.c.b16 %v1936, %v1935
    %v2023 = vpack.c.b16 %v1938, %v1937
    %v2024 = vpack.c.b16 %v1940, %v1939
    %v2025 = vpack.c.b16 %v1942, %v1941
    %v2026 = vpack.c.b16 %v1944, %v1943
    %v2027 = vpack.c.b16 %v1946, %v1945
    %v2028 = vpack.c.b16 %v1948, %v1947
    %v2029 = vpack.c.b16 %v1950, %v1949
    %v2030 = vpack.c.b16 %v1952, %v1951
    %v2031 = vpack.c.b16 %v1954, %v1953
    %v2032 = vpack.c.b16 %v1956, %v1955
    %v2033 = vpack.c.b16 %v1958, %v1957
    %v2034 = vpack.c.b16 %v1960, %v1959
    %v2035 = vpack.c.b16 %v1962, %v1961
    %v2036 = vpack.c.b16 %v1964, %v1963
    %v2037 = vpack.c.b16 %v1966, %v1965
    %v2038 = vpack.c.b16 %v1968, %v1967
    %v2039 = vpack.c.b16 %v1970, %v1969
    %v2040 = vpack.c.b16 %v1972, %v1971
    %v2041 = vpack.c.b16 %v1974, %v1973
    %v2042 = vpack.c.b16 %v1976, %v1975
    %v2043 = vpack.c.b16 %v1978, %v1977
    %v2044 = vpack.c.b16 %v1980, %v1979
    %2109 = vmatprep.subr.bf16.mxu0 0
    %2110 = vmatpush1.bf16.msra.mxu0 %v1981
    %2111 = vmatprep.subr.bf16.mxu0 0
    %2112 = vmatpush1.bf16.msra.mxu0 %v1982
    %2113 = vmatprep.subr.bf16.mxu0 0
    %2114 = vmatpush1.bf16.msra.mxu0 %v1983
    %2115 = vmatprep.subr.bf16.mxu0 0
    %2116 = vmatpush1.bf16.msra.mxu0 %v1984
    %2117 = vmatprep.subr.bf16.mxu0 0
    %2118 = vmatpush1.bf16.msra.mxu0 %v1985
    %2119 = vmatprep.subr.bf16.mxu0 0
    %2120 = vmatpush1.bf16.msra.mxu0 %v1986
    %2121 = vmatprep.subr.bf16.mxu0 0
    %2122 = vmatpush1.bf16.msra.mxu0 %v1987
    %2123 = vmatprep.subr.bf16.mxu0 0
    %2124 = vmatpush1.bf16.msra.mxu0 %v1988
    %2125 = vmatprep.subr.bf16.mxu0 0
    %2126 = vmatpush1.bf16.msra.mxu0 %v1989
    %2127 = vmatprep.subr.bf16.mxu0 0
    %2128 = vmatpush1.bf16.msra.mxu0 %v1990
    %2129 = vmatprep.subr.bf16.mxu0 0
    %2130 = vmatpush1.bf16.msra.mxu0 %v1991
    %2131 = vmatprep.subr.bf16.mxu0 0
    %2132 = vmatpush1.bf16.msra.mxu0 %v1992
    %2133 = vmatprep.subr.bf16.mxu0 0
    %2134 = vmatpush1.bf16.msra.mxu0 %v1993
    %2135 = vmatprep.subr.bf16.mxu0 0
    %2136 = vmatpush1.bf16.msra.mxu0 %v1994
    %2137 = vmatprep.subr.bf16.mxu0 0
    %2138 = vmatpush1.bf16.msra.mxu0 %v1995
    %2139 = vmatprep.subr.bf16.mxu0 0
    %2140 = vmatpush1.bf16.msra.mxu0 %v1996
    %2141 = vmatprep.mubr.bf16.mxu0 %v1590
    %2142 = vmatmul.mubr.bf16.gmra.mrb[0].mxu0 %v1589
    %v2143 = vpop.f32.mrb[0].mxu0
    %v2144 = vadd.f32 0.0, %v2143
    %v2145 = vpop.f32.mrb[0].mxu0
    %v2146 = vpop.f32.mrb[0].mxu0
    %v2147 = vpop.f32.mrb[0].mxu0
    %2148 = vdwg.mxu0
    %2149 = vmatprep.subr.bf16.mxu0 0
    %2150 = vmatpush1.bf16.msra.mxu0 %v1997
    %2151 = vmatprep.subr.bf16.mxu0 0
    %2152 = vmatpush1.bf16.msra.mxu0 %v1998
    %2153 = vmatprep.subr.bf16.mxu0 0
    %2154 = vmatpush1.bf16.msra.mxu0 %v1999
    %2155 = vmatprep.subr.bf16.mxu0 0
    %2156 = vmatpush1.bf16.msra.mxu0 %v2000
    %2157 = vmatprep.subr.bf16.mxu0 0
    %2158 = vmatpush1.bf16.msra.mxu0 %v2001
    %2159 = vmatprep.subr.bf16.mxu0 0
    %2160 = vmatpush1.bf16.msra.mxu0 %v2002
    %2161 = vmatprep.subr.bf16.mxu0 0
    %2162 = vmatpush1.bf16.msra.mxu0 %v2003
    %2163 = vmatprep.subr.bf16.mxu0 0
    %2164 = vmatpush1.bf16.msra.mxu0 %v2004
    %2165 = vmatprep.subr.bf16.mxu0 0
    %2166 = vmatpush1.bf16.msra.mxu0 %v2005
    %2167 = vmatprep.subr.bf16.mxu0 0
    %2168 = vmatpush1.bf16.msra.mxu0 %v2006
    %2169 = vmatprep.subr.bf16.mxu0 0
    %2170 = vmatpush1.bf16.msra.mxu0 %v2007
    %2171 = vmatprep.subr.bf16.mxu0 0
    %2172 = vmatpush1.bf16.msra.mxu0 %v2008
    %2173 = vmatprep.subr.bf16.mxu0 0
    %2174 = vmatpush1.bf16.msra.mxu0 %v2009
    %2175 = vmatprep.subr.bf16.mxu0 0
    %2176 = vmatpush1.bf16.msra.mxu0 %v2010
    %2177 = vmatprep.subr.bf16.mxu0 0
    %2178 = vmatpush1.bf16.msra.mxu0 %v2011
    %2179 = vmatprep.subr.bf16.mxu0 0
    %2180 = vmatpush1.bf16.msra.mxu0 %v2012
    %2181 = vmatprep.mubr.bf16.mxu0 %v1592
    %2182 = vmatmul.mubr.bf16.gmra.mrb[0].mxu0 %v1591
    %v2183 = vpop.f32.mrb[0].mxu0
    %v2184 = vadd.f32 %v2144, %v2183
    %v2185 = vpop.f32.mrb[0].mxu0
    %v2186 = vpop.f32.mrb[0].mxu0
    %v2187 = vpop.f32.mrb[0].mxu0
    %2188 = vdwg.mxu0
    %2189 = vmatprep.subr.bf16.mxu0 0
    %2190 = vmatpush1.bf16.msra.mxu0 %v2013
    %2191 = vmatprep.subr.bf16.mxu0 0
    %2192 = vmatpush1.bf16.msra.mxu0 %v2014
    %2193 = vmatprep.subr.bf16.mxu0 0
    %2194 = vmatpush1.bf16.msra.mxu0 %v2015
    %2195 = vmatprep.subr.bf16.mxu0 0
    %2196 = vmatpush1.bf16.msra.mxu0 %v2016
    %2197 = vmatprep.subr.bf16.mxu0 0
    %2198 = vmatpush1.bf16.msra.mxu0 %v2017
    %2199 = vmatprep.subr.bf16.mxu0 0
    %2200 = vmatpush1.bf16.msra.mxu0 %v2018
    %2201 = vmatprep.subr.bf16.mxu0 0
    %2202 = vmatpush1.bf16.msra.mxu0 %v2019
    %2203 = vmatprep.subr.bf16.mxu0 0
    %2204 = vmatpush1.bf16.msra.mxu0 %v2020
    %2205 = vmatprep.subr.bf16.mxu0 0
    %2206 = vmatpush1.bf16.msra.mxu0 %v2021
    %2207 = vmatprep.subr.bf16.mxu0 0
    %2208 = vmatpush1.bf16.msra.mxu0 %v2022
    %2209 = vmatprep.subr.bf16.mxu0 0
    %2210 = vmatpush1.bf16.msra.mxu0 %v2023
    %2211 = vmatprep.subr.bf16.mxu0 0
    %2212 = vmatpush1.bf16.msra.mxu0 %v2024
    %2213 = vmatprep.subr.bf16.mxu0 0
    %2214 = vmatpush1.bf16.msra.mxu0 %v2025
    %2215 = vmatprep.subr.bf16.mxu0 0
    %2216 = vmatpush1.bf16.msra.mxu0 %v2026
    %2217 = vmatprep.subr.bf16.mxu0 0
    %2218 = vmatpush1.bf16.msra.mxu0 %v2027
    %2219 = vmatprep.subr.bf16.mxu0 0
    %2220 = vmatpush1.bf16.msra.mxu0 %v2028
    %2221 = vmatprep.mubr.bf16.mxu0 %v1594
    %2222 = vmatmul.mubr.bf16.gmra.mrb[0].mxu0 %v1593
    %v2223 = vpop.f32.mrb[0].mxu0
    %v2224 = vadd.f32 %v2184, %v2223
    %v2225 = vpop.f32.mrb[0].mxu0
    %v2226 = vpop.f32.mrb[0].mxu0
    %v2227 = vpop.f32.mrb[0].mxu0
    %2228 = vdwg.mxu0
    %2229 = vmatprep.subr.bf16.mxu0 0
    %2230 = vmatpush1.bf16.msra.mxu0 %v2029
    %2231 = vmatprep.subr.bf16.mxu0 0
    %2232 = vmatpush1.bf16.msra.mxu0 %v2030
    %2233 = vmatprep.subr.bf16.mxu0 0
    %2234 = vmatpush1.bf16.msra.mxu0 %v2031
    %2235 = vmatprep.subr.bf16.mxu0 0
    %2236 = vmatpush1.bf16.msra.mxu0 %v2032
    %2237 = vmatprep.subr.bf16.mxu0 0
    %2238 = vmatpush1.bf16.msra.mxu0 %v2033
    %2239 = vmatprep.subr.bf16.mxu0 0
    %2240 = vmatpush1.bf16.msra.mxu0 %v2034
    %2241 = vmatprep.subr.bf16.mxu0 0
    %2242 = vmatpush1.bf16.msra.mxu0 %v2035
    %2243 = vmatprep.subr.bf16.mxu0 0
    %2244 = vmatpush1.bf16.msra.mxu0 %v2036
    %2245 = vmatprep.subr.bf16.mxu0 0
    %2246 = vmatpush1.bf16.msra.mxu0 %v2037
    %2247 = vmatprep.subr.bf16.mxu0 0
    %2248 = vmatpush1.bf16.msra.mxu0 %v2038
    %2249 = vmatprep.subr.bf16.mxu0 0
    %2250 = vmatpush1.bf16.msra.mxu0 %v2039
    %2251 = vmatprep.subr.bf16.mxu0 0
    %2252 = vmatpush1.bf16.msra.mxu0 %v2040
    %2253 = vmatprep.subr.bf16.mxu0 0
    %2254 = vmatpush1.bf16.msra.mxu0 %v2041
    %2255 = vmatprep.subr.bf16.mxu0 0
    %2256 = vmatpush1.bf16.msra.mxu0 %v2042
    %2257 = vmatprep.subr.bf16.mxu0 0
    %2258 = vmatpush1.bf16.msra.mxu0 %v2043
    %2259 = vmatprep.subr.bf16.mxu0 0
    %2260 = vmatpush1.bf16.msra.mxu0 %v2044
    %2261 = vmatprep.mubr.bf16.mxu0 %v1596
    %2262 = vmatmul.mubr.bf16.gmra.mrb[0].mxu0 %v1595
    %v2263 = vpop.f32.mrb[0].mxu0
    %v2264 = vadd.f32 %v2224, %v2263
    %v2265 = vpop.f32.mrb[0].mxu0
    %v2266 = vpop.f32.mrb[0].mxu0
    %v2267 = vpop.f32.mrb[0].mxu0
    %2268 = vdwg.mxu0
    %v2269 = vmul.f32 %v2264, 0.001953125
    %v2270 = vmul.f32 %v2269, %v2269
    %v2272 = vrot.slane %v2270, 7
    %v2274 = vsub.f32 %v2269, %v2272
    %v2275 = vadd.f32 %v2274, 1e-05
    %v2276 = vrsqrt.pop %v2275
    %v2277 = vld [vmem:[#allocation12] sm:$0x1]
    %v2279 = vrot.slane %v2276, 1
    %v2281 = vmul.f32 %v2277, %v2279
    %v2282 = vld [vmem:[#allocation12 + $0x1] sm:$0x1]
    %v2283 = vmul.f32 %v2269, %v2281
    %v2284 = vsub.f32 %v2282, %v2283
    %v2286 = vrot.slane %v2284, 7
    %v2288 = vsel %vm341, %v2281, %v2286
    %v2289 = vpack.c.bf16 %v2288, %v2288
    %v2290 = vld [vmem:[#allocation13] sm:$0xff]
    %v2291 = vld [vmem:[#allocation13 + $0x8] sm:$0xff]
    %v2292 = vld [vmem:[#allocation13 + $0x10] sm:$0xff]
    %v2293 = vld [vmem:[#allocation13 + $0x18] sm:$0xff]
    %v2294 = vld [vmem:[#allocation13 + $0x20] sm:$0xff]
    %v2295 = vld [vmem:[#allocation13 + $0x28] sm:$0xff]
    %v2296 = vld [vmem:[#allocation13 + $0x30] sm:$0xff]
    %v2297 = vld [vmem:[#allocation13 + $0x38] sm:$0xff]
    %v2306 = vunpack.c.l.b16 %v2290
    %v2307 = vunpack.c.h.b16 %v2290
    %v2308 = vunpack.c.l.b16 %v2291
    %v2309 = vunpack.c.h.b16 %v2291
    %v2310 = vunpack.c.l.b16 %v2292
    %v2311 = vunpack.c.h.b16 %v2292
    %v2312 = vunpack.c.l.b16 %v2293
    %v2313 = vunpack.c.h.b16 %v2293
    %v2314 = vunpack.c.l.b16 %v2294
    %v2315 = vunpack.c.h.b16 %v2294
    %v2316 = vunpack.c.l.b16 %v2295
    %v2317 = vunpack.c.h.b16 %v2295
    %v2318 = vunpack.c.l.b16 %v2296
    %v2319 = vunpack.c.h.b16 %v2296
    %v2320 = vunpack.c.l.b16 %v2297
    %v2321 = vunpack.c.h.b16 %v2297
    %v2322 = vpack.c.b16 %v2314, %v2306
    %v2323 = vpack.c.b16 %v2315, %v2307
    %v2324 = vpack.c.b16 %v2316, %v2308
    %v2325 = vpack.c.b16 %v2317, %v2309
    %v2326 = vpack.c.b16 %v2318, %v2310
    %v2327 = vpack.c.b16 %v2319, %v2311
    %v2328 = vpack.c.b16 %v2320, %v2312
    %v2329 = vpack.c.b16 %v2321, %v2313
    %vm2338 = vcmask 130048
    %v2340 = vsel %vm2338, %v2289, 0
    %2342 = vmatprep.subr.bf16.mxu0 %v2323
    %2343 = vmatpush1.bf16.msra.mxu0 %v2322
    %2344 = vmatprep.subr.bf16.mxu0 0
    %2345 = vmatpush1.bf16.msra.mxu0 0
    %2346 = vmatprep.subr.bf16.mxu0 0
    %2347 = vmatpush1.bf16.msra.mxu0 0
    %2348 = vmatprep.subr.bf16.mxu0 0
    %2349 = vmatpush1.bf16.msra.mxu0 0
    %2350 = vmatprep.subr.bf16.mxu0 0
    %2351 = vmatpush1.bf16.msra.mxu0 0
    %2352 = vmatprep.subr.bf16.mxu0 0
    %2353 = vmatpush1.bf16.msra.mxu0 0
    %2354 = vmatprep.subr.bf16.mxu0 0
    %2355 = vmatpush1.bf16.msra.mxu0 0
    %2356 = vmatprep.subr.bf16.mxu0 0
    %2357 = vmatpush1.bf16.msra.mxu0 0
    %2358 = vmatprep.subr.bf16.mxu0 0
    %2359 = vmatpush1.bf16.msra.mxu0 0
    %2360 = vmatprep.subr.bf16.mxu0 0
    %2361 = vmatpush1.bf16.msra.mxu0 0
    %2362 = vmatprep.subr.bf16.mxu0 0
    %2363 = vmatpush1.bf16.msra.mxu0 0
    %2364 = vmatprep.subr.bf16.mxu0 0
    %2365 = vmatpush1.bf16.msra.mxu0 0
    %2366 = vmatprep.subr.bf16.mxu0 0
    %2367 = vmatpush1.bf16.msra.mxu0 0
    %2368 = vmatprep.subr.bf16.mxu0 0
    %2369 = vmatpush1.bf16.msra.mxu0 0
    %2370 = vmatprep.subr.bf16.mxu0 0
    %2371 = vmatpush1.bf16.msra.mxu0 0
    %2372 = vmatprep.subr.bf16.mxu0 0
    %2373 = vmatpush1.bf16.msra.mxu0 0
    %2374 = vmatprep.mubr.bf16.mxu0 0
    %2375 = vmatmul.mubr.bf16.gmra.mrb[0].mxu0 %v2340
    %v2376 = vpop.f32.mrb[0].mxu0
    %v2377 = vadd.f32 0.0, %v2376
    %v2378 = vpop.f32.mrb[0].mxu0
    %v2379 = vadd.f32 0.0, %v2378
    %v2380 = vpop.f32.mrb[0].mxu0
    %v2381 = vpop.f32.mrb[0].mxu0
    %2382 = vdwg.mxu0
    %2383 = vmatprep.subr.bf16.mxu0 %v2325
    %2384 = vmatpush1.bf16.msra.mxu0 %v2324
    %2385 = vmatprep.subr.bf16.mxu0 0
    %2386 = vmatpush1.bf16.msra.mxu0 0
    %2387 = vmatprep.subr.bf16.mxu0 0
    %2388 = vmatpush1.bf16.msra.mxu0 0
    %2389 = vmatprep.subr.bf16.mxu0 0
    %2390 = vmatpush1.bf16.msra.mxu0 0
    %2391 = vmatprep.subr.bf16.mxu0 0
    %2392 = vmatpush1.bf16.msra.mxu0 0
    %2393 = vmatprep.subr.bf16.mxu0 0
    %2394 = vmatpush1.bf16.msra.mxu0 0
    %2395 = vmatprep.subr.bf16.mxu0 0
    %2396 = vmatpush1.bf16.msra.mxu0 0
    %2397 = vmatprep.subr.bf16.mxu0 0
    %2398 = vmatpush1.bf16.msra.mxu0 0
    %2399 = vmatprep.subr.bf16.mxu0 0
    %2400 = vmatpush1.bf16.msra.mxu0 0
    %2401 = vmatprep.subr.bf16.mxu0 0
    %2402 = vmatpush1.bf16.msra.mxu0 0
    %2403 = vmatprep.subr.bf16.mxu0 0
    %2404 = vmatpush1.bf16.msra.mxu0 0
    %2405 = vmatprep.subr.bf16.mxu0 0
    %2406 = vmatpush1.bf16.msra.mxu0 0
    %2407 = vmatprep.subr.bf16.mxu0 0
    %2408 = vmatpush1.bf16.msra.mxu0 0
    %2409 = vmatprep.subr.bf16.mxu0 0
    %2410 = vmatpush1.bf16.msra.mxu0 0
    %2411 = vmatprep.subr.bf16.mxu0 0
    %2412 = vmatpush1.bf16.msra.mxu0 0
    %2413 = vmatprep.subr.bf16.mxu0 0
    %2414 = vmatpush1.bf16.msra.mxu0 0
    %2415 = vmatprep.mubr.bf16.mxu0 0
    %2416 = vmatmul.mubr.bf16.gmra.mrb[0].mxu0 %v2340
    %v2417 = vpop.f32.mrb[0].mxu0
    %v2418 = vadd.f32 0.0, %v2417
    %v2419 = vpop.f32.mrb[0].mxu0
    %v2420 = vadd.f32 0.0, %v2419
    %v2421 = vpop.f32.mrb[0].mxu0
    %v2422 = vpop.f32.mrb[0].mxu0
    %2423 = vdwg.mxu0
    %2424 = vmatprep.subr.bf16.mxu0 %v2327
    %2425 = vmatpush1.bf16.msra.mxu0 %v2326
    %2426 = vmatprep.subr.bf16.mxu0 0
    %2427 = vmatpush1.bf16.msra.mxu0 0
    %2428 = vmatprep.subr.bf16.mxu0 0
    %2429 = vmatpush1.bf16.msra.mxu0 0
    %2430 = vmatprep.subr.bf16.mxu0 0
    %2431 = vmatpush1.bf16.msra.mxu0 0
    %2432 = vmatprep.subr.bf16.mxu0 0
    %2433 = vmatpush1.bf16.msra.mxu0 0
    %2434 = vmatprep.subr.bf16.mxu0 0
    %2435 = vmatpush1.bf16.msra.mxu0 0
    %2436 = vmatprep.subr.bf16.mxu0 0
    %2437 = vmatpush1.bf16.msra.mxu0 0
    %2438 = vmatprep.subr.bf16.mxu0 0
    %2439 = vmatpush1.bf16.msra.mxu0 0
    %2440 = vmatprep.subr.bf16.mxu0 0
    %2441 = vmatpush1.bf16.msra.mxu0 0
    %2442 = vmatprep.subr.bf16.mxu0 0
    %2443 = vmatpush1.bf16.msra.mxu0 0
    %2444 = vmatprep.subr.bf16.mxu0 0
    %2445 = vmatpush1.bf16.msra.mxu0 0
    %2446 = vmatprep.subr.bf16.mxu0 0
    %2447 = vmatpush1.bf16.msra.mxu0 0
    %2448 = vmatprep.subr.bf16.mxu0 0
    %2449 = vmatpush1.bf16.msra.mxu0 0
    %2450 = vmatprep.subr.bf16.mxu0 0
    %2451 = vmatpush1.bf16.msra.mxu0 0
    %2452 = vmatprep.subr.bf16.mxu0 0
    %2453 = vmatpush1.bf16.msra.mxu0 0
    %2454 = vmatprep.subr.bf16.mxu0 0
    %2455 = vmatpush1.bf16.msra.mxu0 0
    %2456 = vmatprep.mubr.bf16.mxu0 0
    %2457 = vmatmul.mubr.bf16.gmra.mrb[0].mxu0 %v2340
    %v2458 = vpop.f32.mrb[0].mxu0
    %v2459 = vadd.f32 0.0, %v2458
    %v2460 = vpop.f32.mrb[0].mxu0
    %v2461 = vadd.f32 0.0, %v2460
    %v2462 = vpop.f32.mrb[0].mxu0
    %v2463 = vpop.f32.mrb[0].mxu0
    %2464 = vdwg.mxu0
    %2465 = vmatprep.subr.bf16.mxu0 %v2329
    %2466 = vmatpush1.bf16.msra.mxu0 %v2328
    %2467 = vmatprep.subr.bf16.mxu0 0
    %2468 = vmatpush1.bf16.msra.mxu0 0
    %2469 = vmatprep.subr.bf16.mxu0 0
    %2470 = vmatpush1.bf16.msra.mxu0 0
    %2471 = vmatprep.subr.bf16.mxu0 0
    %2472 = vmatpush1.bf16.msra.mxu0 0
    %2473 = vmatprep.subr.bf16.mxu0 0
    %2474 = vmatpush1.bf16.msra.mxu0 0
    %2475 = vmatprep.subr.bf16.mxu0 0
    %2476 = vmatpush1.bf16.msra.mxu0 0
    %2477 = vmatprep.subr.bf16.mxu0 0
    %2478 = vmatpush1.bf16.msra.mxu0 0
    %2479 = vmatprep.subr.bf16.mxu0 0
    %2480 = vmatpush1.bf16.msra.mxu0 0
    %2481 = vmatprep.subr.bf16.mxu0 0
    %2482 = vmatpush1.bf16.msra.mxu0 0
    %2483 = vmatprep.subr.bf16.mxu0 0
    %2484 = vmatpush1.bf16.msra.mxu0 0
    %2485 = vmatprep.subr.bf16.mxu0 0
    %2486 = vmatpush1.bf16.msra.mxu0 0
    %2487 = vmatprep.subr.bf16.mxu0 0
    %2488 = vmatpush1.bf16.msra.mxu0 0
    %2489 = vmatprep.subr.bf16.mxu0 0
    %2490 = vmatpush1.bf16.msra.mxu0 0
    %2491 = vmatprep.subr.bf16.mxu0 0
    %2492 = vmatpush1.bf16.msra.mxu0 0
    %2493 = vmatprep.subr.bf16.mxu0 0
    %2494 = vmatpush1.bf16.msra.mxu0 0
    %2495 = vmatprep.subr.bf16.mxu0 0
    %2496 = vmatpush1.bf16.msra.mxu0 0
    %2497 = vmatprep.mubr.bf16.mxu0 0
    %2498 = vmatmul.mubr.bf16.gmra.mrb[0].mxu0 %v2340
    %v2499 = vpop.f32.mrb[0].mxu0
    %v2500 = vadd.f32 0.0, %v2499
    %v2501 = vpop.f32.mrb[0].mxu0
    %v2502 = vadd.f32 0.0, %v2501
    %v2503 = vpop.f32.mrb[0].mxu0
    %v2504 = vpop.f32.mrb[0].mxu0
    %2505 = vdwg.mxu0
    %v2506 = vlaneseq
    %v2507 = vshrl.u32 %v2506, 7
    %v2508 = vsub.s32 0, %v2507
    %v2509 = vrot.slane %v2377, %v2508
    %v2510 = vlaneseq
    %v2511 = vshrl.u32 %v2510, 7
    %v2512 = vsub.s32 0, %v2511
    %v2513 = vrot.slane %v2379, %v2512
    %v2514 = vlaneseq
    %v2515 = vshrl.u32 %v2514, 7
    %v2516 = vsub.s32 0, %v2515
    %v2517 = vrot.slane %v2418, %v2516
    %v2518 = vlaneseq
    %v2519 = vshrl.u32 %v2518, 7
    %v2520 = vsub.s32 0, %v2519
    %v2521 = vrot.slane %v2420, %v2520
    %v2522 = vlaneseq
    %v2523 = vshrl.u32 %v2522, 7
    %v2524 = vsub.s32 0, %v2523
    %v2525 = vrot.slane %v2459, %v2524
    %v2526 = vlaneseq
    %v2527 = vshrl.u32 %v2526, 7
    %v2528 = vsub.s32 0, %v2527
    %v2529 = vrot.slane %v2461, %v2528
    %v2530 = vlaneseq
    %v2531 = vshrl.u32 %v2530, 7
    %v2532 = vsub.s32 0, %v2531
    %v2533 = vrot.slane %v2500, %v2532
    %v2534 = vlaneseq
    %v2535 = vshrl.u32 %v2534, 7
    %v2536 = vsub.s32 0, %v2535
    %v2537 = vrot.slane %v2502, %v2536
    %v2538 = vmul.f32 %v1225, %v2509
    %v2539 = vmul.f32 %v1227, %v2513
    %v2540 = vmul.f32 %v1307, %v2517
    %v2541 = vmul.f32 %v1309, %v2521
    %v2542 = vmul.f32 %v1389, %v2525
    %v2543 = vmul.f32 %v1391, %v2529
    %v2544 = vmul.f32 %v1471, %v2533
    %v2545 = vmul.f32 %v1473, %v2537
    %v2546 = vlaneseq
    %v2547 = vshrl.u32 %v2546, 7
    %v2548 = vsub.s32 1, %v2547
    %v2549 = vrot.slane %v2377, %v2548
    %v2550 = vlaneseq
    %v2551 = vshrl.u32 %v2550, 7
    %v2552 = vsub.s32 1, %v2551
    %v2553 = vrot.slane %v2379, %v2552
    %v2554 = vlaneseq
    %v2555 = vshrl.u32 %v2554, 7
    %v2556 = vsub.s32 1, %v2555
    %v2557 = vrot.slane %v2418, %v2556
    %v2558 = vlaneseq
    %v2559 = vshrl.u32 %v2558, 7
    %v2560 = vsub.s32 1, %v2559
    %v2561 = vrot.slane %v2420, %v2560
    %v2562 = vlaneseq
    %v2563 = vshrl.u32 %v2562, 7
    %v2564 = vsub.s32 1, %v2563
    %v2565 = vrot.slane %v2459, %v2564
    %v2566 = vlaneseq
    %v2567 = vshrl.u32 %v2566, 7
    %v2568 = vsub.s32 1, %v2567
    %v2569 = vrot.slane %v2461, %v2568
    %v2570 = vlaneseq
    %v2571 = vshrl.u32 %v2570, 7
    %v2572 = vsub.s32 1, %v2571
    %v2573 = vrot.slane %v2500, %v2572
    %v2574 = vlaneseq
    %v2575 = vshrl.u32 %v2574, 7
    %v2576 = vsub.s32 1, %v2575
    %v2577 = vrot.slane %v2502, %v2576
    %v2578 = vadd.f32 %v2538, %v2549
    %v2579 = vadd.f32 %v2539, %v2553
    %v2580 = vadd.f32 %v2540, %v2557
    %v2581 = vadd.f32 %v2541, %v2561
    %v2582 = vadd.f32 %v2542, %v2565
    %v2583 = vadd.f32 %v2543, %v2569
    %v2584 = vadd.f32 %v2544, %v2573
    %v2585 = vadd.f32 %v2545, %v2577
    %v2586 = vmax.f32 %v2578, 0.0
    %v2587 = vmax.f32 %v2579, 0.0
    %v2588 = vmax.f32 %v2580, 0.0
    %v2589 = vmax.f32 %v2581, 0.0
    %v2590 = vmax.f32 %v2582, 0.0
    %v2591 = vmax.f32 %v2583, 0.0
    %v2592 = vmax.f32 %v2584, 0.0
    %v2593 = vmax.f32 %v2585, 0.0
    %s2594 = smul.u32 4, 128
    %s2595 = smul.u32 %s2594, 6
    %s2596 = sshll.u32 %s2595, 4
    %2597 = dma.done %s141, %s2596
    %v2598 = vpack.c.bf16 %v2586, %v2586
    %v2599 = vpack.c.bf16 %v2587, %v2587
    %v2600 = vpack.c.bf16 %v2588, %v2588
    %v2601 = vpack.c.bf16 %v2589, %v2589
    %v2602 = vpack.c.bf16 %v2590, %v2590
    %v2603 = vpack.c.bf16 %v2591, %v2591
    %v2604 = vpack.c.bf16 %v2592, %v2592
    %v2605 = vpack.c.bf16 %v2593, %v2593
    %v2606 = vld [vmem:[#allocation3] sm:$0xff]
    %v2607 = vld [vmem:[#allocation3 + $0x8] sm:$0xff]
    %v2608 = vld [vmem:[#allocation3 + $0x10] sm:$0xff]
    %v2609 = vld [vmem:[#allocation3 + $0x18] sm:$0xff]
    %v2610 = vld [vmem:[#allocation3 + $0x20] sm:$0xff]
    %v2611 = vld [vmem:[#allocation3 + $0x28] sm:$0xff]
    %v2612 = vld [vmem:[#allocation3 + $0x30] sm:$0xff]
    %v2613 = vld [vmem:[#allocation3 + $0x38] sm:$0xff]
    %v2614 = vld [vmem:[#allocation3 + $0x40] sm:$0xff]
    %v2615 = vld [vmem:[#allocation3 + $0x48] sm:$0xff]
    %v2616 = vld [vmem:[#allocation3 + $0x50] sm:$0xff]
    %v2617 = vld [vmem:[#allocation3 + $0x58] sm:$0xff]
    %v2618 = vld [vmem:[#allocation3 + $0x60] sm:$0xff]
    %v2619 = vld [vmem:[#allocation3 + $0x68] sm:$0xff]
    %v2620 = vld [vmem:[#allocation3 + $0x70] sm:$0xff]
    %v2621 = vld [vmem:[#allocation3 + $0x78] sm:$0xff]
    %v2622 = vld [vmem:[#allocation3 + $0x80] sm:$0xff]
    %v2623 = vld [vmem:[#allocation3 + $0x88] sm:$0xff]
    %v2624 = vld [vmem:[#allocation3 + $0x90] sm:$0xff]
    %v2625 = vld [vmem:[#allocation3 + $0x98] sm:$0xff]
    %v2626 = vld [vmem:[#allocation3 + $0xa0] sm:$0xff]
    %v2627 = vld [vmem:[#allocation3 + $0xa8] sm:$0xff]
    %v2628 = vld [vmem:[#allocation3 + $0xb0] sm:$0xff]
    %v2629 = vld [vmem:[#allocation3 + $0xb8] sm:$0xff]
    %v2630 = vld [vmem:[#allocation3 + $0xc0] sm:$0xff]
    %v2631 = vld [vmem:[#allocation3 + $0xc8] sm:$0xff]
    %v2632 = vld [vmem:[#allocation3 + $0xd0] sm:$0xff]
    %v2633 = vld [vmem:[#allocation3 + $0xd8] sm:$0xff]
    %v2634 = vld [vmem:[#allocation3 + $0xe0] sm:$0xff]
    %v2635 = vld [vmem:[#allocation3 + $0xe8] sm:$0xff]
    %v2636 = vld [vmem:[#allocation3 + $0xf0] sm:$0xff]
    %v2637 = vld [vmem:[#allocation3 + $0xf8] sm:$0xff]
    %v2638 = vld [vmem:[#allocation3 + $0x100] sm:$0xff]
    %v2639 = vld [vmem:[#allocation3 + $0x108] sm:$0xff]
    %v2640 = vld [vmem:[#allocation3 + $0x110] sm:$0xff]
    %v2641 = vld [vmem:[#allocation3 + $0x118] sm:$0xff]
    %v2642 = vld [vmem:[#allocation3 + $0x120] sm:$0xff]
    %v2643 = vld [vmem:[#allocation3 + $0x128] sm:$0xff]
    %v2644 = vld [vmem:[#allocation3 + $0x130] sm:$0xff]
    %v2645 = vld [vmem:[#allocation3 + $0x138] sm:$0xff]
    %v2646 = vld [vmem:[#allocation3 + $0x140] sm:$0xff]
    %v2647 = vld [vmem:[#allocation3 + $0x148] sm:$0xff]
    %v2648 = vld [vmem:[#allocation3 + $0x150] sm:$0xff]
    %v2649 = vld [vmem:[#allocation3 + $0x158] sm:$0xff]
    %v2650 = vld [vmem:[#allocation3 + $0x160] sm:$0xff]
    %v2651 = vld [vmem:[#allocation3 + $0x168] sm:$0xff]
    %v2652 = vld [vmem:[#allocation3 + $0x170] sm:$0xff]
    %v2653 = vld [vmem:[#allocation3 + $0x178] sm:$0xff]
    %v2654 = vld [vmem:[#allocation3 + $0x180] sm:$0xff]
    %v2655 = vld [vmem:[#allocation3 + $0x188] sm:$0xff]
    %v2656 = vld [vmem:[#allocation3 + $0x190] sm:$0xff]
    %v2657 = vld [vmem:[#allocation3 + $0x198] sm:$0xff]
    %v2658 = vld [vmem:[#allocation3 + $0x1a0] sm:$0xff]
    %v2659 = vld [vmem:[#allocation3 + $0x1a8] sm:$0xff]
    %v2660 = vld [vmem:[#allocation3 + $0x1b0] sm:$0xff]
    %v2661 = vld [vmem:[#allocation3 + $0x1b8] sm:$0xff]
    %v2662 = vld [vmem:[#allocation3 + $0x1c0] sm:$0xff]
    %v2663 = vld [vmem:[#allocation3 + $0x1c8] sm:$0xff]
    %v2664 = vld [vmem:[#allocation3 + $0x1d0] sm:$0xff]
    %v2665 = vld [vmem:[#allocation3 + $0x1d8] sm:$0xff]
    %v2666 = vld [vmem:[#allocation3 + $0x1e0] sm:$0xff]
    %v2667 = vld [vmem:[#allocation3 + $0x1e8] sm:$0xff]
    %v2668 = vld [vmem:[#allocation3 + $0x1f0] sm:$0xff]
    %v2669 = vld [vmem:[#allocation3 + $0x1f8] sm:$0xff]
    %v2670 = vld [vmem:[#allocation3 + $0x200] sm:$0xff]
    %v2671 = vld [vmem:[#allocation3 + $0x208] sm:$0xff]
    %v2672 = vld [vmem:[#allocation3 + $0x210] sm:$0xff]
    %v2673 = vld [vmem:[#allocation3 + $0x218] sm:$0xff]
    %v2674 = vld [vmem:[#allocation3 + $0x220] sm:$0xff]
    %v2675 = vld [vmem:[#allocation3 + $0x228] sm:$0xff]
    %v2676 = vld [vmem:[#allocation3 + $0x230] sm:$0xff]
    %v2677 = vld [vmem:[#allocation3 + $0x238] sm:$0xff]
    %v2678 = vld [vmem:[#allocation3 + $0x240] sm:$0xff]
    %v2679 = vld [vmem:[#allocation3 + $0x248] sm:$0xff]
    %v2680 = vld [vmem:[#allocation3 + $0x250] sm:$0xff]
    %v2681 = vld [vmem:[#allocation3 + $0x258] sm:$0xff]
    %v2682 = vld [vmem:[#allocation3 + $0x260] sm:$0xff]
    %v2683 = vld [vmem:[#allocation3 + $0x268] sm:$0xff]
    %v2684 = vld [vmem:[#allocation3 + $0x270] sm:$0xff]
    %v2685 = vld [vmem:[#allocation3 + $0x278] sm:$0xff]
    %v2686 = vld [vmem:[#allocation3 + $0x280] sm:$0xff]
    %v2687 = vld [vmem:[#allocation3 + $0x288] sm:$0xff]
    %v2688 = vld [vmem:[#allocation3 + $0x290] sm:$0xff]
    %v2689 = vld [vmem:[#allocation3 + $0x298] sm:$0xff]
    %v2690 = vld [vmem:[#allocation3 + $0x2a0] sm:$0xff]
    %v2691 = vld [vmem:[#allocation3 + $0x2a8] sm:$0xff]
    %v2692 = vld [vmem:[#allocation3 + $0x2b0] sm:$0xff]
    %v2693 = vld [vmem:[#allocation3 + $0x2b8] sm:$0xff]
    %v2694 = vld [vmem:[#allocation3 + $0x2c0] sm:$0xff]
    %v2695 = vld [vmem:[#allocation3 + $0x2c8] sm:$0xff]
    %v2696 = vld [vmem:[#allocation3 + $0x2d0] sm:$0xff]
    %v2697 = vld [vmem:[#allocation3 + $0x2d8] sm:$0xff]
    %v2698 = vld [vmem:[#allocation3 + $0x2e0] sm:$0xff]
    %v2699 = vld [vmem:[#allocation3 + $0x2e8] sm:$0xff]
    %v2700 = vld [vmem:[#allocation3 + $0x2f0] sm:$0xff]
    %v2701 = vld [vmem:[#allocation3 + $0x2f8] sm:$0xff]
    %v2702 = vld [vmem:[#allocation3 + $0x300] sm:$0xff]
    %v2703 = vld [vmem:[#allocation3 + $0x308] sm:$0xff]
    %v2704 = vld [vmem:[#allocation3 + $0x310] sm:$0xff]
    %v2705 = vld [vmem:[#allocation3 + $0x318] sm:$0xff]
    %v2706 = vld [vmem:[#allocation3 + $0x320] sm:$0xff]
    %v2707 = vld [vmem:[#allocation3 + $0x328] sm:$0xff]
    %v2708 = vld [vmem:[#allocation3 + $0x330] sm:$0xff]
    %v2709 = vld [vmem:[#allocation3 + $0x338] sm:$0xff]
    %v2710 = vld [vmem:[#allocation3 + $0x340] sm:$0xff]
    %v2711 = vld [vmem:[#allocation3 + $0x348] sm:$0xff]
    %v2712 = vld [vmem:[#allocation3 + $0x350] sm:$0xff]
    %v2713 = vld [vmem:[#allocation3 + $0x358] sm:$0xff]
    %v2714 = vld [vmem:[#allocation3 + $0x360] sm:$0xff]
    %v2715 = vld [vmem:[#allocation3 + $0x368] sm:$0xff]
    %v2716 = vld [vmem:[#allocation3 + $0x370] sm:$0xff]
    %v2717 = vld [vmem:[#allocation3 + $0x378] sm:$0xff]
    %v2718 = vld [vmem:[#allocation3 + $0x380] sm:$0xff]
    %v2719 = vld [vmem:[#allocation3 + $0x388] sm:$0xff]
    %v2720 = vld [vmem:[#allocation3 + $0x390] sm:$0xff]
    %v2721 = vld [vmem:[#allocation3 + $0x398] sm:$0xff]
    %v2722 = vld [vmem:[#allocation3 + $0x3a0] sm:$0xff]
    %v2723 = vld [vmem:[#allocation3 + $0x3a8] sm:$0xff]
    %v2724 = vld [vmem:[#allocation3 + $0x3b0] sm:$0xff]
    %v2725 = vld [vmem:[#allocation3 + $0x3b8] sm:$0xff]
    %v2726 = vld [vmem:[#allocation3 + $0x3c0] sm:$0xff]
    %v2727 = vld [vmem:[#allocation3 + $0x3c8] sm:$0xff]
    %v2728 = vld [vmem:[#allocation3 + $0x3d0] sm:$0xff]
    %v2729 = vld [vmem:[#allocation3 + $0x3d8] sm:$0xff]
    %v2730 = vld [vmem:[#allocation3 + $0x3e0] sm:$0xff]
    %v2731 = vld [vmem:[#allocation3 + $0x3e8] sm:$0xff]
    %v2732 = vld [vmem:[#allocation3 + $0x3f0] sm:$0xff]
    %v2733 = vld [vmem:[#allocation3 + $0x3f8] sm:$0xff]
    %v2734 = vld [vmem:[#allocation3 + $0x400] sm:$0xff]
    %v2735 = vld [vmem:[#allocation3 + $0x408] sm:$0xff]
    %v2736 = vld [vmem:[#allocation3 + $0x410] sm:$0xff]
    %v2737 = vld [vmem:[#allocation3 + $0x418] sm:$0xff]
    %v2738 = vld [vmem:[#allocation3 + $0x420] sm:$0xff]
    %v2739 = vld [vmem:[#allocation3 + $0x428] sm:$0xff]
    %v2740 = vld [vmem:[#allocation3 + $0x430] sm:$0xff]
    %v2741 = vld [vmem:[#allocation3 + $0x438] sm:$0xff]
    %v2742 = vld [vmem:[#allocation3 + $0x440] sm:$0xff]
    %v2743 = vld [vmem:[#allocation3 + $0x448] sm:$0xff]
    %v2744 = vld [vmem:[#allocation3 + $0x450] sm:$0xff]
    %v2745 = vld [vmem:[#allocation3 + $0x458] sm:$0xff]
    %v2746 = vld [vmem:[#allocation3 + $0x460] sm:$0xff]
    %v2747 = vld [vmem:[#allocation3 + $0x468] sm:$0xff]
    %v2748 = vld [vmem:[#allocation3 + $0x470] sm:$0xff]
    %v2749 = vld [vmem:[#allocation3 + $0x478] sm:$0xff]
    %v2750 = vld [vmem:[#allocation3 + $0x480] sm:$0xff]
    %v2751 = vld [vmem:[#allocation3 + $0x488] sm:$0xff]
    %v2752 = vld [vmem:[#allocation3 + $0x490] sm:$0xff]
    %v2753 = vld [vmem:[#allocation3 + $0x498] sm:$0xff]
    %v2754 = vld [vmem:[#allocation3 + $0x4a0] sm:$0xff]
    %v2755 = vld [vmem:[#allocation3 + $0x4a8] sm:$0xff]
    %v2756 = vld [vmem:[#allocation3 + $0x4b0] sm:$0xff]
    %v2757 = vld [vmem:[#allocation3 + $0x4b8] sm:$0xff]
    %v2758 = vld [vmem:[#allocation3 + $0x4c0] sm:$0xff]
    %v2759 = vld [vmem:[#allocation3 + $0x4c8] sm:$0xff]
    %v2760 = vld [vmem:[#allocation3 + $0x4d0] sm:$0xff]
    %v2761 = vld [vmem:[#allocation3 + $0x4d8] sm:$0xff]
    %v2762 = vld [vmem:[#allocation3 + $0x4e0] sm:$0xff]
    %v2763 = vld [vmem:[#allocation3 + $0x4e8] sm:$0xff]
    %v2764 = vld [vmem:[#allocation3 + $0x4f0] sm:$0xff]
    %v2765 = vld [vmem:[#allocation3 + $0x4f8] sm:$0xff]
    %v2766 = vld [vmem:[#allocation3 + $0x500] sm:$0xff]
    %v2767 = vld [vmem:[#allocation3 + $0x508] sm:$0xff]
    %v2768 = vld [vmem:[#allocation3 + $0x510] sm:$0xff]
    %v2769 = vld [vmem:[#allocation3 + $0x518] sm:$0xff]
    %v2770 = vld [vmem:[#allocation3 + $0x520] sm:$0xff]
    %v2771 = vld [vmem:[#allocation3 + $0x528] sm:$0xff]
    %v2772 = vld [vmem:[#allocation3 + $0x530] sm:$0xff]
    %v2773 = vld [vmem:[#allocation3 + $0x538] sm:$0xff]
    %v2774 = vld [vmem:[#allocation3 + $0x540] sm:$0xff]
    %v2775 = vld [vmem:[#allocation3 + $0x548] sm:$0xff]
    %v2776 = vld [vmem:[#allocation3 + $0x550] sm:$0xff]
    %v2777 = vld [vmem:[#allocation3 + $0x558] sm:$0xff]
    %v2778 = vld [vmem:[#allocation3 + $0x560] sm:$0xff]
    %v2779 = vld [vmem:[#allocation3 + $0x568] sm:$0xff]
    %v2780 = vld [vmem:[#allocation3 + $0x570] sm:$0xff]
    %v2781 = vld [vmem:[#allocation3 + $0x578] sm:$0xff]
    %v2782 = vld [vmem:[#allocation3 + $0x580] sm:$0xff]
    %v2783 = vld [vmem:[#allocation3 + $0x588] sm:$0xff]
    %v2784 = vld [vmem:[#allocation3 + $0x590] sm:$0xff]
    %v2785 = vld [vmem:[#allocation3 + $0x598] sm:$0xff]
    %v2786 = vld [vmem:[#allocation3 + $0x5a0] sm:$0xff]
    %v2787 = vld [vmem:[#allocation3 + $0x5a8] sm:$0xff]
    %v2788 = vld [vmem:[#allocation3 + $0x5b0] sm:$0xff]
    %v2789 = vld [vmem:[#allocation3 + $0x5b8] sm:$0xff]
    %v2790 = vld [vmem:[#allocation3 + $0x5c0] sm:$0xff]
    %v2791 = vld [vmem:[#allocation3 + $0x5c8] sm:$0xff]
    %v2792 = vld [vmem:[#allocation3 + $0x5d0] sm:$0xff]
    %v2793 = vld [vmem:[#allocation3 + $0x5d8] sm:$0xff]
    %v2794 = vld [vmem:[#allocation3 + $0x5e0] sm:$0xff]
    %v2795 = vld [vmem:[#allocation3 + $0x5e8] sm:$0xff]
    %v2796 = vld [vmem:[#allocation3 + $0x5f0] sm:$0xff]
    %v2797 = vld [vmem:[#allocation3 + $0x5f8] sm:$0xff]
    %v2798 = vld [vmem:[#allocation3 + $0x600] sm:$0xff]
    %v2799 = vld [vmem:[#allocation3 + $0x608] sm:$0xff]
    %v2800 = vld [vmem:[#allocation3 + $0x610] sm:$0xff]
    %v2801 = vld [vmem:[#allocation3 + $0x618] sm:$0xff]
    %v2802 = vld [vmem:[#allocation3 + $0x620] sm:$0xff]
    %v2803 = vld [vmem:[#allocation3 + $0x628] sm:$0xff]
    %v2804 = vld [vmem:[#allocation3 + $0x630] sm:$0xff]
    %v2805 = vld [vmem:[#allocation3 + $0x638] sm:$0xff]
    %v2806 = vld [vmem:[#allocation3 + $0x640] sm:$0xff]
    %v2807 = vld [vmem:[#allocation3 + $0x648] sm:$0xff]
    %v2808 = vld [vmem:[#allocation3 + $0x650] sm:$0xff]
    %v2809 = vld [vmem:[#allocation3 + $0x658] sm:$0xff]
    %v2810 = vld [vmem:[#allocation3 + $0x660] sm:$0xff]
    %v2811 = vld [vmem:[#allocation3 + $0x668] sm:$0xff]
    %v2812 = vld [vmem:[#allocation3 + $0x670] sm:$0xff]
    %v2813 = vld [vmem:[#allocation3 + $0x678] sm:$0xff]
    %v2814 = vld [vmem:[#allocation3 + $0x680] sm:$0xff]
    %v2815 = vld [vmem:[#allocation3 + $0x688] sm:$0xff]
    %v2816 = vld [vmem:[#allocation3 + $0x690] sm:$0xff]
    %v2817 = vld [vmem:[#allocation3 + $0x698] sm:$0xff]
    %v2818 = vld [vmem:[#allocation3 + $0x6a0] sm:$0xff]
    %v2819 = vld [vmem:[#allocation3 + $0x6a8] sm:$0xff]
    %v2820 = vld [vmem:[#allocation3 + $0x6b0] sm:$0xff]
    %v2821 = vld [vmem:[#allocation3 + $0x6b8] sm:$0xff]
    %v2822 = vld [vmem:[#allocation3 + $0x6c0] sm:$0xff]
    %v2823 = vld [vmem:[#allocation3 + $0x6c8] sm:$0xff]
    %v2824 = vld [vmem:[#allocation3 + $0x6d0] sm:$0xff]
    %v2825 = vld [vmem:[#allocation3 + $0x6d8] sm:$0xff]
    %v2826 = vld [vmem:[#allocation3 + $0x6e0] sm:$0xff]
    %v2827 = vld [vmem:[#allocation3 + $0x6e8] sm:$0xff]
    %v2828 = vld [vmem:[#allocation3 + $0x6f0] sm:$0xff]
    %v2829 = vld [vmem:[#allocation3 + $0x6f8] sm:$0xff]
    %v2830 = vld [vmem:[#allocation3 + $0x700] sm:$0xff]
    %v2831 = vld [vmem:[#allocation3 + $0x708] sm:$0xff]
    %v2832 = vld [vmem:[#allocation3 + $0x710] sm:$0xff]
    %v2833 = vld [vmem:[#allocation3 + $0x718] sm:$0xff]
    %v2834 = vld [vmem:[#allocation3 + $0x720] sm:$0xff]
    %v2835 = vld [vmem:[#allocation3 + $0x728] sm:$0xff]
    %v2836 = vld [vmem:[#allocation3 + $0x730] sm:$0xff]
    %v2837 = vld [vmem:[#allocation3 + $0x738] sm:$0xff]
    %v2838 = vld [vmem:[#allocation3 + $0x740] sm:$0xff]
    %v2839 = vld [vmem:[#allocation3 + $0x748] sm:$0xff]
    %v2840 = vld [vmem:[#allocation3 + $0x750] sm:$0xff]
    %v2841 = vld [vmem:[#allocation3 + $0x758] sm:$0xff]
    %v2842 = vld [vmem:[#allocation3 + $0x760] sm:$0xff]
    %v2843 = vld [vmem:[#allocation3 + $0x768] sm:$0xff]
    %v2844 = vld [vmem:[#allocation3 + $0x770] sm:$0xff]
    %v2845 = vld [vmem:[#allocation3 + $0x778] sm:$0xff]
    %v2846 = vld [vmem:[#allocation3 + $0x780] sm:$0xff]
    %v2847 = vld [vmem:[#allocation3 + $0x788] sm:$0xff]
    %v2848 = vld [vmem:[#allocation3 + $0x790] sm:$0xff]
    %v2849 = vld [vmem:[#allocation3 + $0x798] sm:$0xff]
    %v2850 = vld [vmem:[#allocation3 + $0x7a0] sm:$0xff]
    %v2851 = vld [vmem:[#allocation3 + $0x7a8] sm:$0xff]
    %v2852 = vld [vmem:[#allocation3 + $0x7b0] sm:$0xff]
    %v2853 = vld [vmem:[#allocation3 + $0x7b8] sm:$0xff]
    %v2854 = vld [vmem:[#allocation3 + $0x7c0] sm:$0xff]
    %v2855 = vld [vmem:[#allocation3 + $0x7c8] sm:$0xff]
    %v2856 = vld [vmem:[#allocation3 + $0x7d0] sm:$0xff]
    %v2857 = vld [vmem:[#allocation3 + $0x7d8] sm:$0xff]
    %v2858 = vld [vmem:[#allocation3 + $0x7e0] sm:$0xff]
    %v2859 = vld [vmem:[#allocation3 + $0x7e8] sm:$0xff]
    %v2860 = vld [vmem:[#allocation3 + $0x7f0] sm:$0xff]
    %v2861 = vld [vmem:[#allocation3 + $0x7f8] sm:$0xff]
    %v2862 = vld [vmem:[#allocation3 + $0x800] sm:$0xff]
    %v2863 = vld [vmem:[#allocation3 + $0x808] sm:$0xff]
    %v2864 = vld [vmem:[#allocation3 + $0x810] sm:$0xff]
    %v2865 = vld [vmem:[#allocation3 + $0x818] sm:$0xff]
    %v2866 = vld [vmem:[#allocation3 + $0x820] sm:$0xff]
    %v2867 = vld [vmem:[#allocation3 + $0x828] sm:$0xff]
    %v2868 = vld [vmem:[#allocation3 + $0x830] sm:$0xff]
    %v2869 = vld [vmem:[#allocation3 + $0x838] sm:$0xff]
    %v2870 = vld [vmem:[#allocation3 + $0x840] sm:$0xff]
    %v2871 = vld [vmem:[#allocation3 + $0x848] sm:$0xff]
    %v2872 = vld [vmem:[#allocation3 + $0x850] sm:$0xff]
    %v2873 = vld [vmem:[#allocation3 + $0x858] sm:$0xff]
    %v2874 = vld [vmem:[#allocation3 + $0x860] sm:$0xff]
    %v2875 = vld [vmem:[#allocation3 + $0x868] sm:$0xff]
    %v2876 = vld [vmem:[#allocation3 + $0x870] sm:$0xff]
    %v2877 = vld [vmem:[#allocation3 + $0x878] sm:$0xff]
    %v2878 = vld [vmem:[#allocation3 + $0x880] sm:$0xff]
    %v2879 = vld [vmem:[#allocation3 + $0x888] sm:$0xff]
    %v2880 = vld [vmem:[#allocation3 + $0x890] sm:$0xff]
    %v2881 = vld [vmem:[#allocation3 + $0x898] sm:$0xff]
    %v2882 = vld [vmem:[#allocation3 + $0x8a0] sm:$0xff]
    %v2883 = vld [vmem:[#allocation3 + $0x8a8] sm:$0xff]
    %v2884 = vld [vmem:[#allocation3 + $0x8b0] sm:$0xff]
    %v2885 = vld [vmem:[#allocation3 + $0x8b8] sm:$0xff]
    %v2886 = vld [vmem:[#allocation3 + $0x8c0] sm:$0xff]
    %v2887 = vld [vmem:[#allocation3 + $0x8c8] sm:$0xff]
    %v2888 = vld [vmem:[#allocation3 + $0x8d0] sm:$0xff]
    %v2889 = vld [vmem:[#allocation3 + $0x8d8] sm:$0xff]
    %v2890 = vld [vmem:[#allocation3 + $0x8e0] sm:$0xff]
    %v2891 = vld [vmem:[#allocation3 + $0x8e8] sm:$0xff]
    %v2892 = vld [vmem:[#allocation3 + $0x8f0] sm:$0xff]
    %v2893 = vld [vmem:[#allocation3 + $0x8f8] sm:$0xff]
    %v2894 = vld [vmem:[#allocation3 + $0x900] sm:$0xff]
    %v2895 = vld [vmem:[#allocation3 + $0x908] sm:$0xff]
    %v2896 = vld [vmem:[#allocation3 + $0x910] sm:$0xff]
    %v2897 = vld [vmem:[#allocation3 + $0x918] sm:$0xff]
    %v2898 = vld [vmem:[#allocation3 + $0x920] sm:$0xff]
    %v2899 = vld [vmem:[#allocation3 + $0x928] sm:$0xff]
    %v2900 = vld [vmem:[#allocation3 + $0x930] sm:$0xff]
    %v2901 = vld [vmem:[#allocation3 + $0x938] sm:$0xff]
    %v2902 = vld [vmem:[#allocation3 + $0x940] sm:$0xff]
    %v2903 = vld [vmem:[#allocation3 + $0x948] sm:$0xff]
    %v2904 = vld [vmem:[#allocation3 + $0x950] sm:$0xff]
    %v2905 = vld [vmem:[#allocation3 + $0x958] sm:$0xff]
    %v2906 = vld [vmem:[#allocation3 + $0x960] sm:$0xff]
    %v2907 = vld [vmem:[#allocation3 + $0x968] sm:$0xff]
    %v2908 = vld [vmem:[#allocation3 + $0x970] sm:$0xff]
    %v2909 = vld [vmem:[#allocation3 + $0x978] sm:$0xff]
    %v2910 = vld [vmem:[#allocation3 + $0x980] sm:$0xff]
    %v2911 = vld [vmem:[#allocation3 + $0x988] sm:$0xff]
    %v2912 = vld [vmem:[#allocation3 + $0x990] sm:$0xff]
    %v2913 = vld [vmem:[#allocation3 + $0x998] sm:$0xff]
    %v2914 = vld [vmem:[#allocation3 + $0x9a0] sm:$0xff]
    %v2915 = vld [vmem:[#allocation3 + $0x9a8] sm:$0xff]
    %v2916 = vld [vmem:[#allocation3 + $0x9b0] sm:$0xff]
    %v2917 = vld [vmem:[#allocation3 + $0x9b8] sm:$0xff]
    %v2918 = vld [vmem:[#allocation3 + $0x9c0] sm:$0xff]
    %v2919 = vld [vmem:[#allocation3 + $0x9c8] sm:$0xff]
    %v2920 = vld [vmem:[#allocation3 + $0x9d0] sm:$0xff]
    %v2921 = vld [vmem:[#allocation3 + $0x9d8] sm:$0xff]
    %v2922 = vld [vmem:[#allocation3 + $0x9e0] sm:$0xff]
    %v2923 = vld [vmem:[#allocation3 + $0x9e8] sm:$0xff]
    %v2924 = vld [vmem:[#allocation3 + $0x9f0] sm:$0xff]
    %v2925 = vld [vmem:[#allocation3 + $0x9f8] sm:$0xff]
    %v2926 = vld [vmem:[#allocation3 + $0xa00] sm:$0xff]
    %v2927 = vld [vmem:[#allocation3 + $0xa08] sm:$0xff]
    %v2928 = vld [vmem:[#allocation3 + $0xa10] sm:$0xff]
    %v2929 = vld [vmem:[#allocation3 + $0xa18] sm:$0xff]
    %v2930 = vld [vmem:[#allocation3 + $0xa20] sm:$0xff]
    %v2931 = vld [vmem:[#allocation3 + $0xa28] sm:$0xff]
    %v2932 = vld [vmem:[#allocation3 + $0xa30] sm:$0xff]
    %v2933 = vld [vmem:[#allocation3 + $0xa38] sm:$0xff]
    %v2934 = vld [vmem:[#allocation3 + $0xa40] sm:$0xff]
    %v2935 = vld [vmem:[#allocation3 + $0xa48] sm:$0xff]
    %v2936 = vld [vmem:[#allocation3 + $0xa50] sm:$0xff]
    %v2937 = vld [vmem:[#allocation3 + $0xa58] sm:$0xff]
    %v2938 = vld [vmem:[#allocation3 + $0xa60] sm:$0xff]
    %v2939 = vld [vmem:[#allocation3 + $0xa68] sm:$0xff]
    %v2940 = vld [vmem:[#allocation3 + $0xa70] sm:$0xff]
    %v2941 = vld [vmem:[#allocation3 + $0xa78] sm:$0xff]
    %v2942 = vld [vmem:[#allocation3 + $0xa80] sm:$0xff]
    %v2943 = vld [vmem:[#allocation3 + $0xa88] sm:$0xff]
    %v2944 = vld [vmem:[#allocation3 + $0xa90] sm:$0xff]
    %v2945 = vld [vmem:[#allocation3 + $0xa98] sm:$0xff]
    %v2946 = vld [vmem:[#allocation3 + $0xaa0] sm:$0xff]
    %v2947 = vld [vmem:[#allocation3 + $0xaa8] sm:$0xff]
    %v2948 = vld [vmem:[#allocation3 + $0xab0] sm:$0xff]
    %v2949 = vld [vmem:[#allocation3 + $0xab8] sm:$0xff]
    %v2950 = vld [vmem:[#allocation3 + $0xac0] sm:$0xff]
    %v2951 = vld [vmem:[#allocation3 + $0xac8] sm:$0xff]
    %v2952 = vld [vmem:[#allocation3 + $0xad0] sm:$0xff]
    %v2953 = vld [vmem:[#allocation3 + $0xad8] sm:$0xff]
    %v2954 = vld [vmem:[#allocation3 + $0xae0] sm:$0xff]
    %v2955 = vld [vmem:[#allocation3 + $0xae8] sm:$0xff]
    %v2956 = vld [vmem:[#allocation3 + $0xaf0] sm:$0xff]
    %v2957 = vld [vmem:[#allocation3 + $0xaf8] sm:$0xff]
    %v2958 = vld [vmem:[#allocation3 + $0xb00] sm:$0xff]
    %v2959 = vld [vmem:[#allocation3 + $0xb08] sm:$0xff]
    %v2960 = vld [vmem:[#allocation3 + $0xb10] sm:$0xff]
    %v2961 = vld [vmem:[#allocation3 + $0xb18] sm:$0xff]
    %v2962 = vld [vmem:[#allocation3 + $0xb20] sm:$0xff]
    %v2963 = vld [vmem:[#allocation3 + $0xb28] sm:$0xff]
    %v2964 = vld [vmem:[#allocation3 + $0xb30] sm:$0xff]
    %v2965 = vld [vmem:[#allocation3 + $0xb38] sm:$0xff]
    %v2966 = vld [vmem:[#allocation3 + $0xb40] sm:$0xff]
    %v2967 = vld [vmem:[#allocation3 + $0xb48] sm:$0xff]
    %v2968 = vld [vmem:[#allocation3 + $0xb50] sm:$0xff]
    %v2969 = vld [vmem:[#allocation3 + $0xb58] sm:$0xff]
    %v2970 = vld [vmem:[#allocation3 + $0xb60] sm:$0xff]
    %v2971 = vld [vmem:[#allocation3 + $0xb68] sm:$0xff]
    %v2972 = vld [vmem:[#allocation3 + $0xb70] sm:$0xff]
    %v2973 = vld [vmem:[#allocation3 + $0xb78] sm:$0xff]
    %v2974 = vld [vmem:[#allocation3 + $0xb80] sm:$0xff]
    %v2975 = vld [vmem:[#allocation3 + $0xb88] sm:$0xff]
    %v2976 = vld [vmem:[#allocation3 + $0xb90] sm:$0xff]
    %v2977 = vld [vmem:[#allocation3 + $0xb98] sm:$0xff]
    %v2978 = vld [vmem:[#allocation3 + $0xba0] sm:$0xff]
    %v2979 = vld [vmem:[#allocation3 + $0xba8] sm:$0xff]
    %v2980 = vld [vmem:[#allocation3 + $0xbb0] sm:$0xff]
    %v2981 = vld [vmem:[#allocation3 + $0xbb8] sm:$0xff]
    %v2982 = vld [vmem:[#allocation3 + $0xbc0] sm:$0xff]
    %v2983 = vld [vmem:[#allocation3 + $0xbc8] sm:$0xff]
    %v2984 = vld [vmem:[#allocation3 + $0xbd0] sm:$0xff]
    %v2985 = vld [vmem:[#allocation3 + $0xbd8] sm:$0xff]
    %v2986 = vld [vmem:[#allocation3 + $0xbe0] sm:$0xff]
    %v2987 = vld [vmem:[#allocation3 + $0xbe8] sm:$0xff]
    %v2988 = vld [vmem:[#allocation3 + $0xbf0] sm:$0xff]
    %v2989 = vld [vmem:[#allocation3 + $0xbf8] sm:$0xff]
    %2990 = vmatprep.subr.bf16.mxu0 %v2607
    %2991 = vmatpush1.bf16.msra.mxu0 %v2606
    %2992 = vmatprep.subr.bf16.mxu0 %v2613
    %2993 = vmatpush1.bf16.msra.mxu0 %v2612
    %2994 = vmatprep.subr.bf16.mxu0 %v2619
    %2995 = vmatpush1.bf16.msra.mxu0 %v2618
    %2996 = vmatprep.subr.bf16.mxu0 %v2625
    %2997 = vmatpush1.bf16.msra.mxu0 %v2624
    %2998 = vmatprep.subr.bf16.mxu0 %v2631
    %2999 = vmatpush1.bf16.msra.mxu0 %v2630
    %3000 = vmatprep.subr.bf16.mxu0 %v2637
    %3001 = vmatpush1.bf16.msra.mxu0 %v2636
    %3002 = vmatprep.subr.bf16.mxu0 %v2643
    %3003 = vmatpush1.bf16.msra.mxu0 %v2642
    %3004 = vmatprep.subr.bf16.mxu0 %v2649
    %3005 = vmatpush1.bf16.msra.mxu0 %v2648
    %3006 = vmatprep.subr.bf16.mxu0 %v2655
    %3007 = vmatpush1.bf16.msra.mxu0 %v2654
    %3008 = vmatprep.subr.bf16.mxu0 %v2661
    %3009 = vmatpush1.bf16.msra.mxu0 %v2660
    %3010 = vmatprep.subr.bf16.mxu0 %v2667
    %3011 = vmatpush1.bf16.msra.mxu0 %v2666
    %3012 = vmatprep.subr.bf16.mxu0 %v2673
    %3013 = vmatpush1.bf16.msra.mxu0 %v2672
    %3014 = vmatprep.subr.bf16.mxu0 %v2679
    %3015 = vmatpush1.bf16.msra.mxu0 %v2678
    %3016 = vmatprep.subr.bf16.mxu0 %v2685
    %3017 = vmatpush1.bf16.msra.mxu0 %v2684
    %3018 = vmatprep.subr.bf16.mxu0 %v2691
    %3019 = vmatpush1.bf16.msra.mxu0 %v2690
    %3020 = vmatprep.subr.bf16.mxu0 %v2697
    %3021 = vmatpush1.bf16.msra.mxu0 %v2696
    %3022 = vmatprep.mubr.bf16.mxu0 %v2599
    %3023 = vmatmul.mubr.bf16.gmra.mrb[0].mxu0 %v2598
    %v3024 = vpop.f32.mrb[0].mxu0
    %v3025 = vadd.f32 0.0, %v3024
    %v3026 = vpop.f32.mrb[0].mxu0
    %v3027 = vadd.f32 0.0, %v3026
    %v3028 = vpop.f32.mrb[0].mxu0
    %v3029 = vpop.f32.mrb[0].mxu0
    %3030 = vdwg.mxu0
    %3031 = vmatprep.subr.bf16.mxu0 %v2703
    %3032 = vmatpush1.bf16.msra.mxu0 %v2702
    %3033 = vmatprep.subr.bf16.mxu0 %v2709
    %3034 = vmatpush1.bf16.msra.mxu0 %v2708
    %3035 = vmatprep.subr.bf16.mxu0 %v2715
    %3036 = vmatpush1.bf16.msra.mxu0 %v2714
    %3037 = vmatprep.subr.bf16.mxu0 %v2721
    %3038 = vmatpush1.bf16.msra.mxu0 %v2720
    %3039 = vmatprep.subr.bf16.mxu0 %v2727
    %3040 = vmatpush1.bf16.msra.mxu0 %v2726
    %3041 = vmatprep.subr.bf16.mxu0 %v2733
    %3042 = vmatpush1.bf16.msra.mxu0 %v2732
    %3043 = vmatprep.subr.bf16.mxu0 %v2739
    %3044 = vmatpush1.bf16.msra.mxu0 %v2738
    %3045 = vmatprep.subr.bf16.mxu0 %v2745
    %3046 = vmatpush1.bf16.msra.mxu0 %v2744
    %3047 = vmatprep.subr.bf16.mxu0 %v2751
    %3048 = vmatpush1.bf16.msra.mxu0 %v2750
    %3049 = vmatprep.subr.bf16.mxu0 %v2757
    %3050 = vmatpush1.bf16.msra.mxu0 %v2756
    %3051 = vmatprep.subr.bf16.mxu0 %v2763
    %3052 = vmatpush1.bf16.msra.mxu0 %v2762
    %3053 = vmatprep.subr.bf16.mxu0 %v2769
    %3054 = vmatpush1.bf16.msra.mxu0 %v2768
    %3055 = vmatprep.subr.bf16.mxu0 %v2775
    %3056 = vmatpush1.bf16.msra.mxu0 %v2774
    %3057 = vmatprep.subr.bf16.mxu0 %v2781
    %3058 = vmatpush1.bf16.msra.mxu0 %v2780
    %3059 = vmatprep.subr.bf16.mxu0 %v2787
    %3060 = vmatpush1.bf16.msra.mxu0 %v2786
    %3061 = vmatprep.subr.bf16.mxu0 %v2793
    %3062 = vmatpush1.bf16.msra.mxu0 %v2792
    %3063 = vmatprep.mubr.bf16.mxu0 %v2601
    %3064 = vmatmul.mubr.bf16.gmra.mrb[0].mxu0 %v2600
    %v3065 = vpop.f32.mrb[0].mxu0
    %v3066 = vadd.f32 %v3025, %v3065
    %v3067 = vpop.f32.mrb[0].mxu0
    %v3068 = vadd.f32 %v3027, %v3067
    %v3069 = vpop.f32.mrb[0].mxu0
    %v3070 = vpop.f32.mrb[0].mxu0
    %3071 = vdwg.mxu0
    %3072 = vmatprep.subr.bf16.mxu0 %v2799
    %3073 = vmatpush1.bf16.msra.mxu0 %v2798
    %3074 = vmatprep.subr.bf16.mxu0 %v2805
    %3075 = vmatpush1.bf16.msra.mxu0 %v2804
    %3076 = vmatprep.subr.bf16.mxu0 %v2811
    %3077 = vmatpush1.bf16.msra.mxu0 %v2810
    %3078 = vmatprep.subr.bf16.mxu0 %v2817
    %3079 = vmatpush1.bf16.msra.mxu0 %v2816
    %3080 = vmatprep.subr.bf16.mxu0 %v2823
    %3081 = vmatpush1.bf16.msra.mxu0 %v2822
    %3082 = vmatprep.subr.bf16.mxu0 %v2829
    %3083 = vmatpush1.bf16.msra.mxu0 %v2828
    %3084 = vmatprep.subr.bf16.mxu0 %v2835
    %3085 = vmatpush1.bf16.msra.mxu0 %v2834
    %3086 = vmatprep.subr.bf16.mxu0 %v2841
    %3087 = vmatpush1.bf16.msra.mxu0 %v2840
    %3088 = vmatprep.subr.bf16.mxu0 %v2847
    %3089 = vmatpush1.bf16.msra.mxu0 %v2846
    %3090 = vmatprep.subr.bf16.mxu0 %v2853
    %3091 = vmatpush1.bf16.msra.mxu0 %v2852
    %3092 = vmatprep.subr.bf16.mxu0 %v2859
    %3093 = vmatpush1.bf16.msra.mxu0 %v2858
    %3094 = vmatprep.subr.bf16.mxu0 %v2865
    %3095 = vmatpush1.bf16.msra.mxu0 %v2864
    %3096 = vmatprep.subr.bf16.mxu0 %v2871
    %3097 = vmatpush1.bf16.msra.mxu0 %v2870
    %3098 = vmatprep.subr.bf16.mxu0 %v2877
    %3099 = vmatpush1.bf16.msra.mxu0 %v2876
    %3100 = vmatprep.subr.bf16.mxu0 %v2883
    %3101 = vmatpush1.bf16.msra.mxu0 %v2882
    %3102 = vmatprep.subr.bf16.mxu0 %v2889
    %3103 = vmatpush1.bf16.msra.mxu0 %v2888
    %3104 = vmatprep.mubr.bf16.mxu0 %v2603
    %3105 = vmatmul.mubr.bf16.gmra.mrb[0].mxu0 %v2602
    %v3106 = vpop.f32.mrb[0].mxu0
    %v3107 = vadd.f32 %v3066, %v3106
    %v3108 = vpop.f32.mrb[0].mxu0
    %v3109 = vadd.f32 %v3068, %v3108
    %v3110 = vpop.f32.mrb[0].mxu0
    %v3111 = vpop.f32.mrb[0].mxu0
    %3112 = vdwg.mxu0
    %3113 = vmatprep.subr.bf16.mxu0 %v2895
    %3114 = vmatpush1.bf16.msra.mxu0 %v2894
    %3115 = vmatprep.subr.bf16.mxu0 %v2901
    %3116 = vmatpush1.bf16.msra.mxu0 %v2900
    %3117 = vmatprep.subr.bf16.mxu0 %v2907
    %3118 = vmatpush1.bf16.msra.mxu0 %v2906
    %3119 = vmatprep.subr.bf16.mxu0 %v2913
    %3120 = vmatpush1.bf16.msra.mxu0 %v2912
    %3121 = vmatprep.subr.bf16.mxu0 %v2919
    %3122 = vmatpush1.bf16.msra.mxu0 %v2918
    %3123 = vmatprep.subr.bf16.mxu0 %v2925
    %3124 = vmatpush1.bf16.msra.mxu0 %v2924
    %3125 = vmatprep.subr.bf16.mxu0 %v2931
    %3126 = vmatpush1.bf16.msra.mxu0 %v2930
    %3127 = vmatprep.subr.bf16.mxu0 %v2937
    %3128 = vmatpush1.bf16.msra.mxu0 %v2936
    %3129 = vmatprep.subr.bf16.mxu0 %v2943
    %3130 = vmatpush1.bf16.msra.mxu0 %v2942
    %3131 = vmatprep.subr.bf16.mxu0 %v2949
    %3132 = vmatpush1.bf16.msra.mxu0 %v2948
    %3133 = vmatprep.subr.bf16.mxu0 %v2955
    %3134 = vmatpush1.bf16.msra.mxu0 %v2954
    %3135 = vmatprep.subr.bf16.mxu0 %v2961
    %3136 = vmatpush1.bf16.msra.mxu0 %v2960
    %3137 = vmatprep.subr.bf16.mxu0 %v2967
    %3138 = vmatpush1.bf16.msra.mxu0 %v2966
    %3139 = vmatprep.subr.bf16.mxu0 %v2973
    %3140 = vmatpush1.bf16.msra.mxu0 %v2972
    %3141 = vmatprep.subr.bf16.mxu0 %v2979
    %3142 = vmatpush1.bf16.msra.mxu0 %v2978
    %3143 = vmatprep.subr.bf16.mxu0 %v2985
    %3144 = vmatpush1.bf16.msra.mxu0 %v2984
    %3145 = vmatprep.mubr.bf16.mxu0 %v2605
    %3146 = vmatmul.mubr.bf16.gmra.mrb[0].mxu0 %v2604
    %v3147 = vpop.f32.mrb[0].mxu0
    %v3148 = vadd.f32 %v3107, %v3147
    %v3149 = vpop.f32.mrb[0].mxu0
    %v3150 = vadd.f32 %v3109, %v3149
    %v3151 = vpop.f32.mrb[0].mxu0
    %v3152 = vpop.f32.mrb[0].mxu0
    %3153 = vdwg.mxu0
    %3154 = vmatprep.subr.bf16.mxu0 %v2609
    %3155 = vmatpush1.bf16.msra.mxu0 %v2608
    %3156 = vmatprep.subr.bf16.mxu0 %v2615
    %3157 = vmatpush1.bf16.msra.mxu0 %v2614
    %3158 = vmatprep.subr.bf16.mxu0 %v2621
    %3159 = vmatpush1.bf16.msra.mxu0 %v2620
    %3160 = vmatprep.subr.bf16.mxu0 %v2627
    %3161 = vmatpush1.bf16.msra.mxu0 %v2626
    %3162 = vmatprep.subr.bf16.mxu0 %v2633
    %3163 = vmatpush1.bf16.msra.mxu0 %v2632
    %3164 = vmatprep.subr.bf16.mxu0 %v2639
    %3165 = vmatpush1.bf16.msra.mxu0 %v2638
    %3166 = vmatprep.subr.bf16.mxu0 %v2645
    %3167 = vmatpush1.bf16.msra.mxu0 %v2644
    %3168 = vmatprep.subr.bf16.mxu0 %v2651
    %3169 = vmatpush1.bf16.msra.mxu0 %v2650
    %3170 = vmatprep.subr.bf16.mxu0 %v2657
    %3171 = vmatpush1.bf16.msra.mxu0 %v2656
    %3172 = vmatprep.subr.bf16.mxu0 %v2663
    %3173 = vmatpush1.bf16.msra.mxu0 %v2662
    %3174 = vmatprep.subr.bf16.mxu0 %v2669
    %3175 = vmatpush1.bf16.msra.mxu0 %v2668
    %3176 = vmatprep.subr.bf16.mxu0 %v2675
    %3177 = vmatpush1.bf16.msra.mxu0 %v2674
    %3178 = vmatprep.subr.bf16.mxu0 %v2681
    %3179 = vmatpush1.bf16.msra.mxu0 %v2680
    %3180 = vmatprep.subr.bf16.mxu0 %v2687
    %3181 = vmatpush1.bf16.msra.mxu0 %v2686
    %3182 = vmatprep.subr.bf16.mxu0 %v2693
    %3183 = vmatpush1.bf16.msra.mxu0 %v2692
    %3184 = vmatprep.subr.bf16.mxu0 %v2699
    %3185 = vmatpush1.bf16.msra.mxu0 %v2698
    %3186 = vmatprep.mubr.bf16.mxu0 %v2599
    %3187 = vmatmul.mubr.bf16.gmra.mrb[0].mxu0 %v2598
    %v3188 = vpop.f32.mrb[0].mxu0
    %v3189 = vadd.f32 0.0, %v3188
    %v3190 = vpop.f32.mrb[0].mxu0
    %v3191 = vadd.f32 0.0, %v3190
    %v3192 = vpop.f32.mrb[0].mxu0
    %v3193 = vpop.f32.mrb[0].mxu0
    %3194 = vdwg.mxu0
    %3195 = vmatprep.subr.bf16.mxu0 %v2705
    %3196 = vmatpush1.bf16.msra.mxu0 %v2704
    %3197 = vmatprep.subr.bf16.mxu0 %v2711
    %3198 = vmatpush1.bf16.msra.mxu0 %v2710
    %3199 = vmatprep.subr.bf16.mxu0 %v2717
    %3200 = vmatpush1.bf16.msra.mxu0 %v2716
    %3201 = vmatprep.subr.bf16.mxu0 %v2723
    %3202 = vmatpush1.bf16.msra.mxu0 %v2722
    %3203 = vmatprep.subr.bf16.mxu0 %v2729
    %3204 = vmatpush1.bf16.msra.mxu0 %v2728
    %3205 = vmatprep.subr.bf16.mxu0 %v2735
    %3206 = vmatpush1.bf16.msra.mxu0 %v2734
    %3207 = vmatprep.subr.bf16.mxu0 %v2741
    %3208 = vmatpush1.bf16.msra.mxu0 %v2740
    %3209 = vmatprep.subr.bf16.mxu0 %v2747
    %3210 = vmatpush1.bf16.msra.mxu0 %v2746
    %3211 = vmatprep.subr.bf16.mxu0 %v2753
    %3212 = vmatpush1.bf16.msra.mxu0 %v2752
    %3213 = vmatprep.subr.bf16.mxu0 %v2759
    %3214 = vmatpush1.bf16.msra.mxu0 %v2758
    %3215 = vmatprep.subr.bf16.mxu0 %v2765
    %3216 = vmatpush1.bf16.msra.mxu0 %v2764
    %3217 = vmatprep.subr.bf16.mxu0 %v2771
    %3218 = vmatpush1.bf16.msra.mxu0 %v2770
    %3219 = vmatprep.subr.bf16.mxu0 %v2777
    %3220 = vmatpush1.bf16.msra.mxu0 %v2776
    %3221 = vmatprep.subr.bf16.mxu0 %v2783
    %3222 = vmatpush1.bf16.msra.mxu0 %v2782
    %3223 = vmatprep.subr.bf16.mxu0 %v2789
    %3224 = vmatpush1.bf16.msra.mxu0 %v2788
    %3225 = vmatprep.subr.bf16.mxu0 %v2795
    %3226 = vmatpush1.bf16.msra.mxu0 %v2794
    %3227 = vmatprep.mubr.bf16.mxu0 %v2601
    %3228 = vmatmul.mubr.bf16.gmra.mrb[0].mxu0 %v2600
    %v3229 = vpop.f32.mrb[0].mxu0
    %v3230 = vadd.f32 %v3189, %v3229
    %v3231 = vpop.f32.mrb[0].mxu0
    %v3232 = vadd.f32 %v3191, %v3231
    %v3233 = vpop.f32.mrb[0].mxu0
    %v3234 = vpop.f32.mrb[0].mxu0
    %3235 = vdwg.mxu0
    %3236 = vmatprep.subr.bf16.mxu0 %v2801
    %3237 = vmatpush1.bf16.msra.mxu0 %v2800
    %3238 = vmatprep.subr.bf16.mxu0 %v2807
    %3239 = vmatpush1.bf16.msra.mxu0 %v2806
    %3240 = vmatprep.subr.bf16.mxu0 %v2813
    %3241 = vmatpush1.bf16.msra.mxu0 %v2812
    %3242 = vmatprep.subr.bf16.mxu0 %v2819
    %3243 = vmatpush1.bf16.msra.mxu0 %v2818
    %3244 = vmatprep.subr.bf16.mxu0 %v2825
    %3245 = vmatpush1.bf16.msra.mxu0 %v2824
    %3246 = vmatprep.subr.bf16.mxu0 %v2831
    %3247 = vmatpush1.bf16.msra.mxu0 %v2830
    %3248 = vmatprep.subr.bf16.mxu0 %v2837
    %3249 = vmatpush1.bf16.msra.mxu0 %v2836
    %3250 = vmatprep.subr.bf16.mxu0 %v2843
    %3251 = vmatpush1.bf16.msra.mxu0 %v2842
    %3252 = vmatprep.subr.bf16.mxu0 %v2849
    %3253 = vmatpush1.bf16.msra.mxu0 %v2848
    %3254 = vmatprep.subr.bf16.mxu0 %v2855
    %3255 = vmatpush1.bf16.msra.mxu0 %v2854
    %3256 = vmatprep.subr.bf16.mxu0 %v2861
    %3257 = vmatpush1.bf16.msra.mxu0 %v2860
    %3258 = vmatprep.subr.bf16.mxu0 %v2867
    %3259 = vmatpush1.bf16.msra.mxu0 %v2866
    %3260 = vmatprep.subr.bf16.mxu0 %v2873
    %3261 = vmatpush1.bf16.msra.mxu0 %v2872
    %3262 = vmatprep.subr.bf16.mxu0 %v2879
    %3263 = vmatpush1.bf16.msra.mxu0 %v2878
    %3264 = vmatprep.subr.bf16.mxu0 %v2885
    %3265 = vmatpush1.bf16.msra.mxu0 %v2884
    %3266 = vmatprep.subr.bf16.mxu0 %v2891
    %3267 = vmatpush1.bf16.msra.mxu0 %v2890
    %3268 = vmatprep.mubr.bf16.mxu0 %v2603
    %3269 = vmatmul.mubr.bf16.gmra.mrb[0].mxu0 %v2602
    %v3270 = vpop.f32.mrb[0].mxu0
    %v3271 = vadd.f32 %v3230, %v3270
    %v3272 = vpop.f32.mrb[0].mxu0
    %v3273 = vadd.f32 %v3232, %v3272
    %v3274 = vpop.f32.mrb[0].mxu0
    %v3275 = vpop.f32.mrb[0].mxu0
    %3276 = vdwg.mxu0
    %3277 = vmatprep.subr.bf16.mxu0 %v2897
    %3278 = vmatpush1.bf16.msra.mxu0 %v2896
    %3279 = vmatprep.subr.bf16.mxu0 %v2903
    %3280 = vmatpush1.bf16.msra.mxu0 %v2902
    %3281 = vmatprep.subr.bf16.mxu0 %v2909
    %3282 = vmatpush1.bf16.msra.mxu0 %v2908
    %3283 = vmatprep.subr.bf16.mxu0 %v2915
    %3284 = vmatpush1.bf16.msra.mxu0 %v2914
    %3285 = vmatprep.subr.bf16.mxu0 %v2921
    %3286 = vmatpush1.bf16.msra.mxu0 %v2920
    %3287 = vmatprep.subr.bf16.mxu0 %v2927
    %3288 = vmatpush1.bf16.msra.mxu0 %v2926
    %3289 = vmatprep.subr.bf16.mxu0 %v2933
    %3290 = vmatpush1.bf16.msra.mxu0 %v2932
    %3291 = vmatprep.subr.bf16.mxu0 %v2939
    %3292 = vmatpush1.bf16.msra.mxu0 %v2938
    %3293 = vmatprep.subr.bf16.mxu0 %v2945
    %3294 = vmatpush1.bf16.msra.mxu0 %v2944
    %3295 = vmatprep.subr.bf16.mxu0 %v2951
    %3296 = vmatpush1.bf16.msra.mxu0 %v2950
    %3297 = vmatprep.subr.bf16.mxu0 %v2957
    %3298 = vmatpush1.bf16.msra.mxu0 %v2956
    %3299 = vmatprep.subr.bf16.mxu0 %v2963
    %3300 = vmatpush1.bf16.msra.mxu0 %v2962
    %3301 = vmatprep.subr.bf16.mxu0 %v2969
    %3302 = vmatpush1.bf16.msra.mxu0 %v2968
    %3303 = vmatprep.subr.bf16.mxu0 %v2975
    %3304 = vmatpush1.bf16.msra.mxu0 %v2974
    %3305 = vmatprep.subr.bf16.mxu0 %v2981
    %3306 = vmatpush1.bf16.msra.mxu0 %v2980
    %3307 = vmatprep.subr.bf16.mxu0 %v2987
    %3308 = vmatpush1.bf16.msra.mxu0 %v2986
    %3309 = vmatprep.mubr.bf16.mxu0 %v2605
    %3310 = vmatmul.mubr.bf16.gmra.mrb[0].mxu0 %v2604
    %v3311 = vpop.f32.mrb[0].mxu0
    %v3312 = vadd.f32 %v3271, %v3311
    %v3313 = vpop.f32.mrb[0].mxu0
    %v3314 = vadd.f32 %v3273, %v3313
    %v3315 = vpop.f32.mrb[0].mxu0
    %v3316 = vpop.f32.mrb[0].mxu0
    %3317 = vdwg.mxu0
    %3318 = vmatprep.subr.bf16.mxu0 %v2611
    %3319 = vmatpush1.bf16.msra.mxu0 %v2610
    %3320 = vmatprep.subr.bf16.mxu0 %v2617
    %3321 = vmatpush1.bf16.msra.mxu0 %v2616
    %3322 = vmatprep.subr.bf16.mxu0 %v2623
    %3323 = vmatpush1.bf16.msra.mxu0 %v2622
    %3324 = vmatprep.subr.bf16.mxu0 %v2629
    %3325 = vmatpush1.bf16.msra.mxu0 %v2628
    %3326 = vmatprep.subr.bf16.mxu0 %v2635
    %3327 = vmatpush1.bf16.msra.mxu0 %v2634
    %3328 = vmatprep.subr.bf16.mxu0 %v2641
    %3329 = vmatpush1.bf16.msra.mxu0 %v2640
    %3330 = vmatprep.subr.bf16.mxu0 %v2647
    %3331 = vmatpush1.bf16.msra.mxu0 %v2646
    %3332 = vmatprep.subr.bf16.mxu0 %v2653
    %3333 = vmatpush1.bf16.msra.mxu0 %v2652
    %3334 = vmatprep.subr.bf16.mxu0 %v2659
    %3335 = vmatpush1.bf16.msra.mxu0 %v2658
    %3336 = vmatprep.subr.bf16.mxu0 %v2665
    %3337 = vmatpush1.bf16.msra.mxu0 %v2664
    %3338 = vmatprep.subr.bf16.mxu0 %v2671
    %3339 = vmatpush1.bf16.msra.mxu0 %v2670
    %3340 = vmatprep.subr.bf16.mxu0 %v2677
    %3341 = vmatpush1.bf16.msra.mxu0 %v2676
    %3342 = vmatprep.subr.bf16.mxu0 %v2683
    %3343 = vmatpush1.bf16.msra.mxu0 %v2682
    %3344 = vmatprep.subr.bf16.mxu0 %v2689
    %3345 = vmatpush1.bf16.msra.mxu0 %v2688
    %3346 = vmatprep.subr.bf16.mxu0 %v2695
    %3347 = vmatpush1.bf16.msra.mxu0 %v2694
    %3348 = vmatprep.subr.bf16.mxu0 %v2701
    %3349 = vmatpush1.bf16.msra.mxu0 %v2700
    %3350 = vmatprep.mubr.bf16.mxu0 %v2599
    %3351 = vmatmul.mubr.bf16.gmra.mrb[0].mxu0 %v2598
    %v3352 = vpop.f32.mrb[0].mxu0
    %v3353 = vadd.f32 0.0, %v3352
    %v3354 = vpop.f32.mrb[0].mxu0
    %v3355 = vadd.f32 0.0, %v3354
    %v3356 = vpop.f32.mrb[0].mxu0
    %v3357 = vpop.f32.mrb[0].mxu0
    %3358 = vdwg.mxu0
    %3359 = vmatprep.subr.bf16.mxu0 %v2707
    %3360 = vmatpush1.bf16.msra.mxu0 %v2706
    %3361 = vmatprep.subr.bf16.mxu0 %v2713
    %3362 = vmatpush1.bf16.msra.mxu0 %v2712
    %3363 = vmatprep.subr.bf16.mxu0 %v2719
    %3364 = vmatpush1.bf16.msra.mxu0 %v2718
    %3365 = vmatprep.subr.bf16.mxu0 %v2725
    %3366 = vmatpush1.bf16.msra.mxu0 %v2724
    %3367 = vmatprep.subr.bf16.mxu0 %v2731
    %3368 = vmatpush1.bf16.msra.mxu0 %v2730
    %3369 = vmatprep.subr.bf16.mxu0 %v2737
    %3370 = vmatpush1.bf16.msra.mxu0 %v2736
    %3371 = vmatprep.subr.bf16.mxu0 %v2743
    %3372 = vmatpush1.bf16.msra.mxu0 %v2742
    %3373 = vmatprep.subr.bf16.mxu0 %v2749
    %3374 = vmatpush1.bf16.msra.mxu0 %v2748
    %3375 = vmatprep.subr.bf16.mxu0 %v2755
    %3376 = vmatpush1.bf16.msra.mxu0 %v2754
    %3377 = vmatprep.subr.bf16.mxu0 %v2761
    %3378 = vmatpush1.bf16.msra.mxu0 %v2760
    %3379 = vmatprep.subr.bf16.mxu0 %v2767
    %3380 = vmatpush1.bf16.msra.mxu0 %v2766
    %3381 = vmatprep.subr.bf16.mxu0 %v2773
    %3382 = vmatpush1.bf16.msra.mxu0 %v2772
    %3383 = vmatprep.subr.bf16.mxu0 %v2779
    %3384 = vmatpush1.bf16.msra.mxu0 %v2778
    %3385 = vmatprep.subr.bf16.mxu0 %v2785
    %3386 = vmatpush1.bf16.msra.mxu0 %v2784
    %3387 = vmatprep.subr.bf16.mxu0 %v2791
    %3388 = vmatpush1.bf16.msra.mxu0 %v2790
    %3389 = vmatprep.subr.bf16.mxu0 %v2797
    %3390 = vmatpush1.bf16.msra.mxu0 %v2796
    %3391 = vmatprep.mubr.bf16.mxu0 %v2601
    %3392 = vmatmul.mubr.bf16.gmra.mrb[0].mxu0 %v2600
    %v3393 = vpop.f32.mrb[0].mxu0
    %v3394 = vadd.f32 %v3353, %v3393
    %v3395 = vpop.f32.mrb[0].mxu0
    %v3396 = vadd.f32 %v3355, %v3395
    %v3397 = vpop.f32.mrb[0].mxu0
    %v3398 = vpop.f32.mrb[0].mxu0
    %3399 = vdwg.mxu0
    %3400 = vmatprep.subr.bf16.mxu0 %v2803
    %3401 = vmatpush1.bf16.msra.mxu0 %v2802
    %3402 = vmatprep.subr.bf16.mxu0 %v2809
    %3403 = vmatpush1.bf16.msra.mxu0 %v2808
    %3404 = vmatprep.subr.bf16.mxu0 %v2815
    %3405 = vmatpush1.bf16.msra.mxu0 %v2814
    %3406 = vmatprep.subr.bf16.mxu0 %v2821
    %3407 = vmatpush1.bf16.msra.mxu0 %v2820
    %3408 = vmatprep.subr.bf16.mxu0 %v2827
    %3409 = vmatpush1.bf16.msra.mxu0 %v2826
    %3410 = vmatprep.subr.bf16.mxu0 %v2833
    %3411 = vmatpush1.bf16.msra.mxu0 %v2832
    %3412 = vmatprep.subr.bf16.mxu0 %v2839
    %3413 = vmatpush1.bf16.msra.mxu0 %v2838
    %3414 = vmatprep.subr.bf16.mxu0 %v2845
    %3415 = vmatpush1.bf16.msra.mxu0 %v2844
    %3416 = vmatprep.subr.bf16.mxu0 %v2851
    %3417 = vmatpush1.bf16.msra.mxu0 %v2850
    %3418 = vmatprep.subr.bf16.mxu0 %v2857
    %3419 = vmatpush1.bf16.msra.mxu0 %v2856
    %3420 = vmatprep.subr.bf16.mxu0 %v2863
    %3421 = vmatpush1.bf16.msra.mxu0 %v2862
    %3422 = vmatprep.subr.bf16.mxu0 %v2869
    %3423 = vmatpush1.bf16.msra.mxu0 %v2868
    %3424 = vmatprep.subr.bf16.mxu0 %v2875
    %3425 = vmatpush1.bf16.msra.mxu0 %v2874
    %3426 = vmatprep.subr.bf16.mxu0 %v2881
    %3427 = vmatpush1.bf16.msra.mxu0 %v2880
    %3428 = vmatprep.subr.bf16.mxu0 %v2887
    %3429 = vmatpush1.bf16.msra.mxu0 %v2886
    %3430 = vmatprep.subr.bf16.mxu0 %v2893
    %3431 = vmatpush1.bf16.msra.mxu0 %v2892
    %3432 = vmatprep.mubr.bf16.mxu0 %v2603
    %3433 = vmatmul.mubr.bf16.gmra.mrb[0].mxu0 %v2602
    %v3434 = vpop.f32.mrb[0].mxu0
    %v3435 = vadd.f32 %v3394, %v3434
    %v3436 = vpop.f32.mrb[0].mxu0
    %v3437 = vadd.f32 %v3396, %v3436
    %v3438 = vpop.f32.mrb[0].mxu0
    %v3439 = vpop.f32.mrb[0].mxu0
    %3440 = vdwg.mxu0
    %3441 = vmatprep.subr.bf16.mxu0 %v2899
    %3442 = vmatpush1.bf16.msra.mxu0 %v2898
    %3443 = vmatprep.subr.bf16.mxu0 %v2905
    %3444 = vmatpush1.bf16.msra.mxu0 %v2904
    %3445 = vmatprep.subr.bf16.mxu0 %v2911
    %3446 = vmatpush1.bf16.msra.mxu0 %v2910
    %3447 = vmatprep.subr.bf16.mxu0 %v2917
    %3448 = vmatpush1.bf16.msra.mxu0 %v2916
    %3449 = vmatprep.subr.bf16.mxu0 %v2923
    %3450 = vmatpush1.bf16.msra.mxu0 %v2922
    %3451 = vmatprep.subr.bf16.mxu0 %v2929
    %3452 = vmatpush1.bf16.msra.mxu0 %v2928
    %3453 = vmatprep.subr.bf16.mxu0 %v2935
    %3454 = vmatpush1.bf16.msra.mxu0 %v2934
    %3455 = vmatprep.subr.bf16.mxu0 %v2941
    %3456 = vmatpush1.bf16.msra.mxu0 %v2940
    %3457 = vmatprep.subr.bf16.mxu0 %v2947
    %3458 = vmatpush1.bf16.msra.mxu0 %v2946
    %3459 = vmatprep.subr.bf16.mxu0 %v2953
    %3460 = vmatpush1.bf16.msra.mxu0 %v2952
    %3461 = vmatprep.subr.bf16.mxu0 %v2959
    %3462 = vmatpush1.bf16.msra.mxu0 %v2958
    %3463 = vmatprep.subr.bf16.mxu0 %v2965
    %3464 = vmatpush1.bf16.msra.mxu0 %v2964
    %3465 = vmatprep.subr.bf16.mxu0 %v2971
    %3466 = vmatpush1.bf16.msra.mxu0 %v2970
    %3467 = vmatprep.subr.bf16.mxu0 %v2977
    %3468 = vmatpush1.bf16.msra.mxu0 %v2976
    %3469 = vmatprep.subr.bf16.mxu0 %v2983
    %3470 = vmatpush1.bf16.msra.mxu0 %v2982
    %3471 = vmatprep.subr.bf16.mxu0 %v2989
    %3472 = vmatpush1.bf16.msra.mxu0 %v2988
    %3473 = vmatprep.mubr.bf16.mxu0 %v2605
    %3474 = vmatmul.mubr.bf16.gmra.mrb[0].mxu0 %v2604
    %v3475 = vpop.f32.mrb[0].mxu0
    %v3476 = vadd.f32 %v3435, %v3475
    %v3477 = vpop.f32.mrb[0].mxu0
    %v3478 = vadd.f32 %v3437, %v3477
    %v3479 = vpop.f32.mrb[0].mxu0
    %v3480 = vpop.f32.mrb[0].mxu0
    %3481 = vdwg.mxu0
    %v3482 = vtanh.pop %v3148
    %v3483 = vtanh.pop %v3150
    %v3484 = vtanh.pop %v3312
    %v3485 = vtanh.pop %v3314
    %v3486 = vtanh.pop %v3476
    %v3487 = vtanh.pop %v3478
    %3488 = vst [vmem:[%s10] sm:$0xff] %v3482
    %3489 = vst [vmem:[%s10 + $0x8] sm:$0xff] %v3483
    %3490 = vst [vmem:[%s10 + $0x10] sm:$0xff] %v3484
    %3491 = vst [vmem:[%s10 + $0x18] sm:$0xff] %v3485
    %3492 = vst [vmem:[%s10 + $0x20] sm:$0xff] %v3486
    %3493 = vst [vmem:[%s10 + $0x28] sm:$0xff] %v3487
    // Predicated region
    $region58: #{netg_forward.1} parent=1 // pred_check
      _
    $region59: #{netg_forward.1} parent=1 // pred_check_branch
      %3495 = sbr.rel (0) target = $region61
    $region60: #{netg_forward.1} parent=1 // pred_region
      _
    $region61: #{netg_forward.1} parent=1 // pred_fallthru
      _
    // Predicated region
    $region62: #{netg_forward.1} parent=1 // pred_check
      _
    $region63: #{netg_forward.1} parent=1 // pred_check_branch
      %3497 = sbr.rel (0) target = $region65
    $region64: #{netg_forward.1} parent=1 // pred_region
      _
    $region65: #{netg_forward.1} parent=1 // pred_fallthru
      _
    %3498 = vsyncpa [#allocation6], 1
    %3499 = vsyncpa [#allocation8], 1
    %3500 = vsyncpa [#allocation11], 1
    %3501 = vsyncpa [#allocation14], 1
  %3502 = vsyncmov [#allocation4]
  %s3503 = vpop.sfrf %3502
  %p3504 = scmp.eq.s32.totalorder %s3503, 0
  %p3505 = pneg %p3504
  %3507 = shalt.err (%p3505)
  %s3508 = scalar_lea.sflag [#allocation4], 1
  %3509 = vsyncmov %s3508
  %s3510 = vpop.sfrf %3509
  %p3511 = scmp.eq.s32.totalorder %s3510, 0
  %p3512 = pneg %p3511
  %3514 = shalt.err (%p3512)

</llo_original>
